<compile_context>
chip_gen: v6e
topology: v6e:2x2x1
jax: 0.10.0
libtpu: 0.0.40
codegen_flags: <defaults>
</compile_context>

<pallas_src>
import numpy as np
import jax
import jax.numpy as jnp
from jax.experimental import pallas as pl
from jax.experimental.pallas import tpu as pltpu

_HI = jax.lax.Precision.HIGHEST


def _round_up(n, m):
    return (n + m - 1) // m * m


# ---------------------------------------------------------------------------
# Pallas kernel: GLU gating + FM + MLP for one (TB, FD_pad) batch tile.
# ---------------------------------------------------------------------------
def geldfm_kernel(ef_ref, wg_ref, bg_ref, pm_ref,
                  w1_ref, b1_ref, w2_ref, b2_ref, w3_ref,
                  out_ref):
    ef = ef_ref[...]                                            # (TB, FDp) f32

    # --- GLU global-input gating: x_embed = E * sigmoid(flat(E) @ Wg + bg) ---
    gate = jax.nn.sigmoid(
        jnp.dot(ef, wg_ref[...], preferred_element_type=jnp.float32,
                precision=_HI) + bg_ref[...])
    eg = ef * gate                                              # (TB, FDp)

    # --- FactorizationMachine(reduce_sum=True), lane-major via field-sum matrix ---
    sum_f = jnp.dot(eg, pm_ref[...],
                    preferred_element_type=jnp.float32, precision=_HI)      # (TB, Dp)
    sum_sq = jnp.dot(eg * eg, pm_ref[...],
                     preferred_element_type=jnp.float32, precision=_HI)     # (TB, Dp)
    fm = 0.5 * jnp.sum(sum_f * sum_f - sum_sq, axis=-1, keepdims=True)      # (TB, 1)

    # --- MLP (BatchNorm folded into weights, dropout = identity in eval mode) ---
    h = jnp.maximum(
        jnp.dot(eg, w1_ref[...], preferred_element_type=jnp.float32,
                precision=_HI) + b1_ref[...], 0.0)
    h = jnp.maximum(
        jnp.dot(h, w2_ref[...], preferred_element_type=jnp.float32,
                precision=_HI) + b2_ref[...], 0.0)
    # final (h2 -> 1) layer: broadcast-mul + lane reduce (no width-1 MXU matmul)
    mlp = jnp.sum(h * w3_ref[...], axis=-1, keepdims=True)                  # (TB, 1)

    out_ref[...] = fm + mlp


# ---------------------------------------------------------------------------
# Wrapper: gathers in JAX glue, batch-tiled pallas_call, tiny scalar adds.
# ---------------------------------------------------------------------------
def geldfm_forward(x, p, kp, *, embed_dim, block_b=512):
    B, F = x.shape
    D = embed_dim
    FD = F * D
    FDp, Dp = kp["pm"].shape
    H1p = kp["w1"].shape[1]
    H2p = kp["w2"].shape[1]

    # JAX glue: data-dependent embedding gathers + trivial linear term.
    idx = x + p["offsets"][None, :]                                   # (B, F)
    ef = p["embed_w"][idx].reshape(B, FD).astype(jnp.float32)         # (B, F*D)
    lin = jnp.sum(p["lin_w"][idx][..., 0], axis=1, keepdims=True)     # (B, 1)

    # Pad batch (sublane) and feature (lane) dims for the kernel.
    TB = min(block_b, _round_up(B, 8))
    Bp = _round_up(B, TB)
    ef_p = jnp.pad(ef, ((0, Bp - B), (0, FDp - FD)))

    nb = Bp // TB
    act_map = lambda i: (i, 0)
    w_map = lambda i: (0, 0)
    in_specs = [
        pl.BlockSpec((TB, FDp), act_map),     # ef    (streams per batch tile)
        pl.BlockSpec((FDp, FDp), w_map),      # Wg    (resident)
        pl.BlockSpec((1, FDp), w_map),        # bg
        pl.BlockSpec((FDp, Dp), w_map),       # field-sum matrix P
        pl.BlockSpec((FDp, H1p), w_map),      # W1 (BN folded)
        pl.BlockSpec((1, H1p), w_map),        # b1 (BN folded)
        pl.BlockSpec((H1p, H2p), w_map),      # W2 (BN folded)
        pl.BlockSpec((1, H2p), w_map),        # b2 (BN folded)
        pl.BlockSpec((1, H2p), w_map),        # w3 row
    ]
    out_spec = pl.BlockSpec((TB, 1), act_map)

    weight_elems = (FDp * FDp + FDp + FDp * Dp + FDp * H1p + H1p
                    + H1p * H2p + H2p + H2p)
    cost = pl.CostEstimate(
        flops=int(2 * Bp * (FDp * FDp + 2 * FDp * Dp + FDp * H1p + H1p * H2p)
                  + 12 * Bp * FDp),
        transcendentals=int(Bp * FDp),                 # sigmoid
        bytes_accessed=int(4 * (Bp * FDp + Bp + weight_elems)),
    )

    out = pl.pallas_call(
        geldfm_kernel,
        out_shape=jax.ShapeDtypeStruct((Bp, 1), jnp.float32),
        grid=(nb,),
        in_specs=in_specs,
        out_specs=out_spec,
        compiler_params=pltpu.CompilerParams(
            dimension_semantics=("parallel",),         # split batch tiles across TCs (v7x)
            vmem_limit_bytes=32 * 1024 * 1024,
        ),
        cost_estimate=cost,
    )(ef_p, kp["wg"], kp["bg"], kp["pm"],
      kp["w1"], kp["b1"], kp["w2"], kp["b2"], kp["w3row"])

    # FeaturesLinear term + biases: tiny (B,1) math, kept in the glue.
    return out[:B] + lin + p["lbias"] + p["b3"]


# ---------------------------------------------------------------------------
# Parameter setup: raw ("torch-like") params and padded/folded kernel params.
# ---------------------------------------------------------------------------
def make_params(key, field_dims, embed_dim, mlp_layers):
    F = len(field_dims)
    D = embed_dim
    FD = F * D
    total = int(sum(field_dims))
    h1, h2 = mlp_layers
    ks = jax.random.split(key, 20)
    it = iter(range(20))

    def nrm(shape, scale=0.1):
        return scale * jax.random.normal(ks[next(it)], shape, jnp.float32)

    return dict(
        offsets=jnp.asarray(np.concatenate([[0], np.cumsum(field_dims)[:-1]]),
                            dtype=jnp.int32),
        embed_w=nrm((total, D)),
        lin_w=nrm((total, 1)),
        lbias=jnp.zeros((1, 1), jnp.float32),
        wg=nrm((FD, FD)),
        bg=nrm((1, FD), 0.01),
        w1=nrm((FD, h1)),
        b1=nrm((h1,), 0.01),
        bn1_gamma=1.0 + nrm((h1,), 0.05),
        bn1_beta=nrm((h1,), 0.05),
        bn1_mean=nrm((h1,), 0.02),
        bn1_var=1.0 + jnp.abs(nrm((h1,), 0.1)),
        w2=nrm((h1, h2)),
        b2=nrm((h2,), 0.01),
        bn2_gamma=1.0 + nrm((h2,), 0.05),
        bn2_beta=nrm((h2,), 0.05),
        bn2_mean=nrm((h2,), 0.02),
        bn2_var=1.0 + jnp.abs(nrm((h2,), 0.1)),
        w3=nrm((h2, 1)),
        b3=nrm((1, 1), 0.01),
    )


def prepare_kernel_params(p, field_dims, embed_dim, eps=1e-5):
    F = len(field_dims)
    D = embed_dim
    FD = F * D
    h1 = p["w1"].shape[1]
    h2 = p["w2"].shape[1]
    FDp = _round_up(FD, 128)
    Dp = _round_up(D, 128)
    H1p = _round_up(h1, 128)
    H2p = _round_up(h2, 128)

    # Fold eval-mode BatchNorm into the preceding Linear (exact: affine o affine).
    s1 = p["bn1_gamma"] / jnp.sqrt(p["bn1_var"] + eps)
    t1 = p["bn1_beta"] - p["bn1_mean"] * s1
    s2 = p["bn2_gamma"] / jnp.sqrt(p["bn2_var"] + eps)
    t2 = p["bn2_beta"] - p["bn2_mean"] * s2
    w1f = p["w1"] * s1[None, :]
    b1f = p["b1"] * s1 + t1
    w2f = p["w2"] * s2[None, :]
    b2f = p["b2"] * s2 + t2

    def pad2(a, rows, cols):
        a = jnp.asarray(a, jnp.float32)
        return jnp.pad(a, ((0, rows - a.shape[0]), (0, cols - a.shape[1])))

    # Constant "field-sum" matrix: (eg_flat @ pm)[b, d] = sum_f eg[b, f, d].
    pm = np.zeros((FDp, Dp), np.float32)
    r = np.arange(FD)
    pm[r, r % D] = 1.0

    return dict(
        wg=pad2(p["wg"], FDp, FDp),
        bg=pad2(p["bg"], 1, FDp),
        pm=jnp.asarray(pm),
        w1=pad2(w1f, FDp, H1p),
        b1=pad2(b1f[None, :], 1, H1p),
        w2=pad2(w2f, H1p, H2p),
        b2=pad2(b2f[None, :], 1, H2p),
        w3row=pad2(p["w3"].T, 1, H2p),
    )


# ---------------------------------------------------------------------------
# Pure-JAX reference mirroring the PyTorch forward (eval mode, unfolded BN).
# ---------------------------------------------------------------------------
def geldfm_ref(x, p, *, field_dims, embed_dim, eps=1e-5):
    B, F = x.shape
    D = embed_dim
    idx = x + p["offsets"][None, :]
    ef = p["embed_w"][idx].reshape(B, F * D)
    gate = jax.nn.sigmoid(jnp.dot(ef, p["wg"], precision=_HI) + p["bg"])
    eg_flat = ef * gate
    eg = eg_flat.reshape(B, F, D)
    fm = 0.5 * jnp.sum(jnp.sum(eg, axis=1) ** 2 - jnp.sum(eg ** 2, axis=1),
                       axis=1, keepdims=True)
    lin = jnp.sum(p["lin_w"][idx][..., 0], axis=1, keepdims=True) + p["lbias"]

    def bn(h, g, b, m, v):
        return (h - m[None, :]) / jnp.sqrt(v[None, :] + eps) * g[None, :] + b[None, :]

    h = jnp.dot(eg_flat, p["w1"], precision=_HI) + p["b1"][None, :]
    h = jnp.maximum(bn(h, p["bn1_gamma"], p["bn1_beta"], p["bn1_mean"], p["bn1_var"]), 0.0)
    h = jnp.dot(h, p["w2"], precision=_HI) + p["b2"][None, :]
    h = jnp.maximum(bn(h, p["bn2_gamma"], p["bn2_beta"], p["bn2_mean"], p["bn2_var"]), 0.0)
    mlp = jnp.dot(h, p["w3"], precision=_HI) + p["b3"]
    return lin + fm + mlp


if __name__ == "__main__":
    field_dims = (5, 7, 3, 11)     # 4 fields, vocab sizes
    embed_dim = 8
    mlp_layers = (32, 16)
    B = 8

    key = jax.random.PRNGKey(0)
    k_param, k_x = jax.random.split(key)
    params = make_params(k_param, field_dims, embed_dim, mlp_layers)
    kparams = prepare_kernel_params(params, field_dims, embed_dim)

    # deterministic integer field indices, each within its field vocabulary
    xkeys = jax.random.split(k_x, len(field_dims))
    cols = [jax.random.randint(xkeys[i], (B,), 0, fd, dtype=jnp.int32)
            for i, fd in enumerate(field_dims)]
    x = jnp.stack(cols, axis=1)    # (B, F) int32

    out = geldfm_forward(x, params, kparams, embed_dim=embed_dim)
    out = jax.block_until_ready(out)

    ref = geldfm_ref(x, params, field_dims=field_dims, embed_dim=embed_dim)
    assert out.shape == (B, 1), out.shape
    # With Precision.HIGHEST on both sides, kernel and reference agree to ~1e-6;
    # tolerance leaves headroom for accumulation-order differences.
    np.testing.assert_allclose(np.asarray(out), np.asarray(ref), rtol=1e-2, atol=1e-2)

    print("KERNEL_OK")
</pallas_src>

<mosaic_0001>
module attributes {stable_mosaic.version = 11 : i64} {
  func.func @geldfm_kernel(%arg0: i32, %arg1: memref<8x128xf32, #tpu.memory_space<vmem>>, %arg2: memref<128x128xf32, #tpu.memory_space<vmem>>, %arg3: memref<1x128xf32, #tpu.memory_space<vmem>>, %arg4: memref<128x128xf32, #tpu.memory_space<vmem>>, %arg5: memref<128x128xf32, #tpu.memory_space<vmem>>, %arg6: memref<1x128xf32, #tpu.memory_space<vmem>>, %arg7: memref<128x128xf32, #tpu.memory_space<vmem>>, %arg8: memref<1x128xf32, #tpu.memory_space<vmem>>, %arg9: memref<1x128xf32, #tpu.memory_space<vmem>>, %arg10: memref<8x1xf32, #tpu.memory_space<vmem>>) attributes {dimension_semantics = [#tpu.dimension_semantics<parallel>], iteration_bounds = array<i64: 1>, scalar_prefetch = 0 : i64, scratch_operands = 0 : i64, tpu.core_type = #tpu.core_type<tc>, window_params = [{transform_indices = @transform_0, window_bounds = array<i64: 8, 128>}, {pipeline_mode = #tpu.pipeline_mode<synchronous>, transform_indices = @transform_1, window_bounds = array<i64: 128, 128>}, {pipeline_mode = #tpu.pipeline_mode<synchronous>, transform_indices = @transform_2, window_bounds = array<i64: 1, 128>}, {pipeline_mode = #tpu.pipeline_mode<synchronous>, transform_indices = @transform_3, window_bounds = array<i64: 128, 128>}, {pipeline_mode = #tpu.pipeline_mode<synchronous>, transform_indices = @transform_4, window_bounds = array<i64: 128, 128>}, {pipeline_mode = #tpu.pipeline_mode<synchronous>, transform_indices = @transform_5, window_bounds = array<i64: 1, 128>}, {pipeline_mode = #tpu.pipeline_mode<synchronous>, transform_indices = @transform_6, window_bounds = array<i64: 128, 128>}, {pipeline_mode = #tpu.pipeline_mode<synchronous>, transform_indices = @transform_7, window_bounds = array<i64: 1, 128>}, {pipeline_mode = #tpu.pipeline_mode<synchronous>, transform_indices = @transform_8, window_bounds = array<i64: 1, 128>}, {transform_indices = @transform_9, window_bounds = array<i64: 8, 1>}]} {
    %c0 = arith.constant 0 : index
    %c0_0 = arith.constant 0 : index
    %0 = vector.load %arg1[%c0, %c0_0] : memref<8x128xf32, #tpu.memory_space<vmem>>, vector<8x128xf32>
    %c0_1 = arith.constant 0 : index
    %c0_2 = arith.constant 0 : index
    %1 = vector.load %arg2[%c0_1, %c0_2] : memref<128x128xf32, #tpu.memory_space<vmem>>, vector<128x128xf32>
    %cst = arith.constant dense<0.000000e+00> : vector<8x128xf32>
    %2 = tpu.matmul %0, %1, %cst {dimension_numbers = #tpu.dot_dimension_numbers<[1], [0], [0], [1], [0, 0, 1, 1], [], []>, precision = #tpu.contract_precision<fp32>} : vector<8x128xf32>, vector<128x128xf32>, vector<8x128xf32> -> vector<8x128xf32>
    %c0_3 = arith.constant 0 : index
    %c0_4 = arith.constant 0 : index
    %3 = vector.load %arg3[%c0_3, %c0_4] : memref<1x128xf32, #tpu.memory_space<vmem>>, vector<1x128xf32>
    %4 = vector.broadcast %3 : vector<1x128xf32> to vector<8x128xf32>
    %5 = arith.addf %2, %4 : vector<8x128xf32>
    %6 = arith.negf %5 : vector<8x128xf32>
    %7 = math.exp %6 : vector<8x128xf32>
    %cst_5 = arith.constant 1.000000e+00 : f32
    %8 = vector.broadcast %cst_5 : f32 to vector<8x128xf32>
    %9 = arith.addf %8, %7 : vector<8x128xf32>
    %10 = arith.divf %8, %9 : vector<8x128xf32>
    %11 = arith.mulf %0, %10 : vector<8x128xf32>
    %c0_6 = arith.constant 0 : index
    %c0_7 = arith.constant 0 : index
    %12 = vector.load %arg4[%c0_6, %c0_7] : memref<128x128xf32, #tpu.memory_space<vmem>>, vector<128x128xf32>
    %cst_8 = arith.constant dense<0.000000e+00> : vector<8x128xf32>
    %13 = tpu.matmul %11, %12, %cst_8 {dimension_numbers = #tpu.dot_dimension_numbers<[1], [0], [0], [1], [0, 0, 1, 1], [], []>, precision = #tpu.contract_precision<fp32>} : vector<8x128xf32>, vector<128x128xf32>, vector<8x128xf32> -> vector<8x128xf32>
    %14 = arith.mulf %11, %11 : vector<8x128xf32>
    %c0_9 = arith.constant 0 : index
    %c0_10 = arith.constant 0 : index
    %15 = vector.load %arg4[%c0_9, %c0_10] : memref<128x128xf32, #tpu.memory_space<vmem>>, vector<128x128xf32>
    %cst_11 = arith.constant dense<0.000000e+00> : vector<8x128xf32>
    %16 = tpu.matmul %14, %15, %cst_11 {dimension_numbers = #tpu.dot_dimension_numbers<[1], [0], [0], [1], [0, 0, 1, 1], [], []>, precision = #tpu.contract_precision<fp32>} : vector<8x128xf32>, vector<128x128xf32>, vector<8x128xf32> -> vector<8x128xf32>
    %17 = arith.mulf %13, %13 : vector<8x128xf32>
    %18 = arith.subf %17, %16 : vector<8x128xf32>
    %cst_12 = arith.constant dense<0.000000e+00> : vector<8xf32>
    %19 = vector.multi_reduction <add>, %18, %cst_12 [1] : vector<8x128xf32> to vector<8xf32>
    %20 = vector.shape_cast %19 : vector<8xf32> to vector<8x1xf32>
    %cst_13 = arith.constant 5.000000e-01 : f32
    %21 = vector.broadcast %cst_13 : f32 to vector<8x1xf32>
    %22 = arith.mulf %21, %20 : vector<8x1xf32>
    %c0_14 = arith.constant 0 : index
    %c0_15 = arith.constant 0 : index
    %23 = vector.load %arg5[%c0_14, %c0_15] : memref<128x128xf32, #tpu.memory_space<vmem>>, vector<128x128xf32>
    %cst_16 = arith.constant dense<0.000000e+00> : vector<8x128xf32>
    %24 = tpu.matmul %11, %23, %cst_16 {dimension_numbers = #tpu.dot_dimension_numbers<[1], [0], [0], [1], [0, 0, 1, 1], [], []>, precision = #tpu.contract_precision<fp32>} : vector<8x128xf32>, vector<128x128xf32>, vector<8x128xf32> -> vector<8x128xf32>
    %c0_17 = arith.constant 0 : index
    %c0_18 = arith.constant 0 : index
    %25 = vector.load %arg6[%c0_17, %c0_18] : memref<1x128xf32, #tpu.memory_space<vmem>>, vector<1x128xf32>
    %26 = vector.broadcast %25 : vector<1x128xf32> to vector<8x128xf32>
    %27 = arith.addf %24, %26 : vector<8x128xf32>
    %cst_19 = arith.constant 0.000000e+00 : f32
    %28 = vector.broadcast %cst_19 : f32 to vector<8x128xf32>
    %29 = arith.maximumf %27, %28 : vector<8x128xf32>
    %c0_20 = arith.constant 0 : index
    %c0_21 = arith.constant 0 : index
    %30 = vector.load %arg7[%c0_20, %c0_21] : memref<128x128xf32, #tpu.memory_space<vmem>>, vector<128x128xf32>
    %cst_22 = arith.constant dense<0.000000e+00> : vector<8x128xf32>
    %31 = tpu.matmul %29, %30, %cst_22 {dimension_numbers = #tpu.dot_dimension_numbers<[1], [0], [0], [1], [0, 0, 1, 1], [], []>, precision = #tpu.contract_precision<fp32>} : vector<8x128xf32>, vector<128x128xf32>, vector<8x128xf32> -> vector<8x128xf32>
    %c0_23 = arith.constant 0 : index
    %c0_24 = arith.constant 0 : index
    %32 = vector.load %arg8[%c0_23, %c0_24] : memref<1x128xf32, #tpu.memory_space<vmem>>, vector<1x128xf32>
    %33 = vector.broadcast %32 : vector<1x128xf32> to vector<8x128xf32>
    %34 = arith.addf %31, %33 : vector<8x128xf32>
    %cst_25 = arith.constant 0.000000e+00 : f32
    %35 = vector.broadcast %cst_25 : f32 to vector<8x128xf32>
    %36 = arith.maximumf %34, %35 : vector<8x128xf32>
    %c0_26 = arith.constant 0 : index
    %c0_27 = arith.constant 0 : index
    %37 = vector.load %arg9[%c0_26, %c0_27] : memref<1x128xf32, #tpu.memory_space<vmem>>, vector<1x128xf32>
    %38 = vector.broadcast %37 : vector<1x128xf32> to vector<8x128xf32>
    %39 = arith.mulf %36, %38 : vector<8x128xf32>
    %cst_28 = arith.constant dense<0.000000e+00> : vector<8xf32>
    %40 = vector.multi_reduction <add>, %39, %cst_28 [1] : vector<8x128xf32> to vector<8xf32>
    %41 = vector.shape_cast %40 : vector<8xf32> to vector<8x1xf32>
    %42 = arith.addf %22, %41 : vector<8x1xf32>
    %c0_29 = arith.constant 0 : index
    %c0_30 = arith.constant 0 : index
    %43 = vector.load %arg10[%c0_29, %c0_30] : memref<8x1xf32, #tpu.memory_space<vmem>>, vector<8x1xf32>
    tpu.vector_store %arg10[%c0_29, %c0_30], %42 {strides = array<i32>} : memref<8x1xf32, #tpu.memory_space<vmem>>, vector<8x1xf32>,
    return
  }
  func.func @transform_0(%arg0: i32) -> (i32, i32) {
    %c0_i32 = arith.constant 0 : i32
    %c0_i32_0 = arith.constant 0 : i32
    return %arg0, %c0_i32 : i32, i32
  }
  func.func @transform_1(%arg0: i32) -> (i32, i32) {
    %c0_i32 = arith.constant 0 : i32
    %c0_i32_0 = arith.constant 0 : i32
    %c0_i32_1 = arith.constant 0 : i32
    return %c0_i32, %c0_i32_0 : i32, i32
  }
  func.func @transform_2(%arg0: i32) -> (i32, i32) {
    %c0_i32 = arith.constant 0 : i32
    %c0_i32_0 = arith.constant 0 : i32
    %c0_i32_1 = arith.constant 0 : i32
    return %c0_i32, %c0_i32_0 : i32, i32
  }
  func.func @transform_3(%arg0: i32) -> (i32, i32) {
    %c0_i32 = arith.constant 0 : i32
    %c0_i32_0 = arith.constant 0 : i32
    %c0_i32_1 = arith.constant 0 : i32
    return %c0_i32, %c0_i32_0 : i32, i32
  }
  func.func @transform_4(%arg0: i32) -> (i32, i32) {
    %c0_i32 = arith.constant 0 : i32
    %c0_i32_0 = arith.constant 0 : i32
    %c0_i32_1 = arith.constant 0 : i32
    return %c0_i32, %c0_i32_0 : i32, i32
  }
  func.func @transform_5(%arg0: i32) -> (i32, i32) {
    %c0_i32 = arith.constant 0 : i32
    %c0_i32_0 = arith.constant 0 : i32
    %c0_i32_1 = arith.constant 0 : i32
    return %c0_i32, %c0_i32_0 : i32, i32
  }
  func.func @transform_6(%arg0: i32) -> (i32, i32) {
    %c0_i32 = arith.constant 0 : i32
    %c0_i32_0 = arith.constant 0 : i32
    %c0_i32_1 = arith.constant 0 : i32
    return %c0_i32, %c0_i32_0 : i32, i32
  }
  func.func @transform_7(%arg0: i32) -> (i32, i32) {
    %c0_i32 = arith.constant 0 : i32
    %c0_i32_0 = arith.constant 0 : i32
    %c0_i32_1 = arith.constant 0 : i32
    return %c0_i32, %c0_i32_0 : i32, i32
  }
  func.func @transform_8(%arg0: i32) -> (i32, i32) {
    %c0_i32 = arith.constant 0 : i32
    %c0_i32_0 = arith.constant 0 : i32
    %c0_i32_1 = arith.constant 0 : i32
    return %c0_i32, %c0_i32_0 : i32, i32
  }
  func.func @transform_9(%arg0: i32) -> (i32, i32) {
    %c0_i32 = arith.constant 0 : i32
    %c0_i32_0 = arith.constant 0 : i32
    return %arg0, %c0_i32 : i32, i32
  }
}

</mosaic_0001>

<llo_original>
// kernel: tpu_custom_call.1
$region0: #{tpu_custom_call.1}
  #allocation0 [shape = 'u32[]', space=smem, size = 0x4, offset = 0x4, fixed_abs, tag = 'smem constant byte address 0x4 - core index']
  #allocation1 [shape = 'u32[144,128]{1,0:T(1,128)}', space=vmem, size = 0x12000, scoped, tag = 'internal scratch']
  %s0 = inlined_call_operand.hbm [shape: f32[8,128], index: 0, kind: input, shape index: {}]
  %s1 = inlined_call_operand.hbm [shape: f32[128,128], index: 1, kind: input, shape index: {}]
  %s2 = inlined_call_operand.vmem [shape: f32[1,128], index: 2, kind: input, shape index: {}]
  %s3 = inlined_call_operand.hbm [shape: f32[128,128], index: 3, kind: input, shape index: {}]
  %s4 = inlined_call_operand.hbm [shape: f32[128,128], index: 4, kind: input, shape index: {}]
  %s5 = inlined_call_operand.vmem [shape: f32[1,128], index: 5, kind: input, shape index: {}]
  %s6 = inlined_call_operand.hbm [shape: f32[128,128], index: 6, kind: input, shape index: {}]
  %s7 = inlined_call_operand.vmem [shape: f32[1,128], index: 7, kind: input, shape index: {}]
  %s8 = inlined_call_operand.vmem [shape: f32[1,128], index: 8, kind: input, shape index: {}]
  %s9 = inlined_call_operand.vmem [shape: f32[8,1], index: 9, kind: output, shape index: {}]
  %s10 = sld [smem:[#allocation0]]
  $region66: #{tpu_custom_call.1} parent=0
    _
  %s12 = ssub.s32 1, %s10
  %s13 = scalar_select 0, %s12, %s10
  $region1: #{tpu_custom_call.1} parent=0
    #allocation2 [shape = 'u8[4096]{0}', space=vmem, size = 0x1000, scoped, tag = 'input window, operand 0, single buffered']
    #allocation3 [shape = 's32[1]{0}', space=sflag, size = 0x4, scoped, tag = 'scoped memory for tpu_custom_call.1']
    #allocation4 [shape = 'u8[65536]{0}', space=vmem, size = 0x10000, scoped, tag = 'input window, operand 1, single buffered']
    #allocation5 [shape = 's32[1]{0}', space=sflag, size = 0x4, scoped, tag = 'scoped memory for tpu_custom_call.1']
    #allocation6 [shape = 'u8[65536]{0}', space=vmem, size = 0x10000, scoped, tag = 'input window, operand 3, single buffered']
    #allocation7 [shape = 'u8[65536]{0}', space=vmem, size = 0x10000, scoped, tag = 'input window, operand 4, single buffered']
    #allocation8 [shape = 's32[1]{0}', space=sflag, size = 0x4, scoped, tag = 'scoped memory for tpu_custom_call.1']
    #allocation9 [shape = 'u8[65536]{0}', space=vmem, size = 0x10000, scoped, tag = 'input window, operand 6, single buffered']
    %14 = vsyncpa [#allocation3], 0
    %15 = vsyncpa [#allocation5], 0
    %16 = vsyncpa [#allocation8], 0
    // Predicated region
    $region2: #{tpu_custom_call.1} parent=1 // pred_check
      _
    $region3: #{tpu_custom_call.1} parent=1 // pred_check_branch
      %18 = sbr.rel (0) target = $region5
    $region4: #{tpu_custom_call.1} parent=1 // pred_region
      %s20 = ssub.s32 128, 128
      %21 = vsyncadd [#allocation3], %s20
      %s23 = sshll.u32 [#allocation2], 4
      %s24 = int_to_ptr.vmem [resolvable:$true] %s23
      %26 = dma.hbm_to_vmem [thread:$0]  %s0, 128, %s24, [#allocation3]
    $region5: #{tpu_custom_call.1} parent=1 // pred_fallthru
      _
    // Predicated region
    $region6: #{tpu_custom_call.1} parent=1 // pred_check
      _
    $region7: #{tpu_custom_call.1} parent=1 // pred_check_branch
      %28 = sbr.rel (0) target = $region9
    $region8: #{tpu_custom_call.1} parent=1 // pred_region
      %s30 = ssub.s32 2048, 2048
      %31 = vsyncadd [#allocation5], %s30
      %s32 = sshll.u32 [#allocation4], 4
      %s33 = int_to_ptr.vmem [resolvable:$true] %s32
      %38 = dma.hbm_to_vmem [thread:$0]  %s1, 2048, %s33, [#allocation5], 128, 128, 8
    $region9: #{tpu_custom_call.1} parent=1 // pred_fallthru
      _
    // Predicated region
    $region10: #{tpu_custom_call.1} parent=1 // pred_check
      _
    $region11: #{tpu_custom_call.1} parent=1 // pred_check_branch
      %40 = sbr.rel (0) target = $region13
    $region12: #{tpu_custom_call.1} parent=1 // pred_region
      _
    $region13: #{tpu_custom_call.1} parent=1 // pred_fallthru
      _
    // Predicated region
    $region14: #{tpu_custom_call.1} parent=1 // pred_check
      _
    $region15: #{tpu_custom_call.1} parent=1 // pred_check_branch
      %42 = sbr.rel (0) target = $region17
    $region16: #{tpu_custom_call.1} parent=1 // pred_region
      %s44 = ssub.s32 2048, 2048
      %45 = vsyncadd [#allocation5], %s44
      %s46 = sshll.u32 [#allocation6], 4
      %s47 = int_to_ptr.vmem [resolvable:$true] %s46
      %52 = dma.hbm_to_vmem [thread:$0]  %s3, 2048, %s47, [#allocation5], 128, 128, 8
    $region17: #{tpu_custom_call.1} parent=1 // pred_fallthru
      _
    // Predicated region
    $region18: #{tpu_custom_call.1} parent=1 // pred_check
      _
    $region19: #{tpu_custom_call.1} parent=1 // pred_check_branch
      %54 = sbr.rel (0) target = $region21
    $region20: #{tpu_custom_call.1} parent=1 // pred_region
      %s56 = ssub.s32 2048, 2048
      %57 = vsyncadd [#allocation8], %s56
      %s58 = sshll.u32 [#allocation7], 4
      %s59 = int_to_ptr.vmem [resolvable:$true] %s58
      %64 = dma.hbm_to_vmem [thread:$0]  %s4, 2048, %s59, [#allocation8], 128, 128, 8
    $region21: #{tpu_custom_call.1} parent=1 // pred_fallthru
      _
    // Predicated region
    $region22: #{tpu_custom_call.1} parent=1 // pred_check
      _
    $region23: #{tpu_custom_call.1} parent=1 // pred_check_branch
      %66 = sbr.rel (0) target = $region25
    $region24: #{tpu_custom_call.1} parent=1 // pred_region
      _
    $region25: #{tpu_custom_call.1} parent=1 // pred_fallthru
      _
    // Predicated region
    $region26: #{tpu_custom_call.1} parent=1 // pred_check
      _
    $region27: #{tpu_custom_call.1} parent=1 // pred_check_branch
      %68 = sbr.rel (0) target = $region29
    $region28: #{tpu_custom_call.1} parent=1 // pred_region
      %s70 = ssub.s32 2048, 2048
      %71 = vsyncadd [#allocation8], %s70
      %s72 = sshll.u32 [#allocation9], 4
      %s73 = int_to_ptr.vmem [resolvable:$true] %s72
      %78 = dma.hbm_to_vmem [thread:$0]  %s6, 2048, %s73, [#allocation8], 128, 128, 8
    $region29: #{tpu_custom_call.1} parent=1 // pred_fallthru
      _
    // Predicated region
    $region30: #{tpu_custom_call.1} parent=1 // pred_check
      _
    $region31: #{tpu_custom_call.1} parent=1 // pred_check_branch
      %80 = sbr.rel (0) target = $region33
    $region32: #{tpu_custom_call.1} parent=1 // pred_region
      _
    $region33: #{tpu_custom_call.1} parent=1 // pred_fallthru
      _
    // Predicated region
    $region34: #{tpu_custom_call.1} parent=1 // pred_check
      _
    $region35: #{tpu_custom_call.1} parent=1 // pred_check_branch
      %82 = sbr.rel (0) target = $region37
    $region36: #{tpu_custom_call.1} parent=1 // pred_region
      _
    $region37: #{tpu_custom_call.1} parent=1 // pred_fallthru
      _
    // Predicated region
    $region38: #{tpu_custom_call.1} parent=1 // pred_check
      _
    $region39: #{tpu_custom_call.1} parent=1 // pred_check_branch
      %84 = sbr.rel (0) target = $region41
    $region40: #{tpu_custom_call.1} parent=1 // pred_region
      %85 = dma.done [#allocation3], 128
    $region41: #{tpu_custom_call.1} parent=1 // pred_fallthru
      _
    // Predicated region
    $region42: #{tpu_custom_call.1} parent=1 // pred_check
      _
    $region43: #{tpu_custom_call.1} parent=1 // pred_check_branch
      %87 = sbr.rel (0) target = $region45
    $region44: #{tpu_custom_call.1} parent=1 // pred_region
      %88 = dma.done [#allocation5], 2048
    $region45: #{tpu_custom_call.1} parent=1 // pred_fallthru
      _
    // Predicated region
    $region46: #{tpu_custom_call.1} parent=1 // pred_check
      _
    $region47: #{tpu_custom_call.1} parent=1 // pred_check_branch
      %90 = sbr.rel (0) target = $region49
    $region48: #{tpu_custom_call.1} parent=1 // pred_region
      %91 = dma.done [#allocation5], 2048
    $region49: #{tpu_custom_call.1} parent=1 // pred_fallthru
      _
    // Predicated region
    $region50: #{tpu_custom_call.1} parent=1 // pred_check
      _
    $region51: #{tpu_custom_call.1} parent=1 // pred_check_branch
      %93 = sbr.rel (0) target = $region53
    $region52: #{tpu_custom_call.1} parent=1 // pred_region
      %94 = dma.done [#allocation8], 2048
    $region53: #{tpu_custom_call.1} parent=1 // pred_fallthru
      _
    // Predicated region
    $region54: #{tpu_custom_call.1} parent=1 // pred_check
      _
    $region55: #{tpu_custom_call.1} parent=1 // pred_check_branch
      %96 = sbr.rel (0) target = $region57
    $region56: #{tpu_custom_call.1} parent=1 // pred_region
      %97 = dma.done [#allocation8], 2048
    $region57: #{tpu_custom_call.1} parent=1 // pred_fallthru
      _
    %v98 = vld [vmem:[#allocation2] sm:$0xff]
    %v99 = vld [vmem:[#allocation4] sm:$0xff]
    %v100 = vld [vmem:[#allocation4 + $0x8] sm:$0xff]
    %v101 = vld [vmem:[#allocation4 + $0x10] sm:$0xff]
    %v102 = vld [vmem:[#allocation4 + $0x18] sm:$0xff]
    %v103 = vld [vmem:[#allocation4 + $0x20] sm:$0xff]
    %v104 = vld [vmem:[#allocation4 + $0x28] sm:$0xff]
    %v105 = vld [vmem:[#allocation4 + $0x30] sm:$0xff]
    %v106 = vld [vmem:[#allocation4 + $0x38] sm:$0xff]
    %v107 = vld [vmem:[#allocation4 + $0x40] sm:$0xff]
    %v108 = vld [vmem:[#allocation4 + $0x48] sm:$0xff]
    %v109 = vld [vmem:[#allocation4 + $0x50] sm:$0xff]
    %v110 = vld [vmem:[#allocation4 + $0x58] sm:$0xff]
    %v111 = vld [vmem:[#allocation4 + $0x60] sm:$0xff]
    %v112 = vld [vmem:[#allocation4 + $0x68] sm:$0xff]
    %v113 = vld [vmem:[#allocation4 + $0x70] sm:$0xff]
    %v114 = vld [vmem:[#allocation4 + $0x78] sm:$0xff]
    %v115 = vld [vmem:[%s2] sm:$0x1]
    %v117 = vlaneseq
    %v118 = vshrl.u32 %v117, 7
    %v119 = vsub.s32 0, %v118
    %v120 = vrot.slane %v115, %v119
    %122 = vmatprep.subr.mxu0 0.0
    %v123 = vand.u32 %v114, 4294901760
    %124 = vmatpush1.msra.mxu0 %v123
    %125 = vmatprep.subr.mxu0 0.0
    %v126 = vand.u32 %v113, 4294901760
    %127 = vmatpush1.msra.mxu0 %v126
    %128 = vmatprep.subr.mxu0 0.0
    %v129 = vand.u32 %v112, 4294901760
    %130 = vmatpush1.msra.mxu0 %v129
    %131 = vmatprep.subr.mxu0 0.0
    %v132 = vand.u32 %v111, 4294901760
    %133 = vmatpush1.msra.mxu0 %v132
    %134 = vmatprep.subr.mxu0 0.0
    %v135 = vand.u32 %v110, 4294901760
    %136 = vmatpush1.msra.mxu0 %v135
    %137 = vmatprep.subr.mxu0 0.0
    %v138 = vand.u32 %v109, 4294901760
    %139 = vmatpush1.msra.mxu0 %v138
    %140 = vmatprep.subr.mxu0 0.0
    %v141 = vand.u32 %v108, 4294901760
    %142 = vmatpush1.msra.mxu0 %v141
    %143 = vmatprep.subr.mxu0 0.0
    %v144 = vand.u32 %v107, 4294901760
    %145 = vmatpush1.msra.mxu0 %v144
    %146 = vmatprep.subr.mxu0 0.0
    %v147 = vand.u32 %v106, 4294901760
    %148 = vmatpush1.msra.mxu0 %v147
    %149 = vmatprep.subr.mxu0 0.0
    %v150 = vand.u32 %v105, 4294901760
    %151 = vmatpush1.msra.mxu0 %v150
    %152 = vmatprep.subr.mxu0 0.0
    %v153 = vand.u32 %v104, 4294901760
    %154 = vmatpush1.msra.mxu0 %v153
    %155 = vmatprep.subr.mxu0 0.0
    %v156 = vand.u32 %v103, 4294901760
    %157 = vmatpush1.msra.mxu0 %v156
    %158 = vmatprep.subr.mxu0 0.0
    %v159 = vand.u32 %v102, 4294901760
    %160 = vmatpush1.msra.mxu0 %v159
    %161 = vmatprep.subr.mxu0 0.0
    %v162 = vand.u32 %v101, 4294901760
    %163 = vmatpush1.msra.mxu0 %v162
    %164 = vmatprep.subr.mxu0 0.0
    %v165 = vand.u32 %v100, 4294901760
    %166 = vmatpush1.msra.mxu0 %v165
    %167 = vmatprep.subr.mxu0 0.0
    %v168 = vand.u32 %v99, 4294901760
    %169 = vmatpush1.msra.mxu0 %v168
    %170 = vmatprep.subr.mxu0 0.0
    %171 = vmatpush2.msra.mxu0 0.0
    %172 = vmatprep.subr.mxu0 0.0
    %173 = vmatpush2.msra.mxu0 0.0
    %174 = vmatprep.subr.mxu0 0.0
    %175 = vmatpush2.msra.mxu0 0.0
    %176 = vmatprep.subr.mxu0 0.0
    %177 = vmatpush2.msra.mxu0 0.0
    %178 = vmatprep.subr.mxu0 0.0
    %179 = vmatpush2.msra.mxu0 0.0
    %180 = vmatprep.subr.mxu0 0.0
    %181 = vmatpush2.msra.mxu0 0.0
    %182 = vmatprep.subr.mxu0 0.0
    %183 = vmatpush2.msra.mxu0 0.0
    %184 = vmatprep.subr.mxu0 0.0
    %185 = vmatpush2.msra.mxu0 0.0
    %186 = vmatprep.subr.mxu0 0.0
    %187 = vmatpush2.msra.mxu0 0.0
    %188 = vmatprep.subr.mxu0 0.0
    %189 = vmatpush2.msra.mxu0 0.0
    %190 = vmatprep.subr.mxu0 0.0
    %191 = vmatpush2.msra.mxu0 0.0
    %192 = vmatprep.subr.mxu0 0.0
    %193 = vmatpush2.msra.mxu0 0.0
    %194 = vmatprep.subr.mxu0 0.0
    %195 = vmatpush2.msra.mxu0 0.0
    %196 = vmatprep.subr.mxu0 0.0
    %197 = vmatpush2.msra.mxu0 0.0
    %198 = vmatprep.subr.mxu0 0.0
    %199 = vmatpush2.msra.mxu0 0.0
    %200 = vmatprep.subr.mxu0 0.0
    %201 = vmatpush2.msra.mxu0 0.0
    %202 = vmatprep.mubr.f32.mxu0 0.0
    %v203 = vand.u32 %v98, 4294901760
    %v204 = vsub.f32 %v98, %v203
    %v205 = vand.u32 %v204, 4294901760
    %v206 = vsub.f32 %v204, %v205
    %v207 = vand.u32 %v206, 4294901760
    %208 = vmatmul.mubr.f32.gmra.mxu0 %v207
    %v209 = vpop.f32.mrf.mxu0
    %v210 = vadd.f32 %v120, %v209
    %v211 = vpop.f32.mrf.mxu0
    %212 = vdwg.mxu0
    %213 = vmatprep.subr.mxu0 0.0
    %v214 = vand.u32 %v114, 4294901760
    %v215 = vsub.f32 %v114, %v214
    %v216 = vand.u32 %v215, 4294901760
    %v217 = vsub.f32 %v215, %v216
    %v218 = vand.u32 %v217, 4294901760
    %219 = vmatpush1.msra.mxu0 %v218
    %220 = vmatprep.subr.mxu0 0.0
    %v221 = vand.u32 %v113, 4294901760
    %v222 = vsub.f32 %v113, %v221
    %v223 = vand.u32 %v222, 4294901760
    %v224 = vsub.f32 %v222, %v223
    %v225 = vand.u32 %v224, 4294901760
    %226 = vmatpush1.msra.mxu0 %v225
    %227 = vmatprep.subr.mxu0 0.0
    %v228 = vand.u32 %v112, 4294901760
    %v229 = vsub.f32 %v112, %v228
    %v230 = vand.u32 %v229, 4294901760
    %v231 = vsub.f32 %v229, %v230
    %v232 = vand.u32 %v231, 4294901760
    %233 = vmatpush1.msra.mxu0 %v232
    %234 = vmatprep.subr.mxu0 0.0
    %v235 = vand.u32 %v111, 4294901760
    %v236 = vsub.f32 %v111, %v235
    %v237 = vand.u32 %v236, 4294901760
    %v238 = vsub.f32 %v236, %v237
    %v239 = vand.u32 %v238, 4294901760
    %240 = vmatpush1.msra.mxu0 %v239
    %241 = vmatprep.subr.mxu0 0.0
    %v242 = vand.u32 %v110, 4294901760
    %v243 = vsub.f32 %v110, %v242
    %v244 = vand.u32 %v243, 4294901760
    %v245 = vsub.f32 %v243, %v244
    %v246 = vand.u32 %v245, 4294901760
    %247 = vmatpush1.msra.mxu0 %v246
    %248 = vmatprep.subr.mxu0 0.0
    %v249 = vand.u32 %v109, 4294901760
    %v250 = vsub.f32 %v109, %v249
    %v251 = vand.u32 %v250, 4294901760
    %v252 = vsub.f32 %v250, %v251
    %v253 = vand.u32 %v252, 4294901760
    %254 = vmatpush1.msra.mxu0 %v253
    %255 = vmatprep.subr.mxu0 0.0
    %v256 = vand.u32 %v108, 4294901760
    %v257 = vsub.f32 %v108, %v256
    %v258 = vand.u32 %v257, 4294901760
    %v259 = vsub.f32 %v257, %v258
    %v260 = vand.u32 %v259, 4294901760
    %261 = vmatpush1.msra.mxu0 %v260
    %262 = vmatprep.subr.mxu0 0.0
    %v263 = vand.u32 %v107, 4294901760
    %v264 = vsub.f32 %v107, %v263
    %v265 = vand.u32 %v264, 4294901760
    %v266 = vsub.f32 %v264, %v265
    %v267 = vand.u32 %v266, 4294901760
    %268 = vmatpush1.msra.mxu0 %v267
    %269 = vmatprep.subr.mxu0 0.0
    %v270 = vand.u32 %v106, 4294901760
    %v271 = vsub.f32 %v106, %v270
    %v272 = vand.u32 %v271, 4294901760
    %v273 = vsub.f32 %v271, %v272
    %v274 = vand.u32 %v273, 4294901760
    %275 = vmatpush1.msra.mxu0 %v274
    %276 = vmatprep.subr.mxu0 0.0
    %v277 = vand.u32 %v105, 4294901760
    %v278 = vsub.f32 %v105, %v277
    %v279 = vand.u32 %v278, 4294901760
    %v280 = vsub.f32 %v278, %v279
    %v281 = vand.u32 %v280, 4294901760
    %282 = vmatpush1.msra.mxu0 %v281
    %283 = vmatprep.subr.mxu0 0.0
    %v284 = vand.u32 %v104, 4294901760
    %v285 = vsub.f32 %v104, %v284
    %v286 = vand.u32 %v285, 4294901760
    %v287 = vsub.f32 %v285, %v286
    %v288 = vand.u32 %v287, 4294901760
    %289 = vmatpush1.msra.mxu0 %v288
    %290 = vmatprep.subr.mxu0 0.0
    %v291 = vand.u32 %v103, 4294901760
    %v292 = vsub.f32 %v103, %v291
    %v293 = vand.u32 %v292, 4294901760
    %v294 = vsub.f32 %v292, %v293
    %v295 = vand.u32 %v294, 4294901760
    %296 = vmatpush1.msra.mxu0 %v295
    %297 = vmatprep.subr.mxu0 0.0
    %v298 = vand.u32 %v102, 4294901760
    %v299 = vsub.f32 %v102, %v298
    %v300 = vand.u32 %v299, 4294901760
    %v301 = vsub.f32 %v299, %v300
    %v302 = vand.u32 %v301, 4294901760
    %303 = vmatpush1.msra.mxu0 %v302
    %304 = vmatprep.subr.mxu0 0.0
    %v305 = vand.u32 %v101, 4294901760
    %v306 = vsub.f32 %v101, %v305
    %v307 = vand.u32 %v306, 4294901760
    %v308 = vsub.f32 %v306, %v307
    %v309 = vand.u32 %v308, 4294901760
    %310 = vmatpush1.msra.mxu0 %v309
    %311 = vmatprep.subr.mxu0 0.0
    %v312 = vand.u32 %v100, 4294901760
    %v313 = vsub.f32 %v100, %v312
    %v314 = vand.u32 %v313, 4294901760
    %v315 = vsub.f32 %v313, %v314
    %v316 = vand.u32 %v315, 4294901760
    %317 = vmatpush1.msra.mxu0 %v316
    %318 = vmatprep.subr.mxu0 0.0
    %v319 = vand.u32 %v99, 4294901760
    %v320 = vsub.f32 %v99, %v319
    %v321 = vand.u32 %v320, 4294901760
    %v322 = vsub.f32 %v320, %v321
    %v323 = vand.u32 %v322, 4294901760
    %324 = vmatpush1.msra.mxu0 %v323
    %325 = vmatprep.subr.mxu0 0.0
    %326 = vmatpush2.msra.mxu0 0.0
    %327 = vmatprep.subr.mxu0 0.0
    %328 = vmatpush2.msra.mxu0 0.0
    %329 = vmatprep.subr.mxu0 0.0
    %330 = vmatpush2.msra.mxu0 0.0
    %331 = vmatprep.subr.mxu0 0.0
    %332 = vmatpush2.msra.mxu0 0.0
    %333 = vmatprep.subr.mxu0 0.0
    %334 = vmatpush2.msra.mxu0 0.0
    %335 = vmatprep.subr.mxu0 0.0
    %336 = vmatpush2.msra.mxu0 0.0
    %337 = vmatprep.subr.mxu0 0.0
    %338 = vmatpush2.msra.mxu0 0.0
    %339 = vmatprep.subr.mxu0 0.0
    %340 = vmatpush2.msra.mxu0 0.0
    %341 = vmatprep.subr.mxu0 0.0
    %342 = vmatpush2.msra.mxu0 0.0
    %343 = vmatprep.subr.mxu0 0.0
    %344 = vmatpush2.msra.mxu0 0.0
    %345 = vmatprep.subr.mxu0 0.0
    %346 = vmatpush2.msra.mxu0 0.0
    %347 = vmatprep.subr.mxu0 0.0
    %348 = vmatpush2.msra.mxu0 0.0
    %349 = vmatprep.subr.mxu0 0.0
    %350 = vmatpush2.msra.mxu0 0.0
    %351 = vmatprep.subr.mxu0 0.0
    %352 = vmatpush2.msra.mxu0 0.0
    %353 = vmatprep.subr.mxu0 0.0
    %354 = vmatpush2.msra.mxu0 0.0
    %355 = vmatprep.subr.mxu0 0.0
    %356 = vmatpush2.msra.mxu0 0.0
    %357 = vmatprep.mubr.f32.mxu0 0.0
    %v358 = vand.u32 %v98, 4294901760
    %359 = vmatmul.mubr.f32.gmra.mxu0 %v358
    %v360 = vpop.f32.mrf.mxu0
    %v361 = vadd.f32 %v210, %v360
    %v362 = vpop.f32.mrf.mxu0
    %363 = vdwg.mxu0
    %364 = vmatprep.subr.mxu0 0.0
    %v365 = vand.u32 %v114, 4294901760
    %v366 = vsub.f32 %v114, %v365
    %367 = vmatpush1.msra.mxu0 %v366
    %368 = vmatprep.subr.mxu0 0.0
    %v369 = vand.u32 %v113, 4294901760
    %v370 = vsub.f32 %v113, %v369
    %371 = vmatpush1.msra.mxu0 %v370
    %372 = vmatprep.subr.mxu0 0.0
    %v373 = vand.u32 %v112, 4294901760
    %v374 = vsub.f32 %v112, %v373
    %375 = vmatpush1.msra.mxu0 %v374
    %376 = vmatprep.subr.mxu0 0.0
    %v377 = vand.u32 %v111, 4294901760
    %v378 = vsub.f32 %v111, %v377
    %379 = vmatpush1.msra.mxu0 %v378
    %380 = vmatprep.subr.mxu0 0.0
    %v381 = vand.u32 %v110, 4294901760
    %v382 = vsub.f32 %v110, %v381
    %383 = vmatpush1.msra.mxu0 %v382
    %384 = vmatprep.subr.mxu0 0.0
    %v385 = vand.u32 %v109, 4294901760
    %v386 = vsub.f32 %v109, %v385
    %387 = vmatpush1.msra.mxu0 %v386
    %388 = vmatprep.subr.mxu0 0.0
    %v389 = vand.u32 %v108, 4294901760
    %v390 = vsub.f32 %v108, %v389
    %391 = vmatpush1.msra.mxu0 %v390
    %392 = vmatprep.subr.mxu0 0.0
    %v393 = vand.u32 %v107, 4294901760
    %v394 = vsub.f32 %v107, %v393
    %395 = vmatpush1.msra.mxu0 %v394
    %396 = vmatprep.subr.mxu0 0.0
    %v397 = vand.u32 %v106, 4294901760
    %v398 = vsub.f32 %v106, %v397
    %399 = vmatpush1.msra.mxu0 %v398
    %400 = vmatprep.subr.mxu0 0.0
    %v401 = vand.u32 %v105, 4294901760
    %v402 = vsub.f32 %v105, %v401
    %403 = vmatpush1.msra.mxu0 %v402
    %404 = vmatprep.subr.mxu0 0.0
    %v405 = vand.u32 %v104, 4294901760
    %v406 = vsub.f32 %v104, %v405
    %407 = vmatpush1.msra.mxu0 %v406
    %408 = vmatprep.subr.mxu0 0.0
    %v409 = vand.u32 %v103, 4294901760
    %v410 = vsub.f32 %v103, %v409
    %411 = vmatpush1.msra.mxu0 %v410
    %412 = vmatprep.subr.mxu0 0.0
    %v413 = vand.u32 %v102, 4294901760
    %v414 = vsub.f32 %v102, %v413
    %415 = vmatpush1.msra.mxu0 %v414
    %416 = vmatprep.subr.mxu0 0.0
    %v417 = vand.u32 %v101, 4294901760
    %v418 = vsub.f32 %v101, %v417
    %419 = vmatpush1.msra.mxu0 %v418
    %420 = vmatprep.subr.mxu0 0.0
    %v421 = vand.u32 %v100, 4294901760
    %v422 = vsub.f32 %v100, %v421
    %423 = vmatpush1.msra.mxu0 %v422
    %424 = vmatprep.subr.mxu0 0.0
    %v425 = vand.u32 %v99, 4294901760
    %v426 = vsub.f32 %v99, %v425
    %427 = vmatpush1.msra.mxu0 %v426
    %428 = vmatprep.subr.mxu0 0.0
    %429 = vmatpush2.msra.mxu0 0.0
    %430 = vmatprep.subr.mxu0 0.0
    %431 = vmatpush2.msra.mxu0 0.0
    %432 = vmatprep.subr.mxu0 0.0
    %433 = vmatpush2.msra.mxu0 0.0
    %434 = vmatprep.subr.mxu0 0.0
    %435 = vmatpush2.msra.mxu0 0.0
    %436 = vmatprep.subr.mxu0 0.0
    %437 = vmatpush2.msra.mxu0 0.0
    %438 = vmatprep.subr.mxu0 0.0
    %439 = vmatpush2.msra.mxu0 0.0
    %440 = vmatprep.subr.mxu0 0.0
    %441 = vmatpush2.msra.mxu0 0.0
    %442 = vmatprep.subr.mxu0 0.0
    %443 = vmatpush2.msra.mxu0 0.0
    %444 = vmatprep.subr.mxu0 0.0
    %445 = vmatpush2.msra.mxu0 0.0
    %446 = vmatprep.subr.mxu0 0.0
    %447 = vmatpush2.msra.mxu0 0.0
    %448 = vmatprep.subr.mxu0 0.0
    %449 = vmatpush2.msra.mxu0 0.0
    %450 = vmatprep.subr.mxu0 0.0
    %451 = vmatpush2.msra.mxu0 0.0
    %452 = vmatprep.subr.mxu0 0.0
    %453 = vmatpush2.msra.mxu0 0.0
    %454 = vmatprep.subr.mxu0 0.0
    %455 = vmatpush2.msra.mxu0 0.0
    %456 = vmatprep.subr.mxu0 0.0
    %457 = vmatpush2.msra.mxu0 0.0
    %458 = vmatprep.subr.mxu0 0.0
    %459 = vmatpush2.msra.mxu0 0.0
    %460 = vmatprep.mubr.f32.mxu0 0.0
    %v461 = vand.u32 %v98, 4294901760
    %v462 = vsub.f32 %v98, %v461
    %463 = vmatmul.mubr.f32.gmra.mxu0 %v462
    %v464 = vpop.f32.mrf.mxu0
    %v465 = vadd.f32 %v361, %v464
    %v466 = vpop.f32.mrf.mxu0
    %467 = vdwg.mxu0
    %468 = vmatprep.subr.mxu0 0.0
    %v469 = vand.u32 %v114, 4294901760
    %470 = vmatpush1.msra.mxu0 %v469
    %471 = vmatprep.subr.mxu0 0.0
    %v472 = vand.u32 %v113, 4294901760
    %473 = vmatpush1.msra.mxu0 %v472
    %474 = vmatprep.subr.mxu0 0.0
    %v475 = vand.u32 %v112, 4294901760
    %476 = vmatpush1.msra.mxu0 %v475
    %477 = vmatprep.subr.mxu0 0.0
    %v478 = vand.u32 %v111, 4294901760
    %479 = vmatpush1.msra.mxu0 %v478
    %480 = vmatprep.subr.mxu0 0.0
    %v481 = vand.u32 %v110, 4294901760
    %482 = vmatpush1.msra.mxu0 %v481
    %483 = vmatprep.subr.mxu0 0.0
    %v484 = vand.u32 %v109, 4294901760
    %485 = vmatpush1.msra.mxu0 %v484
    %486 = vmatprep.subr.mxu0 0.0
    %v487 = vand.u32 %v108, 4294901760
    %488 = vmatpush1.msra.mxu0 %v487
    %489 = vmatprep.subr.mxu0 0.0
    %v490 = vand.u32 %v107, 4294901760
    %491 = vmatpush1.msra.mxu0 %v490
    %492 = vmatprep.subr.mxu0 0.0
    %v493 = vand.u32 %v106, 4294901760
    %494 = vmatpush1.msra.mxu0 %v493
    %495 = vmatprep.subr.mxu0 0.0
    %v496 = vand.u32 %v105, 4294901760
    %497 = vmatpush1.msra.mxu0 %v496
    %498 = vmatprep.subr.mxu0 0.0
    %v499 = vand.u32 %v104, 4294901760
    %500 = vmatpush1.msra.mxu0 %v499
    %501 = vmatprep.subr.mxu0 0.0
    %v502 = vand.u32 %v103, 4294901760
    %503 = vmatpush1.msra.mxu0 %v502
    %504 = vmatprep.subr.mxu0 0.0
    %v505 = vand.u32 %v102, 4294901760
    %506 = vmatpush1.msra.mxu0 %v505
    %507 = vmatprep.subr.mxu0 0.0
    %v508 = vand.u32 %v101, 4294901760
    %509 = vmatpush1.msra.mxu0 %v508
    %510 = vmatprep.subr.mxu0 0.0
    %v511 = vand.u32 %v100, 4294901760
    %512 = vmatpush1.msra.mxu0 %v511
    %513 = vmatprep.subr.mxu0 0.0
    %v514 = vand.u32 %v99, 4294901760
    %515 = vmatpush1.msra.mxu0 %v514
    %516 = vmatprep.subr.mxu0 0.0
    %517 = vmatpush2.msra.mxu0 0.0
    %518 = vmatprep.subr.mxu0 0.0
    %519 = vmatpush2.msra.mxu0 0.0
    %520 = vmatprep.subr.mxu0 0.0
    %521 = vmatpush2.msra.mxu0 0.0
    %522 = vmatprep.subr.mxu0 0.0
    %523 = vmatpush2.msra.mxu0 0.0
    %524 = vmatprep.subr.mxu0 0.0
    %525 = vmatpush2.msra.mxu0 0.0
    %526 = vmatprep.subr.mxu0 0.0
    %527 = vmatpush2.msra.mxu0 0.0
    %528 = vmatprep.subr.mxu0 0.0
    %529 = vmatpush2.msra.mxu0 0.0
    %530 = vmatprep.subr.mxu0 0.0
    %531 = vmatpush2.msra.mxu0 0.0
    %532 = vmatprep.subr.mxu0 0.0
    %533 = vmatpush2.msra.mxu0 0.0
    %534 = vmatprep.subr.mxu0 0.0
    %535 = vmatpush2.msra.mxu0 0.0
    %536 = vmatprep.subr.mxu0 0.0
    %537 = vmatpush2.msra.mxu0 0.0
    %538 = vmatprep.subr.mxu0 0.0
    %539 = vmatpush2.msra.mxu0 0.0
    %540 = vmatprep.subr.mxu0 0.0
    %541 = vmatpush2.msra.mxu0 0.0
    %542 = vmatprep.subr.mxu0 0.0
    %543 = vmatpush2.msra.mxu0 0.0
    %544 = vmatprep.subr.mxu0 0.0
    %545 = vmatpush2.msra.mxu0 0.0
    %546 = vmatprep.subr.mxu0 0.0
    %547 = vmatpush2.msra.mxu0 0.0
    %548 = vmatprep.mubr.f32.mxu0 0.0
    %v549 = vand.u32 %v98, 4294901760
    %v550 = vsub.f32 %v98, %v549
    %v551 = vand.u32 %v550, 4294901760
    %552 = vmatmul.mubr.f32.gmra.mxu0 %v551
    %v553 = vpop.f32.mrf.mxu0
    %v554 = vadd.f32 %v465, %v553
    %v555 = vpop.f32.mrf.mxu0
    %556 = vdwg.mxu0
    %557 = vmatprep.subr.mxu0 0.0
    %v558 = vand.u32 %v114, 4294901760
    %v559 = vsub.f32 %v114, %v558
    %v560 = vand.u32 %v559, 4294901760
    %561 = vmatpush1.msra.mxu0 %v560
    %562 = vmatprep.subr.mxu0 0.0
    %v563 = vand.u32 %v113, 4294901760
    %v564 = vsub.f32 %v113, %v563
    %v565 = vand.u32 %v564, 4294901760
    %566 = vmatpush1.msra.mxu0 %v565
    %567 = vmatprep.subr.mxu0 0.0
    %v568 = vand.u32 %v112, 4294901760
    %v569 = vsub.f32 %v112, %v568
    %v570 = vand.u32 %v569, 4294901760
    %571 = vmatpush1.msra.mxu0 %v570
    %572 = vmatprep.subr.mxu0 0.0
    %v573 = vand.u32 %v111, 4294901760
    %v574 = vsub.f32 %v111, %v573
    %v575 = vand.u32 %v574, 4294901760
    %576 = vmatpush1.msra.mxu0 %v575
    %577 = vmatprep.subr.mxu0 0.0
    %v578 = vand.u32 %v110, 4294901760
    %v579 = vsub.f32 %v110, %v578
    %v580 = vand.u32 %v579, 4294901760
    %581 = vmatpush1.msra.mxu0 %v580
    %582 = vmatprep.subr.mxu0 0.0
    %v583 = vand.u32 %v109, 4294901760
    %v584 = vsub.f32 %v109, %v583
    %v585 = vand.u32 %v584, 4294901760
    %586 = vmatpush1.msra.mxu0 %v585
    %587 = vmatprep.subr.mxu0 0.0
    %v588 = vand.u32 %v108, 4294901760
    %v589 = vsub.f32 %v108, %v588
    %v590 = vand.u32 %v589, 4294901760
    %591 = vmatpush1.msra.mxu0 %v590
    %592 = vmatprep.subr.mxu0 0.0
    %v593 = vand.u32 %v107, 4294901760
    %v594 = vsub.f32 %v107, %v593
    %v595 = vand.u32 %v594, 4294901760
    %596 = vmatpush1.msra.mxu0 %v595
    %597 = vmatprep.subr.mxu0 0.0
    %v598 = vand.u32 %v106, 4294901760
    %v599 = vsub.f32 %v106, %v598
    %v600 = vand.u32 %v599, 4294901760
    %601 = vmatpush1.msra.mxu0 %v600
    %602 = vmatprep.subr.mxu0 0.0
    %v603 = vand.u32 %v105, 4294901760
    %v604 = vsub.f32 %v105, %v603
    %v605 = vand.u32 %v604, 4294901760
    %606 = vmatpush1.msra.mxu0 %v605
    %607 = vmatprep.subr.mxu0 0.0
    %v608 = vand.u32 %v104, 4294901760
    %v609 = vsub.f32 %v104, %v608
    %v610 = vand.u32 %v609, 4294901760
    %611 = vmatpush1.msra.mxu0 %v610
    %612 = vmatprep.subr.mxu0 0.0
    %v613 = vand.u32 %v103, 4294901760
    %v614 = vsub.f32 %v103, %v613
    %v615 = vand.u32 %v614, 4294901760
    %616 = vmatpush1.msra.mxu0 %v615
    %617 = vmatprep.subr.mxu0 0.0
    %v618 = vand.u32 %v102, 4294901760
    %v619 = vsub.f32 %v102, %v618
    %v620 = vand.u32 %v619, 4294901760
    %621 = vmatpush1.msra.mxu0 %v620
    %622 = vmatprep.subr.mxu0 0.0
    %v623 = vand.u32 %v101, 4294901760
    %v624 = vsub.f32 %v101, %v623
    %v625 = vand.u32 %v624, 4294901760
    %626 = vmatpush1.msra.mxu0 %v625
    %627 = vmatprep.subr.mxu0 0.0
    %v628 = vand.u32 %v100, 4294901760
    %v629 = vsub.f32 %v100, %v628
    %v630 = vand.u32 %v629, 4294901760
    %631 = vmatpush1.msra.mxu0 %v630
    %632 = vmatprep.subr.mxu0 0.0
    %v633 = vand.u32 %v99, 4294901760
    %v634 = vsub.f32 %v99, %v633
    %v635 = vand.u32 %v634, 4294901760
    %636 = vmatpush1.msra.mxu0 %v635
    %637 = vmatprep.subr.mxu0 0.0
    %638 = vmatpush2.msra.mxu0 0.0
    %639 = vmatprep.subr.mxu0 0.0
    %640 = vmatpush2.msra.mxu0 0.0
    %641 = vmatprep.subr.mxu0 0.0
    %642 = vmatpush2.msra.mxu0 0.0
    %643 = vmatprep.subr.mxu0 0.0
    %644 = vmatpush2.msra.mxu0 0.0
    %645 = vmatprep.subr.mxu0 0.0
    %646 = vmatpush2.msra.mxu0 0.0
    %647 = vmatprep.subr.mxu0 0.0
    %648 = vmatpush2.msra.mxu0 0.0
    %649 = vmatprep.subr.mxu0 0.0
    %650 = vmatpush2.msra.mxu0 0.0
    %651 = vmatprep.subr.mxu0 0.0
    %652 = vmatpush2.msra.mxu0 0.0
    %653 = vmatprep.subr.mxu0 0.0
    %654 = vmatpush2.msra.mxu0 0.0
    %655 = vmatprep.subr.mxu0 0.0
    %656 = vmatpush2.msra.mxu0 0.0
    %657 = vmatprep.subr.mxu0 0.0
    %658 = vmatpush2.msra.mxu0 0.0
    %659 = vmatprep.subr.mxu0 0.0
    %660 = vmatpush2.msra.mxu0 0.0
    %661 = vmatprep.subr.mxu0 0.0
    %662 = vmatpush2.msra.mxu0 0.0
    %663 = vmatprep.subr.mxu0 0.0
    %664 = vmatpush2.msra.mxu0 0.0
    %665 = vmatprep.subr.mxu0 0.0
    %666 = vmatpush2.msra.mxu0 0.0
    %667 = vmatprep.subr.mxu0 0.0
    %668 = vmatpush2.msra.mxu0 0.0
    %669 = vmatprep.mubr.f32.mxu0 0.0
    %v670 = vand.u32 %v98, 4294901760
    %671 = vmatmul.mubr.f32.gmra.mxu0 %v670
    %v672 = vpop.f32.mrf.mxu0
    %v673 = vadd.f32 %v554, %v672
    %v674 = vpop.f32.mrf.mxu0
    %675 = vdwg.mxu0
    %676 = vmatprep.subr.mxu0 0.0
    %v677 = vand.u32 %v114, 4294901760
    %678 = vmatpush1.msra.mxu0 %v677
    %679 = vmatprep.subr.mxu0 0.0
    %v680 = vand.u32 %v113, 4294901760
    %681 = vmatpush1.msra.mxu0 %v680
    %682 = vmatprep.subr.mxu0 0.0
    %v683 = vand.u32 %v112, 4294901760
    %684 = vmatpush1.msra.mxu0 %v683
    %685 = vmatprep.subr.mxu0 0.0
    %v686 = vand.u32 %v111, 4294901760
    %687 = vmatpush1.msra.mxu0 %v686
    %688 = vmatprep.subr.mxu0 0.0
    %v689 = vand.u32 %v110, 4294901760
    %690 = vmatpush1.msra.mxu0 %v689
    %691 = vmatprep.subr.mxu0 0.0
    %v692 = vand.u32 %v109, 4294901760
    %693 = vmatpush1.msra.mxu0 %v692
    %694 = vmatprep.subr.mxu0 0.0
    %v695 = vand.u32 %v108, 4294901760
    %696 = vmatpush1.msra.mxu0 %v695
    %697 = vmatprep.subr.mxu0 0.0
    %v698 = vand.u32 %v107, 4294901760
    %699 = vmatpush1.msra.mxu0 %v698
    %700 = vmatprep.subr.mxu0 0.0
    %v701 = vand.u32 %v106, 4294901760
    %702 = vmatpush1.msra.mxu0 %v701
    %703 = vmatprep.subr.mxu0 0.0
    %v704 = vand.u32 %v105, 4294901760
    %705 = vmatpush1.msra.mxu0 %v704
    %706 = vmatprep.subr.mxu0 0.0
    %v707 = vand.u32 %v104, 4294901760
    %708 = vmatpush1.msra.mxu0 %v707
    %709 = vmatprep.subr.mxu0 0.0
    %v710 = vand.u32 %v103, 4294901760
    %711 = vmatpush1.msra.mxu0 %v710
    %712 = vmatprep.subr.mxu0 0.0
    %v713 = vand.u32 %v102, 4294901760
    %714 = vmatpush1.msra.mxu0 %v713
    %715 = vmatprep.subr.mxu0 0.0
    %v716 = vand.u32 %v101, 4294901760
    %717 = vmatpush1.msra.mxu0 %v716
    %718 = vmatprep.subr.mxu0 0.0
    %v719 = vand.u32 %v100, 4294901760
    %720 = vmatpush1.msra.mxu0 %v719
    %721 = vmatprep.subr.mxu0 0.0
    %v722 = vand.u32 %v99, 4294901760
    %723 = vmatpush1.msra.mxu0 %v722
    %724 = vmatprep.subr.mxu0 0.0
    %725 = vmatpush2.msra.mxu0 0.0
    %726 = vmatprep.subr.mxu0 0.0
    %727 = vmatpush2.msra.mxu0 0.0
    %728 = vmatprep.subr.mxu0 0.0
    %729 = vmatpush2.msra.mxu0 0.0
    %730 = vmatprep.subr.mxu0 0.0
    %731 = vmatpush2.msra.mxu0 0.0
    %732 = vmatprep.subr.mxu0 0.0
    %733 = vmatpush2.msra.mxu0 0.0
    %734 = vmatprep.subr.mxu0 0.0
    %735 = vmatpush2.msra.mxu0 0.0
    %736 = vmatprep.subr.mxu0 0.0
    %737 = vmatpush2.msra.mxu0 0.0
    %738 = vmatprep.subr.mxu0 0.0
    %739 = vmatpush2.msra.mxu0 0.0
    %740 = vmatprep.subr.mxu0 0.0
    %741 = vmatpush2.msra.mxu0 0.0
    %742 = vmatprep.subr.mxu0 0.0
    %743 = vmatpush2.msra.mxu0 0.0
    %744 = vmatprep.subr.mxu0 0.0
    %745 = vmatpush2.msra.mxu0 0.0
    %746 = vmatprep.subr.mxu0 0.0
    %747 = vmatpush2.msra.mxu0 0.0
    %748 = vmatprep.subr.mxu0 0.0
    %749 = vmatpush2.msra.mxu0 0.0
    %750 = vmatprep.subr.mxu0 0.0
    %751 = vmatpush2.msra.mxu0 0.0
    %752 = vmatprep.subr.mxu0 0.0
    %753 = vmatpush2.msra.mxu0 0.0
    %754 = vmatprep.subr.mxu0 0.0
    %755 = vmatpush2.msra.mxu0 0.0
    %756 = vmatprep.mubr.f32.mxu0 0.0
    %v757 = vand.u32 %v98, 4294901760
    %758 = vmatmul.mubr.f32.gmra.mxu0 %v757
    %v759 = vpop.f32.mrf.mxu0
    %v760 = vadd.f32 %v673, %v759
    %v761 = vpop.f32.mrf.mxu0
    %762 = vdwg.mxu0
    %v763 = vxor.u32 %v760, 2147483648
    %v764 = vmul.f32 %v763, 1.442695
    %v765 = vpow.pop %v764
    %v766 = vadd.f32 %v765, 1.0
    %v767 = vrcp.pop %v766
    %v768 = vmul.f32 1.0, %v767
    %v769 = vmul.f32 %v98, %v768
    %v770 = vld [vmem:[#allocation6] sm:$0xff]
    %v771 = vld [vmem:[#allocation6 + $0x8] sm:$0xff]
    %v772 = vld [vmem:[#allocation6 + $0x10] sm:$0xff]
    %v773 = vld [vmem:[#allocation6 + $0x18] sm:$0xff]
    %v774 = vld [vmem:[#allocation6 + $0x20] sm:$0xff]
    %v775 = vld [vmem:[#allocation6 + $0x28] sm:$0xff]
    %v776 = vld [vmem:[#allocation6 + $0x30] sm:$0xff]
    %v777 = vld [vmem:[#allocation6 + $0x38] sm:$0xff]
    %v778 = vld [vmem:[#allocation6 + $0x40] sm:$0xff]
    %v779 = vld [vmem:[#allocation6 + $0x48] sm:$0xff]
    %v780 = vld [vmem:[#allocation6 + $0x50] sm:$0xff]
    %v781 = vld [vmem:[#allocation6 + $0x58] sm:$0xff]
    %v782 = vld [vmem:[#allocation6 + $0x60] sm:$0xff]
    %v783 = vld [vmem:[#allocation6 + $0x68] sm:$0xff]
    %v784 = vld [vmem:[#allocation6 + $0x70] sm:$0xff]
    %v785 = vld [vmem:[#allocation6 + $0x78] sm:$0xff]
    %786 = vmatprep.subr.mxu0 0.0
    %v787 = vand.u32 %v785, 4294901760
    %788 = vmatpush1.msra.mxu0 %v787
    %789 = vmatprep.subr.mxu0 0.0
    %v790 = vand.u32 %v784, 4294901760
    %791 = vmatpush1.msra.mxu0 %v790
    %792 = vmatprep.subr.mxu0 0.0
    %v793 = vand.u32 %v783, 4294901760
    %794 = vmatpush1.msra.mxu0 %v793
    %795 = vmatprep.subr.mxu0 0.0
    %v796 = vand.u32 %v782, 4294901760
    %797 = vmatpush1.msra.mxu0 %v796
    %798 = vmatprep.subr.mxu0 0.0
    %v799 = vand.u32 %v781, 4294901760
    %800 = vmatpush1.msra.mxu0 %v799
    %801 = vmatprep.subr.mxu0 0.0
    %v802 = vand.u32 %v780, 4294901760
    %803 = vmatpush1.msra.mxu0 %v802
    %804 = vmatprep.subr.mxu0 0.0
    %v805 = vand.u32 %v779, 4294901760
    %806 = vmatpush1.msra.mxu0 %v805
    %807 = vmatprep.subr.mxu0 0.0
    %v808 = vand.u32 %v778, 4294901760
    %809 = vmatpush1.msra.mxu0 %v808
    %810 = vmatprep.subr.mxu0 0.0
    %v811 = vand.u32 %v777, 4294901760
    %812 = vmatpush1.msra.mxu0 %v811
    %813 = vmatprep.subr.mxu0 0.0
    %v814 = vand.u32 %v776, 4294901760
    %815 = vmatpush1.msra.mxu0 %v814
    %816 = vmatprep.subr.mxu0 0.0
    %v817 = vand.u32 %v775, 4294901760
    %818 = vmatpush1.msra.mxu0 %v817
    %819 = vmatprep.subr.mxu0 0.0
    %v820 = vand.u32 %v774, 4294901760
    %821 = vmatpush1.msra.mxu0 %v820
    %822 = vmatprep.subr.mxu0 0.0
    %v823 = vand.u32 %v773, 4294901760
    %824 = vmatpush1.msra.mxu0 %v823
    %825 = vmatprep.subr.mxu0 0.0
    %v826 = vand.u32 %v772, 4294901760
    %827 = vmatpush1.msra.mxu0 %v826
    %828 = vmatprep.subr.mxu0 0.0
    %v829 = vand.u32 %v771, 4294901760
    %830 = vmatpush1.msra.mxu0 %v829
    %831 = vmatprep.subr.mxu0 0.0
    %v832 = vand.u32 %v770, 4294901760
    %833 = vmatpush1.msra.mxu0 %v832
    %834 = vmatprep.subr.mxu0 0.0
    %835 = vmatpush2.msra.mxu0 0.0
    %836 = vmatprep.subr.mxu0 0.0
    %837 = vmatpush2.msra.mxu0 0.0
    %838 = vmatprep.subr.mxu0 0.0
    %839 = vmatpush2.msra.mxu0 0.0
    %840 = vmatprep.subr.mxu0 0.0
    %841 = vmatpush2.msra.mxu0 0.0
    %842 = vmatprep.subr.mxu0 0.0
    %843 = vmatpush2.msra.mxu0 0.0
    %844 = vmatprep.subr.mxu0 0.0
    %845 = vmatpush2.msra.mxu0 0.0
    %846 = vmatprep.subr.mxu0 0.0
    %847 = vmatpush2.msra.mxu0 0.0
    %848 = vmatprep.subr.mxu0 0.0
    %849 = vmatpush2.msra.mxu0 0.0
    %850 = vmatprep.subr.mxu0 0.0
    %851 = vmatpush2.msra.mxu0 0.0
    %852 = vmatprep.subr.mxu0 0.0
    %853 = vmatpush2.msra.mxu0 0.0
    %854 = vmatprep.subr.mxu0 0.0
    %855 = vmatpush2.msra.mxu0 0.0
    %856 = vmatprep.subr.mxu0 0.0
    %857 = vmatpush2.msra.mxu0 0.0
    %858 = vmatprep.subr.mxu0 0.0
    %859 = vmatpush2.msra.mxu0 0.0
    %860 = vmatprep.subr.mxu0 0.0
    %861 = vmatpush2.msra.mxu0 0.0
    %862 = vmatprep.subr.mxu0 0.0
    %863 = vmatpush2.msra.mxu0 0.0
    %864 = vmatprep.subr.mxu0 0.0
    %865 = vmatpush2.msra.mxu0 0.0
    %866 = vmatprep.mubr.f32.mxu0 0.0
    %v867 = vand.u32 %v769, 4294901760
    %v868 = vsub.f32 %v769, %v867
    %v869 = vand.u32 %v868, 4294901760
    %v870 = vsub.f32 %v868, %v869
    %v871 = vand.u32 %v870, 4294901760
    %872 = vmatmul.mubr.f32.gmra.mxu0 %v871
    %v873 = vpop.f32.mrf.mxu0
    %v874 = vadd.f32 0.0, %v873
    %v875 = vpop.f32.mrf.mxu0
    %876 = vdwg.mxu0
    %877 = vmatprep.subr.mxu0 0.0
    %v878 = vand.u32 %v785, 4294901760
    %v879 = vsub.f32 %v785, %v878
    %v880 = vand.u32 %v879, 4294901760
    %v881 = vsub.f32 %v879, %v880
    %v882 = vand.u32 %v881, 4294901760
    %883 = vmatpush1.msra.mxu0 %v882
    %884 = vmatprep.subr.mxu0 0.0
    %v885 = vand.u32 %v784, 4294901760
    %v886 = vsub.f32 %v784, %v885
    %v887 = vand.u32 %v886, 4294901760
    %v888 = vsub.f32 %v886, %v887
    %v889 = vand.u32 %v888, 4294901760
    %890 = vmatpush1.msra.mxu0 %v889
    %891 = vmatprep.subr.mxu0 0.0
    %v892 = vand.u32 %v783, 4294901760
    %v893 = vsub.f32 %v783, %v892
    %v894 = vand.u32 %v893, 4294901760
    %v895 = vsub.f32 %v893, %v894
    %v896 = vand.u32 %v895, 4294901760
    %897 = vmatpush1.msra.mxu0 %v896
    %898 = vmatprep.subr.mxu0 0.0
    %v899 = vand.u32 %v782, 4294901760
    %v900 = vsub.f32 %v782, %v899
    %v901 = vand.u32 %v900, 4294901760
    %v902 = vsub.f32 %v900, %v901
    %v903 = vand.u32 %v902, 4294901760
    %904 = vmatpush1.msra.mxu0 %v903
    %905 = vmatprep.subr.mxu0 0.0
    %v906 = vand.u32 %v781, 4294901760
    %v907 = vsub.f32 %v781, %v906
    %v908 = vand.u32 %v907, 4294901760
    %v909 = vsub.f32 %v907, %v908
    %v910 = vand.u32 %v909, 4294901760
    %911 = vmatpush1.msra.mxu0 %v910
    %912 = vmatprep.subr.mxu0 0.0
    %v913 = vand.u32 %v780, 4294901760
    %v914 = vsub.f32 %v780, %v913
    %v915 = vand.u32 %v914, 4294901760
    %v916 = vsub.f32 %v914, %v915
    %v917 = vand.u32 %v916, 4294901760
    %918 = vmatpush1.msra.mxu0 %v917
    %919 = vmatprep.subr.mxu0 0.0
    %v920 = vand.u32 %v779, 4294901760
    %v921 = vsub.f32 %v779, %v920
    %v922 = vand.u32 %v921, 4294901760
    %v923 = vsub.f32 %v921, %v922
    %v924 = vand.u32 %v923, 4294901760
    %925 = vmatpush1.msra.mxu0 %v924
    %926 = vmatprep.subr.mxu0 0.0
    %v927 = vand.u32 %v778, 4294901760
    %v928 = vsub.f32 %v778, %v927
    %v929 = vand.u32 %v928, 4294901760
    %v930 = vsub.f32 %v928, %v929
    %v931 = vand.u32 %v930, 4294901760
    %932 = vmatpush1.msra.mxu0 %v931
    %933 = vmatprep.subr.mxu0 0.0
    %v934 = vand.u32 %v777, 4294901760
    %v935 = vsub.f32 %v777, %v934
    %v936 = vand.u32 %v935, 4294901760
    %v937 = vsub.f32 %v935, %v936
    %v938 = vand.u32 %v937, 4294901760
    %939 = vmatpush1.msra.mxu0 %v938
    %940 = vmatprep.subr.mxu0 0.0
    %v941 = vand.u32 %v776, 4294901760
    %v942 = vsub.f32 %v776, %v941
    %v943 = vand.u32 %v942, 4294901760
    %v944 = vsub.f32 %v942, %v943
    %v945 = vand.u32 %v944, 4294901760
    %946 = vmatpush1.msra.mxu0 %v945
    %947 = vmatprep.subr.mxu0 0.0
    %v948 = vand.u32 %v775, 4294901760
    %v949 = vsub.f32 %v775, %v948
    %v950 = vand.u32 %v949, 4294901760
    %v951 = vsub.f32 %v949, %v950
    %v952 = vand.u32 %v951, 4294901760
    %953 = vmatpush1.msra.mxu0 %v952
    %954 = vmatprep.subr.mxu0 0.0
    %v955 = vand.u32 %v774, 4294901760
    %v956 = vsub.f32 %v774, %v955
    %v957 = vand.u32 %v956, 4294901760
    %v958 = vsub.f32 %v956, %v957
    %v959 = vand.u32 %v958, 4294901760
    %960 = vmatpush1.msra.mxu0 %v959
    %961 = vmatprep.subr.mxu0 0.0
    %v962 = vand.u32 %v773, 4294901760
    %v963 = vsub.f32 %v773, %v962
    %v964 = vand.u32 %v963, 4294901760
    %v965 = vsub.f32 %v963, %v964
    %v966 = vand.u32 %v965, 4294901760
    %967 = vmatpush1.msra.mxu0 %v966
    %968 = vmatprep.subr.mxu0 0.0
    %v969 = vand.u32 %v772, 4294901760
    %v970 = vsub.f32 %v772, %v969
    %v971 = vand.u32 %v970, 4294901760
    %v972 = vsub.f32 %v970, %v971
    %v973 = vand.u32 %v972, 4294901760
    %974 = vmatpush1.msra.mxu0 %v973
    %975 = vmatprep.subr.mxu0 0.0
    %v976 = vand.u32 %v771, 4294901760
    %v977 = vsub.f32 %v771, %v976
    %v978 = vand.u32 %v977, 4294901760
    %v979 = vsub.f32 %v977, %v978
    %v980 = vand.u32 %v979, 4294901760
    %981 = vmatpush1.msra.mxu0 %v980
    %982 = vmatprep.subr.mxu0 0.0
    %v983 = vand.u32 %v770, 4294901760
    %v984 = vsub.f32 %v770, %v983
    %v985 = vand.u32 %v984, 4294901760
    %v986 = vsub.f32 %v984, %v985
    %v987 = vand.u32 %v986, 4294901760
    %988 = vmatpush1.msra.mxu0 %v987
    %989 = vmatprep.subr.mxu0 0.0
    %990 = vmatpush2.msra.mxu0 0.0
    %991 = vmatprep.subr.mxu0 0.0
    %992 = vmatpush2.msra.mxu0 0.0
    %993 = vmatprep.subr.mxu0 0.0
    %994 = vmatpush2.msra.mxu0 0.0
    %995 = vmatprep.subr.mxu0 0.0
    %996 = vmatpush2.msra.mxu0 0.0
    %997 = vmatprep.subr.mxu0 0.0
    %998 = vmatpush2.msra.mxu0 0.0
    %999 = vmatprep.subr.mxu0 0.0
    %1000 = vmatpush2.msra.mxu0 0.0
    %1001 = vmatprep.subr.mxu0 0.0
    %1002 = vmatpush2.msra.mxu0 0.0
    %1003 = vmatprep.subr.mxu0 0.0
    %1004 = vmatpush2.msra.mxu0 0.0
    %1005 = vmatprep.subr.mxu0 0.0
    %1006 = vmatpush2.msra.mxu0 0.0
    %1007 = vmatprep.subr.mxu0 0.0
    %1008 = vmatpush2.msra.mxu0 0.0
    %1009 = vmatprep.subr.mxu0 0.0
    %1010 = vmatpush2.msra.mxu0 0.0
    %1011 = vmatprep.subr.mxu0 0.0
    %1012 = vmatpush2.msra.mxu0 0.0
    %1013 = vmatprep.subr.mxu0 0.0
    %1014 = vmatpush2.msra.mxu0 0.0
    %1015 = vmatprep.subr.mxu0 0.0
    %1016 = vmatpush2.msra.mxu0 0.0
    %1017 = vmatprep.subr.mxu0 0.0
    %1018 = vmatpush2.msra.mxu0 0.0
    %1019 = vmatprep.subr.mxu0 0.0
    %1020 = vmatpush2.msra.mxu0 0.0
    %1021 = vmatprep.mubr.f32.mxu0 0.0
    %v1022 = vand.u32 %v769, 4294901760
    %1023 = vmatmul.mubr.f32.gmra.mxu0 %v1022
    %v1024 = vpop.f32.mrf.mxu0
    %v1025 = vadd.f32 %v874, %v1024
    %v1026 = vpop.f32.mrf.mxu0
    %1027 = vdwg.mxu0
    %1028 = vmatprep.subr.mxu0 0.0
    %v1029 = vand.u32 %v785, 4294901760
    %v1030 = vsub.f32 %v785, %v1029
    %1031 = vmatpush1.msra.mxu0 %v1030
    %1032 = vmatprep.subr.mxu0 0.0
    %v1033 = vand.u32 %v784, 4294901760
    %v1034 = vsub.f32 %v784, %v1033
    %1035 = vmatpush1.msra.mxu0 %v1034
    %1036 = vmatprep.subr.mxu0 0.0
    %v1037 = vand.u32 %v783, 4294901760
    %v1038 = vsub.f32 %v783, %v1037
    %1039 = vmatpush1.msra.mxu0 %v1038
    %1040 = vmatprep.subr.mxu0 0.0
    %v1041 = vand.u32 %v782, 4294901760
    %v1042 = vsub.f32 %v782, %v1041
    %1043 = vmatpush1.msra.mxu0 %v1042
    %1044 = vmatprep.subr.mxu0 0.0
    %v1045 = vand.u32 %v781, 4294901760
    %v1046 = vsub.f32 %v781, %v1045
    %1047 = vmatpush1.msra.mxu0 %v1046
    %1048 = vmatprep.subr.mxu0 0.0
    %v1049 = vand.u32 %v780, 4294901760
    %v1050 = vsub.f32 %v780, %v1049
    %1051 = vmatpush1.msra.mxu0 %v1050
    %1052 = vmatprep.subr.mxu0 0.0
    %v1053 = vand.u32 %v779, 4294901760
    %v1054 = vsub.f32 %v779, %v1053
    %1055 = vmatpush1.msra.mxu0 %v1054
    %1056 = vmatprep.subr.mxu0 0.0
    %v1057 = vand.u32 %v778, 4294901760
    %v1058 = vsub.f32 %v778, %v1057
    %1059 = vmatpush1.msra.mxu0 %v1058
    %1060 = vmatprep.subr.mxu0 0.0
    %v1061 = vand.u32 %v777, 4294901760
    %v1062 = vsub.f32 %v777, %v1061
    %1063 = vmatpush1.msra.mxu0 %v1062
    %1064 = vmatprep.subr.mxu0 0.0
    %v1065 = vand.u32 %v776, 4294901760
    %v1066 = vsub.f32 %v776, %v1065
    %1067 = vmatpush1.msra.mxu0 %v1066
    %1068 = vmatprep.subr.mxu0 0.0
    %v1069 = vand.u32 %v775, 4294901760
    %v1070 = vsub.f32 %v775, %v1069
    %1071 = vmatpush1.msra.mxu0 %v1070
    %1072 = vmatprep.subr.mxu0 0.0
    %v1073 = vand.u32 %v774, 4294901760
    %v1074 = vsub.f32 %v774, %v1073
    %1075 = vmatpush1.msra.mxu0 %v1074
    %1076 = vmatprep.subr.mxu0 0.0
    %v1077 = vand.u32 %v773, 4294901760
    %v1078 = vsub.f32 %v773, %v1077
    %1079 = vmatpush1.msra.mxu0 %v1078
    %1080 = vmatprep.subr.mxu0 0.0
    %v1081 = vand.u32 %v772, 4294901760
    %v1082 = vsub.f32 %v772, %v1081
    %1083 = vmatpush1.msra.mxu0 %v1082
    %1084 = vmatprep.subr.mxu0 0.0
    %v1085 = vand.u32 %v771, 4294901760
    %v1086 = vsub.f32 %v771, %v1085
    %1087 = vmatpush1.msra.mxu0 %v1086
    %1088 = vmatprep.subr.mxu0 0.0
    %v1089 = vand.u32 %v770, 4294901760
    %v1090 = vsub.f32 %v770, %v1089
    %1091 = vmatpush1.msra.mxu0 %v1090
    %1092 = vmatprep.subr.mxu0 0.0
    %1093 = vmatpush2.msra.mxu0 0.0
    %1094 = vmatprep.subr.mxu0 0.0
    %1095 = vmatpush2.msra.mxu0 0.0
    %1096 = vmatprep.subr.mxu0 0.0
    %1097 = vmatpush2.msra.mxu0 0.0
    %1098 = vmatprep.subr.mxu0 0.0
    %1099 = vmatpush2.msra.mxu0 0.0
    %1100 = vmatprep.subr.mxu0 0.0
    %1101 = vmatpush2.msra.mxu0 0.0
    %1102 = vmatprep.subr.mxu0 0.0
    %1103 = vmatpush2.msra.mxu0 0.0
    %1104 = vmatprep.subr.mxu0 0.0
    %1105 = vmatpush2.msra.mxu0 0.0
    %1106 = vmatprep.subr.mxu0 0.0
    %1107 = vmatpush2.msra.mxu0 0.0
    %1108 = vmatprep.subr.mxu0 0.0
    %1109 = vmatpush2.msra.mxu0 0.0
    %1110 = vmatprep.subr.mxu0 0.0
    %1111 = vmatpush2.msra.mxu0 0.0
    %1112 = vmatprep.subr.mxu0 0.0
    %1113 = vmatpush2.msra.mxu0 0.0
    %1114 = vmatprep.subr.mxu0 0.0
    %1115 = vmatpush2.msra.mxu0 0.0
    %1116 = vmatprep.subr.mxu0 0.0
    %1117 = vmatpush2.msra.mxu0 0.0
    %1118 = vmatprep.subr.mxu0 0.0
    %1119 = vmatpush2.msra.mxu0 0.0
    %1120 = vmatprep.subr.mxu0 0.0
    %1121 = vmatpush2.msra.mxu0 0.0
    %1122 = vmatprep.subr.mxu0 0.0
    %1123 = vmatpush2.msra.mxu0 0.0
    %1124 = vmatprep.mubr.f32.mxu0 0.0
    %v1125 = vand.u32 %v769, 4294901760
    %v1126 = vsub.f32 %v769, %v1125
    %1127 = vmatmul.mubr.f32.gmra.mxu0 %v1126
    %v1128 = vpop.f32.mrf.mxu0
    %v1129 = vadd.f32 %v1025, %v1128
    %v1130 = vpop.f32.mrf.mxu0
    %1131 = vdwg.mxu0
    %1132 = vmatprep.subr.mxu0 0.0
    %v1133 = vand.u32 %v785, 4294901760
    %1134 = vmatpush1.msra.mxu0 %v1133
    %1135 = vmatprep.subr.mxu0 0.0
    %v1136 = vand.u32 %v784, 4294901760
    %1137 = vmatpush1.msra.mxu0 %v1136
    %1138 = vmatprep.subr.mxu0 0.0
    %v1139 = vand.u32 %v783, 4294901760
    %1140 = vmatpush1.msra.mxu0 %v1139
    %1141 = vmatprep.subr.mxu0 0.0
    %v1142 = vand.u32 %v782, 4294901760
    %1143 = vmatpush1.msra.mxu0 %v1142
    %1144 = vmatprep.subr.mxu0 0.0
    %v1145 = vand.u32 %v781, 4294901760
    %1146 = vmatpush1.msra.mxu0 %v1145
    %1147 = vmatprep.subr.mxu0 0.0
    %v1148 = vand.u32 %v780, 4294901760
    %1149 = vmatpush1.msra.mxu0 %v1148
    %1150 = vmatprep.subr.mxu0 0.0
    %v1151 = vand.u32 %v779, 4294901760
    %1152 = vmatpush1.msra.mxu0 %v1151
    %1153 = vmatprep.subr.mxu0 0.0
    %v1154 = vand.u32 %v778, 4294901760
    %1155 = vmatpush1.msra.mxu0 %v1154
    %1156 = vmatprep.subr.mxu0 0.0
    %v1157 = vand.u32 %v777, 4294901760
    %1158 = vmatpush1.msra.mxu0 %v1157
    %1159 = vmatprep.subr.mxu0 0.0
    %v1160 = vand.u32 %v776, 4294901760
    %1161 = vmatpush1.msra.mxu0 %v1160
    %1162 = vmatprep.subr.mxu0 0.0
    %v1163 = vand.u32 %v775, 4294901760
    %1164 = vmatpush1.msra.mxu0 %v1163
    %1165 = vmatprep.subr.mxu0 0.0
    %v1166 = vand.u32 %v774, 4294901760
    %1167 = vmatpush1.msra.mxu0 %v1166
    %1168 = vmatprep.subr.mxu0 0.0
    %v1169 = vand.u32 %v773, 4294901760
    %1170 = vmatpush1.msra.mxu0 %v1169
    %1171 = vmatprep.subr.mxu0 0.0
    %v1172 = vand.u32 %v772, 4294901760
    %1173 = vmatpush1.msra.mxu0 %v1172
    %1174 = vmatprep.subr.mxu0 0.0
    %v1175 = vand.u32 %v771, 4294901760
    %1176 = vmatpush1.msra.mxu0 %v1175
    %1177 = vmatprep.subr.mxu0 0.0
    %v1178 = vand.u32 %v770, 4294901760
    %1179 = vmatpush1.msra.mxu0 %v1178
    %1180 = vmatprep.subr.mxu0 0.0
    %1181 = vmatpush2.msra.mxu0 0.0
    %1182 = vmatprep.subr.mxu0 0.0
    %1183 = vmatpush2.msra.mxu0 0.0
    %1184 = vmatprep.subr.mxu0 0.0
    %1185 = vmatpush2.msra.mxu0 0.0
    %1186 = vmatprep.subr.mxu0 0.0
    %1187 = vmatpush2.msra.mxu0 0.0
    %1188 = vmatprep.subr.mxu0 0.0
    %1189 = vmatpush2.msra.mxu0 0.0
    %1190 = vmatprep.subr.mxu0 0.0
    %1191 = vmatpush2.msra.mxu0 0.0
    %1192 = vmatprep.subr.mxu0 0.0
    %1193 = vmatpush2.msra.mxu0 0.0
    %1194 = vmatprep.subr.mxu0 0.0
    %1195 = vmatpush2.msra.mxu0 0.0
    %1196 = vmatprep.subr.mxu0 0.0
    %1197 = vmatpush2.msra.mxu0 0.0
    %1198 = vmatprep.subr.mxu0 0.0
    %1199 = vmatpush2.msra.mxu0 0.0
    %1200 = vmatprep.subr.mxu0 0.0
    %1201 = vmatpush2.msra.mxu0 0.0
    %1202 = vmatprep.subr.mxu0 0.0
    %1203 = vmatpush2.msra.mxu0 0.0
    %1204 = vmatprep.subr.mxu0 0.0
    %1205 = vmatpush2.msra.mxu0 0.0
    %1206 = vmatprep.subr.mxu0 0.0
    %1207 = vmatpush2.msra.mxu0 0.0
    %1208 = vmatprep.subr.mxu0 0.0
    %1209 = vmatpush2.msra.mxu0 0.0
    %1210 = vmatprep.subr.mxu0 0.0
    %1211 = vmatpush2.msra.mxu0 0.0
    %1212 = vmatprep.mubr.f32.mxu0 0.0
    %v1213 = vand.u32 %v769, 4294901760
    %v1214 = vsub.f32 %v769, %v1213
    %v1215 = vand.u32 %v1214, 4294901760
    %1216 = vmatmul.mubr.f32.gmra.mxu0 %v1215
    %v1217 = vpop.f32.mrf.mxu0
    %v1218 = vadd.f32 %v1129, %v1217
    %v1219 = vpop.f32.mrf.mxu0
    %1220 = vdwg.mxu0
    %1221 = vmatprep.subr.mxu0 0.0
    %v1222 = vand.u32 %v785, 4294901760
    %v1223 = vsub.f32 %v785, %v1222
    %v1224 = vand.u32 %v1223, 4294901760
    %1225 = vmatpush1.msra.mxu0 %v1224
    %1226 = vmatprep.subr.mxu0 0.0
    %v1227 = vand.u32 %v784, 4294901760
    %v1228 = vsub.f32 %v784, %v1227
    %v1229 = vand.u32 %v1228, 4294901760
    %1230 = vmatpush1.msra.mxu0 %v1229
    %1231 = vmatprep.subr.mxu0 0.0
    %v1232 = vand.u32 %v783, 4294901760
    %v1233 = vsub.f32 %v783, %v1232
    %v1234 = vand.u32 %v1233, 4294901760
    %1235 = vmatpush1.msra.mxu0 %v1234
    %1236 = vmatprep.subr.mxu0 0.0
    %v1237 = vand.u32 %v782, 4294901760
    %v1238 = vsub.f32 %v782, %v1237
    %v1239 = vand.u32 %v1238, 4294901760
    %1240 = vmatpush1.msra.mxu0 %v1239
    %1241 = vmatprep.subr.mxu0 0.0
    %v1242 = vand.u32 %v781, 4294901760
    %v1243 = vsub.f32 %v781, %v1242
    %v1244 = vand.u32 %v1243, 4294901760
    %1245 = vmatpush1.msra.mxu0 %v1244
    %1246 = vmatprep.subr.mxu0 0.0
    %v1247 = vand.u32 %v780, 4294901760
    %v1248 = vsub.f32 %v780, %v1247
    %v1249 = vand.u32 %v1248, 4294901760
    %1250 = vmatpush1.msra.mxu0 %v1249
    %1251 = vmatprep.subr.mxu0 0.0
    %v1252 = vand.u32 %v779, 4294901760
    %v1253 = vsub.f32 %v779, %v1252
    %v1254 = vand.u32 %v1253, 4294901760
    %1255 = vmatpush1.msra.mxu0 %v1254
    %1256 = vmatprep.subr.mxu0 0.0
    %v1257 = vand.u32 %v778, 4294901760
    %v1258 = vsub.f32 %v778, %v1257
    %v1259 = vand.u32 %v1258, 4294901760
    %1260 = vmatpush1.msra.mxu0 %v1259
    %1261 = vmatprep.subr.mxu0 0.0
    %v1262 = vand.u32 %v777, 4294901760
    %v1263 = vsub.f32 %v777, %v1262
    %v1264 = vand.u32 %v1263, 4294901760
    %1265 = vmatpush1.msra.mxu0 %v1264
    %1266 = vmatprep.subr.mxu0 0.0
    %v1267 = vand.u32 %v776, 4294901760
    %v1268 = vsub.f32 %v776, %v1267
    %v1269 = vand.u32 %v1268, 4294901760
    %1270 = vmatpush1.msra.mxu0 %v1269
    %1271 = vmatprep.subr.mxu0 0.0
    %v1272 = vand.u32 %v775, 4294901760
    %v1273 = vsub.f32 %v775, %v1272
    %v1274 = vand.u32 %v1273, 4294901760
    %1275 = vmatpush1.msra.mxu0 %v1274
    %1276 = vmatprep.subr.mxu0 0.0
    %v1277 = vand.u32 %v774, 4294901760
    %v1278 = vsub.f32 %v774, %v1277
    %v1279 = vand.u32 %v1278, 4294901760
    %1280 = vmatpush1.msra.mxu0 %v1279
    %1281 = vmatprep.subr.mxu0 0.0
    %v1282 = vand.u32 %v773, 4294901760
    %v1283 = vsub.f32 %v773, %v1282
    %v1284 = vand.u32 %v1283, 4294901760
    %1285 = vmatpush1.msra.mxu0 %v1284
    %1286 = vmatprep.subr.mxu0 0.0
    %v1287 = vand.u32 %v772, 4294901760
    %v1288 = vsub.f32 %v772, %v1287
    %v1289 = vand.u32 %v1288, 4294901760
    %1290 = vmatpush1.msra.mxu0 %v1289
    %1291 = vmatprep.subr.mxu0 0.0
    %v1292 = vand.u32 %v771, 4294901760
    %v1293 = vsub.f32 %v771, %v1292
    %v1294 = vand.u32 %v1293, 4294901760
    %1295 = vmatpush1.msra.mxu0 %v1294
    %1296 = vmatprep.subr.mxu0 0.0
    %v1297 = vand.u32 %v770, 4294901760
    %v1298 = vsub.f32 %v770, %v1297
    %v1299 = vand.u32 %v1298, 4294901760
    %1300 = vmatpush1.msra.mxu0 %v1299
    %1301 = vmatprep.subr.mxu0 0.0
    %1302 = vmatpush2.msra.mxu0 0.0
    %1303 = vmatprep.subr.mxu0 0.0
    %1304 = vmatpush2.msra.mxu0 0.0
    %1305 = vmatprep.subr.mxu0 0.0
    %1306 = vmatpush2.msra.mxu0 0.0
    %1307 = vmatprep.subr.mxu0 0.0
    %1308 = vmatpush2.msra.mxu0 0.0
    %1309 = vmatprep.subr.mxu0 0.0
    %1310 = vmatpush2.msra.mxu0 0.0
    %1311 = vmatprep.subr.mxu0 0.0
    %1312 = vmatpush2.msra.mxu0 0.0
    %1313 = vmatprep.subr.mxu0 0.0
    %1314 = vmatpush2.msra.mxu0 0.0
    %1315 = vmatprep.subr.mxu0 0.0
    %1316 = vmatpush2.msra.mxu0 0.0
    %1317 = vmatprep.subr.mxu0 0.0
    %1318 = vmatpush2.msra.mxu0 0.0
    %1319 = vmatprep.subr.mxu0 0.0
    %1320 = vmatpush2.msra.mxu0 0.0
    %1321 = vmatprep.subr.mxu0 0.0
    %1322 = vmatpush2.msra.mxu0 0.0
    %1323 = vmatprep.subr.mxu0 0.0
    %1324 = vmatpush2.msra.mxu0 0.0
    %1325 = vmatprep.subr.mxu0 0.0
    %1326 = vmatpush2.msra.mxu0 0.0
    %1327 = vmatprep.subr.mxu0 0.0
    %1328 = vmatpush2.msra.mxu0 0.0
    %1329 = vmatprep.subr.mxu0 0.0
    %1330 = vmatpush2.msra.mxu0 0.0
    %1331 = vmatprep.subr.mxu0 0.0
    %1332 = vmatpush2.msra.mxu0 0.0
    %1333 = vmatprep.mubr.f32.mxu0 0.0
    %v1334 = vand.u32 %v769, 4294901760
    %1335 = vmatmul.mubr.f32.gmra.mxu0 %v1334
    %v1336 = vpop.f32.mrf.mxu0
    %v1337 = vadd.f32 %v1218, %v1336
    %v1338 = vpop.f32.mrf.mxu0
    %1339 = vdwg.mxu0
    %1340 = vmatprep.subr.mxu0 0.0
    %v1341 = vand.u32 %v785, 4294901760
    %1342 = vmatpush1.msra.mxu0 %v1341
    %1343 = vmatprep.subr.mxu0 0.0
    %v1344 = vand.u32 %v784, 4294901760
    %1345 = vmatpush1.msra.mxu0 %v1344
    %1346 = vmatprep.subr.mxu0 0.0
    %v1347 = vand.u32 %v783, 4294901760
    %1348 = vmatpush1.msra.mxu0 %v1347
    %1349 = vmatprep.subr.mxu0 0.0
    %v1350 = vand.u32 %v782, 4294901760
    %1351 = vmatpush1.msra.mxu0 %v1350
    %1352 = vmatprep.subr.mxu0 0.0
    %v1353 = vand.u32 %v781, 4294901760
    %1354 = vmatpush1.msra.mxu0 %v1353
    %1355 = vmatprep.subr.mxu0 0.0
    %v1356 = vand.u32 %v780, 4294901760
    %1357 = vmatpush1.msra.mxu0 %v1356
    %1358 = vmatprep.subr.mxu0 0.0
    %v1359 = vand.u32 %v779, 4294901760
    %1360 = vmatpush1.msra.mxu0 %v1359
    %1361 = vmatprep.subr.mxu0 0.0
    %v1362 = vand.u32 %v778, 4294901760
    %1363 = vmatpush1.msra.mxu0 %v1362
    %1364 = vmatprep.subr.mxu0 0.0
    %v1365 = vand.u32 %v777, 4294901760
    %1366 = vmatpush1.msra.mxu0 %v1365
    %1367 = vmatprep.subr.mxu0 0.0
    %v1368 = vand.u32 %v776, 4294901760
    %1369 = vmatpush1.msra.mxu0 %v1368
    %1370 = vmatprep.subr.mxu0 0.0
    %v1371 = vand.u32 %v775, 4294901760
    %1372 = vmatpush1.msra.mxu0 %v1371
    %1373 = vmatprep.subr.mxu0 0.0
    %v1374 = vand.u32 %v774, 4294901760
    %1375 = vmatpush1.msra.mxu0 %v1374
    %1376 = vmatprep.subr.mxu0 0.0
    %v1377 = vand.u32 %v773, 4294901760
    %1378 = vmatpush1.msra.mxu0 %v1377
    %1379 = vmatprep.subr.mxu0 0.0
    %v1380 = vand.u32 %v772, 4294901760
    %1381 = vmatpush1.msra.mxu0 %v1380
    %1382 = vmatprep.subr.mxu0 0.0
    %v1383 = vand.u32 %v771, 4294901760
    %1384 = vmatpush1.msra.mxu0 %v1383
    %1385 = vmatprep.subr.mxu0 0.0
    %v1386 = vand.u32 %v770, 4294901760
    %1387 = vmatpush1.msra.mxu0 %v1386
    %1388 = vmatprep.subr.mxu0 0.0
    %1389 = vmatpush2.msra.mxu0 0.0
    %1390 = vmatprep.subr.mxu0 0.0
    %1391 = vmatpush2.msra.mxu0 0.0
    %1392 = vmatprep.subr.mxu0 0.0
    %1393 = vmatpush2.msra.mxu0 0.0
    %1394 = vmatprep.subr.mxu0 0.0
    %1395 = vmatpush2.msra.mxu0 0.0
    %1396 = vmatprep.subr.mxu0 0.0
    %1397 = vmatpush2.msra.mxu0 0.0
    %1398 = vmatprep.subr.mxu0 0.0
    %1399 = vmatpush2.msra.mxu0 0.0
    %1400 = vmatprep.subr.mxu0 0.0
    %1401 = vmatpush2.msra.mxu0 0.0
    %1402 = vmatprep.subr.mxu0 0.0
    %1403 = vmatpush2.msra.mxu0 0.0
    %1404 = vmatprep.subr.mxu0 0.0
    %1405 = vmatpush2.msra.mxu0 0.0
    %1406 = vmatprep.subr.mxu0 0.0
    %1407 = vmatpush2.msra.mxu0 0.0
    %1408 = vmatprep.subr.mxu0 0.0
    %1409 = vmatpush2.msra.mxu0 0.0
    %1410 = vmatprep.subr.mxu0 0.0
    %1411 = vmatpush2.msra.mxu0 0.0
    %1412 = vmatprep.subr.mxu0 0.0
    %1413 = vmatpush2.msra.mxu0 0.0
    %1414 = vmatprep.subr.mxu0 0.0
    %1415 = vmatpush2.msra.mxu0 0.0
    %1416 = vmatprep.subr.mxu0 0.0
    %1417 = vmatpush2.msra.mxu0 0.0
    %1418 = vmatprep.subr.mxu0 0.0
    %1419 = vmatpush2.msra.mxu0 0.0
    %1420 = vmatprep.mubr.f32.mxu0 0.0
    %v1421 = vand.u32 %v769, 4294901760
    %1422 = vmatmul.mubr.f32.gmra.mxu0 %v1421
    %v1423 = vpop.f32.mrf.mxu0
    %v1424 = vadd.f32 %v1337, %v1423
    %v1425 = vpop.f32.mrf.mxu0
    %1426 = vdwg.mxu0
    %v1427 = vmul.f32 %v769, %v769
    %1428 = vmatprep.subr.mxu0 0.0
    %v1429 = vand.u32 %v785, 4294901760
    %1430 = vmatpush1.msra.mxu0 %v1429
    %1431 = vmatprep.subr.mxu0 0.0
    %v1432 = vand.u32 %v784, 4294901760
    %1433 = vmatpush1.msra.mxu0 %v1432
    %1434 = vmatprep.subr.mxu0 0.0
    %v1435 = vand.u32 %v783, 4294901760
    %1436 = vmatpush1.msra.mxu0 %v1435
    %1437 = vmatprep.subr.mxu0 0.0
    %v1438 = vand.u32 %v782, 4294901760
    %1439 = vmatpush1.msra.mxu0 %v1438
    %1440 = vmatprep.subr.mxu0 0.0
    %v1441 = vand.u32 %v781, 4294901760
    %1442 = vmatpush1.msra.mxu0 %v1441
    %1443 = vmatprep.subr.mxu0 0.0
    %v1444 = vand.u32 %v780, 4294901760
    %1445 = vmatpush1.msra.mxu0 %v1444
    %1446 = vmatprep.subr.mxu0 0.0
    %v1447 = vand.u32 %v779, 4294901760
    %1448 = vmatpush1.msra.mxu0 %v1447
    %1449 = vmatprep.subr.mxu0 0.0
    %v1450 = vand.u32 %v778, 4294901760
    %1451 = vmatpush1.msra.mxu0 %v1450
    %1452 = vmatprep.subr.mxu0 0.0
    %v1453 = vand.u32 %v777, 4294901760
    %1454 = vmatpush1.msra.mxu0 %v1453
    %1455 = vmatprep.subr.mxu0 0.0
    %v1456 = vand.u32 %v776, 4294901760
    %1457 = vmatpush1.msra.mxu0 %v1456
    %1458 = vmatprep.subr.mxu0 0.0
    %v1459 = vand.u32 %v775, 4294901760
    %1460 = vmatpush1.msra.mxu0 %v1459
    %1461 = vmatprep.subr.mxu0 0.0
    %v1462 = vand.u32 %v774, 4294901760
    %1463 = vmatpush1.msra.mxu0 %v1462
    %1464 = vmatprep.subr.mxu0 0.0
    %v1465 = vand.u32 %v773, 4294901760
    %1466 = vmatpush1.msra.mxu0 %v1465
    %1467 = vmatprep.subr.mxu0 0.0
    %v1468 = vand.u32 %v772, 4294901760
    %1469 = vmatpush1.msra.mxu0 %v1468
    %1470 = vmatprep.subr.mxu0 0.0
    %v1471 = vand.u32 %v771, 4294901760
    %1472 = vmatpush1.msra.mxu0 %v1471
    %1473 = vmatprep.subr.mxu0 0.0
    %v1474 = vand.u32 %v770, 4294901760
    %1475 = vmatpush1.msra.mxu0 %v1474
    %1476 = vmatprep.subr.mxu0 0.0
    %1477 = vmatpush2.msra.mxu0 0.0
    %1478 = vmatprep.subr.mxu0 0.0
    %1479 = vmatpush2.msra.mxu0 0.0
    %1480 = vmatprep.subr.mxu0 0.0
    %1481 = vmatpush2.msra.mxu0 0.0
    %1482 = vmatprep.subr.mxu0 0.0
    %1483 = vmatpush2.msra.mxu0 0.0
    %1484 = vmatprep.subr.mxu0 0.0
    %1485 = vmatpush2.msra.mxu0 0.0
    %1486 = vmatprep.subr.mxu0 0.0
    %1487 = vmatpush2.msra.mxu0 0.0
    %1488 = vmatprep.subr.mxu0 0.0
    %1489 = vmatpush2.msra.mxu0 0.0
    %1490 = vmatprep.subr.mxu0 0.0
    %1491 = vmatpush2.msra.mxu0 0.0
    %1492 = vmatprep.subr.mxu0 0.0
    %1493 = vmatpush2.msra.mxu0 0.0
    %1494 = vmatprep.subr.mxu0 0.0
    %1495 = vmatpush2.msra.mxu0 0.0
    %1496 = vmatprep.subr.mxu0 0.0
    %1497 = vmatpush2.msra.mxu0 0.0
    %1498 = vmatprep.subr.mxu0 0.0
    %1499 = vmatpush2.msra.mxu0 0.0
    %1500 = vmatprep.subr.mxu0 0.0
    %1501 = vmatpush2.msra.mxu0 0.0
    %1502 = vmatprep.subr.mxu0 0.0
    %1503 = vmatpush2.msra.mxu0 0.0
    %1504 = vmatprep.subr.mxu0 0.0
    %1505 = vmatpush2.msra.mxu0 0.0
    %1506 = vmatprep.subr.mxu0 0.0
    %1507 = vmatpush2.msra.mxu0 0.0
    %1508 = vmatprep.mubr.f32.mxu0 0.0
    %v1509 = vand.u32 %v1427, 4294901760
    %v1510 = vsub.f32 %v1427, %v1509
    %v1511 = vand.u32 %v1510, 4294901760
    %v1512 = vsub.f32 %v1510, %v1511
    %v1513 = vand.u32 %v1512, 4294901760
    %1514 = vmatmul.mubr.f32.gmra.mxu0 %v1513
    %v1515 = vpop.f32.mrf.mxu0
    %v1516 = vadd.f32 0.0, %v1515
    %v1517 = vpop.f32.mrf.mxu0
    %1518 = vdwg.mxu0
    %1519 = vmatprep.subr.mxu0 0.0
    %v1520 = vand.u32 %v785, 4294901760
    %v1521 = vsub.f32 %v785, %v1520
    %v1522 = vand.u32 %v1521, 4294901760
    %v1523 = vsub.f32 %v1521, %v1522
    %v1524 = vand.u32 %v1523, 4294901760
    %1525 = vmatpush1.msra.mxu0 %v1524
    %1526 = vmatprep.subr.mxu0 0.0
    %v1527 = vand.u32 %v784, 4294901760
    %v1528 = vsub.f32 %v784, %v1527
    %v1529 = vand.u32 %v1528, 4294901760
    %v1530 = vsub.f32 %v1528, %v1529
    %v1531 = vand.u32 %v1530, 4294901760
    %1532 = vmatpush1.msra.mxu0 %v1531
    %1533 = vmatprep.subr.mxu0 0.0
    %v1534 = vand.u32 %v783, 4294901760
    %v1535 = vsub.f32 %v783, %v1534
    %v1536 = vand.u32 %v1535, 4294901760
    %v1537 = vsub.f32 %v1535, %v1536
    %v1538 = vand.u32 %v1537, 4294901760
    %1539 = vmatpush1.msra.mxu0 %v1538
    %1540 = vmatprep.subr.mxu0 0.0
    %v1541 = vand.u32 %v782, 4294901760
    %v1542 = vsub.f32 %v782, %v1541
    %v1543 = vand.u32 %v1542, 4294901760
    %v1544 = vsub.f32 %v1542, %v1543
    %v1545 = vand.u32 %v1544, 4294901760
    %1546 = vmatpush1.msra.mxu0 %v1545
    %1547 = vmatprep.subr.mxu0 0.0
    %v1548 = vand.u32 %v781, 4294901760
    %v1549 = vsub.f32 %v781, %v1548
    %v1550 = vand.u32 %v1549, 4294901760
    %v1551 = vsub.f32 %v1549, %v1550
    %v1552 = vand.u32 %v1551, 4294901760
    %1553 = vmatpush1.msra.mxu0 %v1552
    %1554 = vmatprep.subr.mxu0 0.0
    %v1555 = vand.u32 %v780, 4294901760
    %v1556 = vsub.f32 %v780, %v1555
    %v1557 = vand.u32 %v1556, 4294901760
    %v1558 = vsub.f32 %v1556, %v1557
    %v1559 = vand.u32 %v1558, 4294901760
    %1560 = vmatpush1.msra.mxu0 %v1559
    %1561 = vmatprep.subr.mxu0 0.0
    %v1562 = vand.u32 %v779, 4294901760
    %v1563 = vsub.f32 %v779, %v1562
    %v1564 = vand.u32 %v1563, 4294901760
    %v1565 = vsub.f32 %v1563, %v1564
    %v1566 = vand.u32 %v1565, 4294901760
    %1567 = vmatpush1.msra.mxu0 %v1566
    %1568 = vmatprep.subr.mxu0 0.0
    %v1569 = vand.u32 %v778, 4294901760
    %v1570 = vsub.f32 %v778, %v1569
    %v1571 = vand.u32 %v1570, 4294901760
    %v1572 = vsub.f32 %v1570, %v1571
    %v1573 = vand.u32 %v1572, 4294901760
    %1574 = vmatpush1.msra.mxu0 %v1573
    %1575 = vmatprep.subr.mxu0 0.0
    %v1576 = vand.u32 %v777, 4294901760
    %v1577 = vsub.f32 %v777, %v1576
    %v1578 = vand.u32 %v1577, 4294901760
    %v1579 = vsub.f32 %v1577, %v1578
    %v1580 = vand.u32 %v1579, 4294901760
    %1581 = vmatpush1.msra.mxu0 %v1580
    %1582 = vmatprep.subr.mxu0 0.0
    %v1583 = vand.u32 %v776, 4294901760
    %v1584 = vsub.f32 %v776, %v1583
    %v1585 = vand.u32 %v1584, 4294901760
    %v1586 = vsub.f32 %v1584, %v1585
    %v1587 = vand.u32 %v1586, 4294901760
    %1588 = vmatpush1.msra.mxu0 %v1587
    %1589 = vmatprep.subr.mxu0 0.0
    %v1590 = vand.u32 %v775, 4294901760
    %v1591 = vsub.f32 %v775, %v1590
    %v1592 = vand.u32 %v1591, 4294901760
    %v1593 = vsub.f32 %v1591, %v1592
    %v1594 = vand.u32 %v1593, 4294901760
    %1595 = vmatpush1.msra.mxu0 %v1594
    %1596 = vmatprep.subr.mxu0 0.0
    %v1597 = vand.u32 %v774, 4294901760
    %v1598 = vsub.f32 %v774, %v1597
    %v1599 = vand.u32 %v1598, 4294901760
    %v1600 = vsub.f32 %v1598, %v1599
    %v1601 = vand.u32 %v1600, 4294901760
    %1602 = vmatpush1.msra.mxu0 %v1601
    %1603 = vmatprep.subr.mxu0 0.0
    %v1604 = vand.u32 %v773, 4294901760
    %v1605 = vsub.f32 %v773, %v1604
    %v1606 = vand.u32 %v1605, 4294901760
    %v1607 = vsub.f32 %v1605, %v1606
    %v1608 = vand.u32 %v1607, 4294901760
    %1609 = vmatpush1.msra.mxu0 %v1608
    %1610 = vmatprep.subr.mxu0 0.0
    %v1611 = vand.u32 %v772, 4294901760
    %v1612 = vsub.f32 %v772, %v1611
    %v1613 = vand.u32 %v1612, 4294901760
    %v1614 = vsub.f32 %v1612, %v1613
    %v1615 = vand.u32 %v1614, 4294901760
    %1616 = vmatpush1.msra.mxu0 %v1615
    %1617 = vmatprep.subr.mxu0 0.0
    %v1618 = vand.u32 %v771, 4294901760
    %v1619 = vsub.f32 %v771, %v1618
    %v1620 = vand.u32 %v1619, 4294901760
    %v1621 = vsub.f32 %v1619, %v1620
    %v1622 = vand.u32 %v1621, 4294901760
    %1623 = vmatpush1.msra.mxu0 %v1622
    %1624 = vmatprep.subr.mxu0 0.0
    %v1625 = vand.u32 %v770, 4294901760
    %v1626 = vsub.f32 %v770, %v1625
    %v1627 = vand.u32 %v1626, 4294901760
    %v1628 = vsub.f32 %v1626, %v1627
    %v1629 = vand.u32 %v1628, 4294901760
    %1630 = vmatpush1.msra.mxu0 %v1629
    %1631 = vmatprep.subr.mxu0 0.0
    %1632 = vmatpush2.msra.mxu0 0.0
    %1633 = vmatprep.subr.mxu0 0.0
    %1634 = vmatpush2.msra.mxu0 0.0
    %1635 = vmatprep.subr.mxu0 0.0
    %1636 = vmatpush2.msra.mxu0 0.0
    %1637 = vmatprep.subr.mxu0 0.0
    %1638 = vmatpush2.msra.mxu0 0.0
    %1639 = vmatprep.subr.mxu0 0.0
    %1640 = vmatpush2.msra.mxu0 0.0
    %1641 = vmatprep.subr.mxu0 0.0
    %1642 = vmatpush2.msra.mxu0 0.0
    %1643 = vmatprep.subr.mxu0 0.0
    %1644 = vmatpush2.msra.mxu0 0.0
    %1645 = vmatprep.subr.mxu0 0.0
    %1646 = vmatpush2.msra.mxu0 0.0
    %1647 = vmatprep.subr.mxu0 0.0
    %1648 = vmatpush2.msra.mxu0 0.0
    %1649 = vmatprep.subr.mxu0 0.0
    %1650 = vmatpush2.msra.mxu0 0.0
    %1651 = vmatprep.subr.mxu0 0.0
    %1652 = vmatpush2.msra.mxu0 0.0
    %1653 = vmatprep.subr.mxu0 0.0
    %1654 = vmatpush2.msra.mxu0 0.0
    %1655 = vmatprep.subr.mxu0 0.0
    %1656 = vmatpush2.msra.mxu0 0.0
    %1657 = vmatprep.subr.mxu0 0.0
    %1658 = vmatpush2.msra.mxu0 0.0
    %1659 = vmatprep.subr.mxu0 0.0
    %1660 = vmatpush2.msra.mxu0 0.0
    %1661 = vmatprep.subr.mxu0 0.0
    %1662 = vmatpush2.msra.mxu0 0.0
    %1663 = vmatprep.mubr.f32.mxu0 0.0
    %v1664 = vand.u32 %v1427, 4294901760
    %1665 = vmatmul.mubr.f32.gmra.mxu0 %v1664
    %v1666 = vpop.f32.mrf.mxu0
    %v1667 = vadd.f32 %v1516, %v1666
    %v1668 = vpop.f32.mrf.mxu0
    %1669 = vdwg.mxu0
    %1670 = vmatprep.subr.mxu0 0.0
    %v1671 = vand.u32 %v785, 4294901760
    %v1672 = vsub.f32 %v785, %v1671
    %1673 = vmatpush1.msra.mxu0 %v1672
    %1674 = vmatprep.subr.mxu0 0.0
    %v1675 = vand.u32 %v784, 4294901760
    %v1676 = vsub.f32 %v784, %v1675
    %1677 = vmatpush1.msra.mxu0 %v1676
    %1678 = vmatprep.subr.mxu0 0.0
    %v1679 = vand.u32 %v783, 4294901760
    %v1680 = vsub.f32 %v783, %v1679
    %1681 = vmatpush1.msra.mxu0 %v1680
    %1682 = vmatprep.subr.mxu0 0.0
    %v1683 = vand.u32 %v782, 4294901760
    %v1684 = vsub.f32 %v782, %v1683
    %1685 = vmatpush1.msra.mxu0 %v1684
    %1686 = vmatprep.subr.mxu0 0.0
    %v1687 = vand.u32 %v781, 4294901760
    %v1688 = vsub.f32 %v781, %v1687
    %1689 = vmatpush1.msra.mxu0 %v1688
    %1690 = vmatprep.subr.mxu0 0.0
    %v1691 = vand.u32 %v780, 4294901760
    %v1692 = vsub.f32 %v780, %v1691
    %1693 = vmatpush1.msra.mxu0 %v1692
    %1694 = vmatprep.subr.mxu0 0.0
    %v1695 = vand.u32 %v779, 4294901760
    %v1696 = vsub.f32 %v779, %v1695
    %1697 = vmatpush1.msra.mxu0 %v1696
    %1698 = vmatprep.subr.mxu0 0.0
    %v1699 = vand.u32 %v778, 4294901760
    %v1700 = vsub.f32 %v778, %v1699
    %1701 = vmatpush1.msra.mxu0 %v1700
    %1702 = vmatprep.subr.mxu0 0.0
    %v1703 = vand.u32 %v777, 4294901760
    %v1704 = vsub.f32 %v777, %v1703
    %1705 = vmatpush1.msra.mxu0 %v1704
    %1706 = vmatprep.subr.mxu0 0.0
    %v1707 = vand.u32 %v776, 4294901760
    %v1708 = vsub.f32 %v776, %v1707
    %1709 = vmatpush1.msra.mxu0 %v1708
    %1710 = vmatprep.subr.mxu0 0.0
    %v1711 = vand.u32 %v775, 4294901760
    %v1712 = vsub.f32 %v775, %v1711
    %1713 = vmatpush1.msra.mxu0 %v1712
    %1714 = vmatprep.subr.mxu0 0.0
    %v1715 = vand.u32 %v774, 4294901760
    %v1716 = vsub.f32 %v774, %v1715
    %1717 = vmatpush1.msra.mxu0 %v1716
    %1718 = vmatprep.subr.mxu0 0.0
    %v1719 = vand.u32 %v773, 4294901760
    %v1720 = vsub.f32 %v773, %v1719
    %1721 = vmatpush1.msra.mxu0 %v1720
    %1722 = vmatprep.subr.mxu0 0.0
    %v1723 = vand.u32 %v772, 4294901760
    %v1724 = vsub.f32 %v772, %v1723
    %1725 = vmatpush1.msra.mxu0 %v1724
    %1726 = vmatprep.subr.mxu0 0.0
    %v1727 = vand.u32 %v771, 4294901760
    %v1728 = vsub.f32 %v771, %v1727
    %1729 = vmatpush1.msra.mxu0 %v1728
    %1730 = vmatprep.subr.mxu0 0.0
    %v1731 = vand.u32 %v770, 4294901760
    %v1732 = vsub.f32 %v770, %v1731
    %1733 = vmatpush1.msra.mxu0 %v1732
    %1734 = vmatprep.subr.mxu0 0.0
    %1735 = vmatpush2.msra.mxu0 0.0
    %1736 = vmatprep.subr.mxu0 0.0
    %1737 = vmatpush2.msra.mxu0 0.0
    %1738 = vmatprep.subr.mxu0 0.0
    %1739 = vmatpush2.msra.mxu0 0.0
    %1740 = vmatprep.subr.mxu0 0.0
    %1741 = vmatpush2.msra.mxu0 0.0
    %1742 = vmatprep.subr.mxu0 0.0
    %1743 = vmatpush2.msra.mxu0 0.0
    %1744 = vmatprep.subr.mxu0 0.0
    %1745 = vmatpush2.msra.mxu0 0.0
    %1746 = vmatprep.subr.mxu0 0.0
    %1747 = vmatpush2.msra.mxu0 0.0
    %1748 = vmatprep.subr.mxu0 0.0
    %1749 = vmatpush2.msra.mxu0 0.0
    %1750 = vmatprep.subr.mxu0 0.0
    %1751 = vmatpush2.msra.mxu0 0.0
    %1752 = vmatprep.subr.mxu0 0.0
    %1753 = vmatpush2.msra.mxu0 0.0
    %1754 = vmatprep.subr.mxu0 0.0
    %1755 = vmatpush2.msra.mxu0 0.0
    %1756 = vmatprep.subr.mxu0 0.0
    %1757 = vmatpush2.msra.mxu0 0.0
    %1758 = vmatprep.subr.mxu0 0.0
    %1759 = vmatpush2.msra.mxu0 0.0
    %1760 = vmatprep.subr.mxu0 0.0
    %1761 = vmatpush2.msra.mxu0 0.0
    %1762 = vmatprep.subr.mxu0 0.0
    %1763 = vmatpush2.msra.mxu0 0.0
    %1764 = vmatprep.subr.mxu0 0.0
    %1765 = vmatpush2.msra.mxu0 0.0
    %1766 = vmatprep.mubr.f32.mxu0 0.0
    %v1767 = vand.u32 %v1427, 4294901760
    %v1768 = vsub.f32 %v1427, %v1767
    %1769 = vmatmul.mubr.f32.gmra.mxu0 %v1768
    %v1770 = vpop.f32.mrf.mxu0
    %v1771 = vadd.f32 %v1667, %v1770
    %v1772 = vpop.f32.mrf.mxu0
    %1773 = vdwg.mxu0
    %1774 = vmatprep.subr.mxu0 0.0
    %v1775 = vand.u32 %v785, 4294901760
    %1776 = vmatpush1.msra.mxu0 %v1775
    %1777 = vmatprep.subr.mxu0 0.0
    %v1778 = vand.u32 %v784, 4294901760
    %1779 = vmatpush1.msra.mxu0 %v1778
    %1780 = vmatprep.subr.mxu0 0.0
    %v1781 = vand.u32 %v783, 4294901760
    %1782 = vmatpush1.msra.mxu0 %v1781
    %1783 = vmatprep.subr.mxu0 0.0
    %v1784 = vand.u32 %v782, 4294901760
    %1785 = vmatpush1.msra.mxu0 %v1784
    %1786 = vmatprep.subr.mxu0 0.0
    %v1787 = vand.u32 %v781, 4294901760
    %1788 = vmatpush1.msra.mxu0 %v1787
    %1789 = vmatprep.subr.mxu0 0.0
    %v1790 = vand.u32 %v780, 4294901760
    %1791 = vmatpush1.msra.mxu0 %v1790
    %1792 = vmatprep.subr.mxu0 0.0
    %v1793 = vand.u32 %v779, 4294901760
    %1794 = vmatpush1.msra.mxu0 %v1793
    %1795 = vmatprep.subr.mxu0 0.0
    %v1796 = vand.u32 %v778, 4294901760
    %1797 = vmatpush1.msra.mxu0 %v1796
    %1798 = vmatprep.subr.mxu0 0.0
    %v1799 = vand.u32 %v777, 4294901760
    %1800 = vmatpush1.msra.mxu0 %v1799
    %1801 = vmatprep.subr.mxu0 0.0
    %v1802 = vand.u32 %v776, 4294901760
    %1803 = vmatpush1.msra.mxu0 %v1802
    %1804 = vmatprep.subr.mxu0 0.0
    %v1805 = vand.u32 %v775, 4294901760
    %1806 = vmatpush1.msra.mxu0 %v1805
    %1807 = vmatprep.subr.mxu0 0.0
    %v1808 = vand.u32 %v774, 4294901760
    %1809 = vmatpush1.msra.mxu0 %v1808
    %1810 = vmatprep.subr.mxu0 0.0
    %v1811 = vand.u32 %v773, 4294901760
    %1812 = vmatpush1.msra.mxu0 %v1811
    %1813 = vmatprep.subr.mxu0 0.0
    %v1814 = vand.u32 %v772, 4294901760
    %1815 = vmatpush1.msra.mxu0 %v1814
    %1816 = vmatprep.subr.mxu0 0.0
    %v1817 = vand.u32 %v771, 4294901760
    %1818 = vmatpush1.msra.mxu0 %v1817
    %1819 = vmatprep.subr.mxu0 0.0
    %v1820 = vand.u32 %v770, 4294901760
    %1821 = vmatpush1.msra.mxu0 %v1820
    %1822 = vmatprep.subr.mxu0 0.0
    %1823 = vmatpush2.msra.mxu0 0.0
    %1824 = vmatprep.subr.mxu0 0.0
    %1825 = vmatpush2.msra.mxu0 0.0
    %1826 = vmatprep.subr.mxu0 0.0
    %1827 = vmatpush2.msra.mxu0 0.0
    %1828 = vmatprep.subr.mxu0 0.0
    %1829 = vmatpush2.msra.mxu0 0.0
    %1830 = vmatprep.subr.mxu0 0.0
    %1831 = vmatpush2.msra.mxu0 0.0
    %1832 = vmatprep.subr.mxu0 0.0
    %1833 = vmatpush2.msra.mxu0 0.0
    %1834 = vmatprep.subr.mxu0 0.0
    %1835 = vmatpush2.msra.mxu0 0.0
    %1836 = vmatprep.subr.mxu0 0.0
    %1837 = vmatpush2.msra.mxu0 0.0
    %1838 = vmatprep.subr.mxu0 0.0
    %1839 = vmatpush2.msra.mxu0 0.0
    %1840 = vmatprep.subr.mxu0 0.0
    %1841 = vmatpush2.msra.mxu0 0.0
    %1842 = vmatprep.subr.mxu0 0.0
    %1843 = vmatpush2.msra.mxu0 0.0
    %1844 = vmatprep.subr.mxu0 0.0
    %1845 = vmatpush2.msra.mxu0 0.0
    %1846 = vmatprep.subr.mxu0 0.0
    %1847 = vmatpush2.msra.mxu0 0.0
    %1848 = vmatprep.subr.mxu0 0.0
    %1849 = vmatpush2.msra.mxu0 0.0
    %1850 = vmatprep.subr.mxu0 0.0
    %1851 = vmatpush2.msra.mxu0 0.0
    %1852 = vmatprep.subr.mxu0 0.0
    %1853 = vmatpush2.msra.mxu0 0.0
    %1854 = vmatprep.mubr.f32.mxu0 0.0
    %v1855 = vand.u32 %v1427, 4294901760
    %v1856 = vsub.f32 %v1427, %v1855
    %v1857 = vand.u32 %v1856, 4294901760
    %1858 = vmatmul.mubr.f32.gmra.mxu0 %v1857
    %v1859 = vpop.f32.mrf.mxu0
    %v1860 = vadd.f32 %v1771, %v1859
    %v1861 = vpop.f32.mrf.mxu0
    %1862 = vdwg.mxu0
    %1863 = vmatprep.subr.mxu0 0.0
    %v1864 = vand.u32 %v785, 4294901760
    %v1865 = vsub.f32 %v785, %v1864
    %v1866 = vand.u32 %v1865, 4294901760
    %1867 = vmatpush1.msra.mxu0 %v1866
    %1868 = vmatprep.subr.mxu0 0.0
    %v1869 = vand.u32 %v784, 4294901760
    %v1870 = vsub.f32 %v784, %v1869
    %v1871 = vand.u32 %v1870, 4294901760
    %1872 = vmatpush1.msra.mxu0 %v1871
    %1873 = vmatprep.subr.mxu0 0.0
    %v1874 = vand.u32 %v783, 4294901760
    %v1875 = vsub.f32 %v783, %v1874
    %v1876 = vand.u32 %v1875, 4294901760
    %1877 = vmatpush1.msra.mxu0 %v1876
    %1878 = vmatprep.subr.mxu0 0.0
    %v1879 = vand.u32 %v782, 4294901760
    %v1880 = vsub.f32 %v782, %v1879
    %v1881 = vand.u32 %v1880, 4294901760
    %1882 = vmatpush1.msra.mxu0 %v1881
    %1883 = vmatprep.subr.mxu0 0.0
    %v1884 = vand.u32 %v781, 4294901760
    %v1885 = vsub.f32 %v781, %v1884
    %v1886 = vand.u32 %v1885, 4294901760
    %1887 = vmatpush1.msra.mxu0 %v1886
    %1888 = vmatprep.subr.mxu0 0.0
    %v1889 = vand.u32 %v780, 4294901760
    %v1890 = vsub.f32 %v780, %v1889
    %v1891 = vand.u32 %v1890, 4294901760
    %1892 = vmatpush1.msra.mxu0 %v1891
    %1893 = vmatprep.subr.mxu0 0.0
    %v1894 = vand.u32 %v779, 4294901760
    %v1895 = vsub.f32 %v779, %v1894
    %v1896 = vand.u32 %v1895, 4294901760
    %1897 = vmatpush1.msra.mxu0 %v1896
    %1898 = vmatprep.subr.mxu0 0.0
    %v1899 = vand.u32 %v778, 4294901760
    %v1900 = vsub.f32 %v778, %v1899
    %v1901 = vand.u32 %v1900, 4294901760
    %1902 = vmatpush1.msra.mxu0 %v1901
    %1903 = vmatprep.subr.mxu0 0.0
    %v1904 = vand.u32 %v777, 4294901760
    %v1905 = vsub.f32 %v777, %v1904
    %v1906 = vand.u32 %v1905, 4294901760
    %1907 = vmatpush1.msra.mxu0 %v1906
    %1908 = vmatprep.subr.mxu0 0.0
    %v1909 = vand.u32 %v776, 4294901760
    %v1910 = vsub.f32 %v776, %v1909
    %v1911 = vand.u32 %v1910, 4294901760
    %1912 = vmatpush1.msra.mxu0 %v1911
    %1913 = vmatprep.subr.mxu0 0.0
    %v1914 = vand.u32 %v775, 4294901760
    %v1915 = vsub.f32 %v775, %v1914
    %v1916 = vand.u32 %v1915, 4294901760
    %1917 = vmatpush1.msra.mxu0 %v1916
    %1918 = vmatprep.subr.mxu0 0.0
    %v1919 = vand.u32 %v774, 4294901760
    %v1920 = vsub.f32 %v774, %v1919
    %v1921 = vand.u32 %v1920, 4294901760
    %1922 = vmatpush1.msra.mxu0 %v1921
    %1923 = vmatprep.subr.mxu0 0.0
    %v1924 = vand.u32 %v773, 4294901760
    %v1925 = vsub.f32 %v773, %v1924
    %v1926 = vand.u32 %v1925, 4294901760
    %1927 = vmatpush1.msra.mxu0 %v1926
    %1928 = vmatprep.subr.mxu0 0.0
    %v1929 = vand.u32 %v772, 4294901760
    %v1930 = vsub.f32 %v772, %v1929
    %v1931 = vand.u32 %v1930, 4294901760
    %1932 = vmatpush1.msra.mxu0 %v1931
    %1933 = vmatprep.subr.mxu0 0.0
    %v1934 = vand.u32 %v771, 4294901760
    %v1935 = vsub.f32 %v771, %v1934
    %v1936 = vand.u32 %v1935, 4294901760
    %1937 = vmatpush1.msra.mxu0 %v1936
    %1938 = vmatprep.subr.mxu0 0.0
    %v1939 = vand.u32 %v770, 4294901760
    %v1940 = vsub.f32 %v770, %v1939
    %v1941 = vand.u32 %v1940, 4294901760
    %1942 = vmatpush1.msra.mxu0 %v1941
    %1943 = vmatprep.subr.mxu0 0.0
    %1944 = vmatpush2.msra.mxu0 0.0
    %1945 = vmatprep.subr.mxu0 0.0
    %1946 = vmatpush2.msra.mxu0 0.0
    %1947 = vmatprep.subr.mxu0 0.0
    %1948 = vmatpush2.msra.mxu0 0.0
    %1949 = vmatprep.subr.mxu0 0.0
    %1950 = vmatpush2.msra.mxu0 0.0
    %1951 = vmatprep.subr.mxu0 0.0
    %1952 = vmatpush2.msra.mxu0 0.0
    %1953 = vmatprep.subr.mxu0 0.0
    %1954 = vmatpush2.msra.mxu0 0.0
    %1955 = vmatprep.subr.mxu0 0.0
    %1956 = vmatpush2.msra.mxu0 0.0
    %1957 = vmatprep.subr.mxu0 0.0
    %1958 = vmatpush2.msra.mxu0 0.0
    %1959 = vmatprep.subr.mxu0 0.0
    %1960 = vmatpush2.msra.mxu0 0.0
    %1961 = vmatprep.subr.mxu0 0.0
    %1962 = vmatpush2.msra.mxu0 0.0
    %1963 = vmatprep.subr.mxu0 0.0
    %1964 = vmatpush2.msra.mxu0 0.0
    %1965 = vmatprep.subr.mxu0 0.0
    %1966 = vmatpush2.msra.mxu0 0.0
    %1967 = vmatprep.subr.mxu0 0.0
    %1968 = vmatpush2.msra.mxu0 0.0
    %1969 = vmatprep.subr.mxu0 0.0
    %1970 = vmatpush2.msra.mxu0 0.0
    %1971 = vmatprep.subr.mxu0 0.0
    %1972 = vmatpush2.msra.mxu0 0.0
    %1973 = vmatprep.subr.mxu0 0.0
    %1974 = vmatpush2.msra.mxu0 0.0
    %1975 = vmatprep.mubr.f32.mxu0 0.0
    %v1976 = vand.u32 %v1427, 4294901760
    %1977 = vmatmul.mubr.f32.gmra.mxu0 %v1976
    %v1978 = vpop.f32.mrf.mxu0
    %v1979 = vadd.f32 %v1860, %v1978
    %v1980 = vpop.f32.mrf.mxu0
    %1981 = vdwg.mxu0
    %1982 = vmatprep.subr.mxu0 0.0
    %v1983 = vand.u32 %v785, 4294901760
    %1984 = vmatpush1.msra.mxu0 %v1983
    %1985 = vmatprep.subr.mxu0 0.0
    %v1986 = vand.u32 %v784, 4294901760
    %1987 = vmatpush1.msra.mxu0 %v1986
    %1988 = vmatprep.subr.mxu0 0.0
    %v1989 = vand.u32 %v783, 4294901760
    %1990 = vmatpush1.msra.mxu0 %v1989
    %1991 = vmatprep.subr.mxu0 0.0
    %v1992 = vand.u32 %v782, 4294901760
    %1993 = vmatpush1.msra.mxu0 %v1992
    %1994 = vmatprep.subr.mxu0 0.0
    %v1995 = vand.u32 %v781, 4294901760
    %1996 = vmatpush1.msra.mxu0 %v1995
    %1997 = vmatprep.subr.mxu0 0.0
    %v1998 = vand.u32 %v780, 4294901760
    %1999 = vmatpush1.msra.mxu0 %v1998
    %2000 = vmatprep.subr.mxu0 0.0
    %v2001 = vand.u32 %v779, 4294901760
    %2002 = vmatpush1.msra.mxu0 %v2001
    %2003 = vmatprep.subr.mxu0 0.0
    %v2004 = vand.u32 %v778, 4294901760
    %2005 = vmatpush1.msra.mxu0 %v2004
    %2006 = vmatprep.subr.mxu0 0.0
    %v2007 = vand.u32 %v777, 4294901760
    %2008 = vmatpush1.msra.mxu0 %v2007
    %2009 = vmatprep.subr.mxu0 0.0
    %v2010 = vand.u32 %v776, 4294901760
    %2011 = vmatpush1.msra.mxu0 %v2010
    %2012 = vmatprep.subr.mxu0 0.0
    %v2013 = vand.u32 %v775, 4294901760
    %2014 = vmatpush1.msra.mxu0 %v2013
    %2015 = vmatprep.subr.mxu0 0.0
    %v2016 = vand.u32 %v774, 4294901760
    %2017 = vmatpush1.msra.mxu0 %v2016
    %2018 = vmatprep.subr.mxu0 0.0
    %v2019 = vand.u32 %v773, 4294901760
    %2020 = vmatpush1.msra.mxu0 %v2019
    %2021 = vmatprep.subr.mxu0 0.0
    %v2022 = vand.u32 %v772, 4294901760
    %2023 = vmatpush1.msra.mxu0 %v2022
    %2024 = vmatprep.subr.mxu0 0.0
    %v2025 = vand.u32 %v771, 4294901760
    %2026 = vmatpush1.msra.mxu0 %v2025
    %2027 = vmatprep.subr.mxu0 0.0
    %v2028 = vand.u32 %v770, 4294901760
    %2029 = vmatpush1.msra.mxu0 %v2028
    %2030 = vmatprep.subr.mxu0 0.0
    %2031 = vmatpush2.msra.mxu0 0.0
    %2032 = vmatprep.subr.mxu0 0.0
    %2033 = vmatpush2.msra.mxu0 0.0
    %2034 = vmatprep.subr.mxu0 0.0
    %2035 = vmatpush2.msra.mxu0 0.0
    %2036 = vmatprep.subr.mxu0 0.0
    %2037 = vmatpush2.msra.mxu0 0.0
    %2038 = vmatprep.subr.mxu0 0.0
    %2039 = vmatpush2.msra.mxu0 0.0
    %2040 = vmatprep.subr.mxu0 0.0
    %2041 = vmatpush2.msra.mxu0 0.0
    %2042 = vmatprep.subr.mxu0 0.0
    %2043 = vmatpush2.msra.mxu0 0.0
    %2044 = vmatprep.subr.mxu0 0.0
    %2045 = vmatpush2.msra.mxu0 0.0
    %2046 = vmatprep.subr.mxu0 0.0
    %2047 = vmatpush2.msra.mxu0 0.0
    %2048 = vmatprep.subr.mxu0 0.0
    %2049 = vmatpush2.msra.mxu0 0.0
    %2050 = vmatprep.subr.mxu0 0.0
    %2051 = vmatpush2.msra.mxu0 0.0
    %2052 = vmatprep.subr.mxu0 0.0
    %2053 = vmatpush2.msra.mxu0 0.0
    %2054 = vmatprep.subr.mxu0 0.0
    %2055 = vmatpush2.msra.mxu0 0.0
    %2056 = vmatprep.subr.mxu0 0.0
    %2057 = vmatpush2.msra.mxu0 0.0
    %2058 = vmatprep.subr.mxu0 0.0
    %2059 = vmatpush2.msra.mxu0 0.0
    %2060 = vmatprep.subr.mxu0 0.0
    %2061 = vmatpush2.msra.mxu0 0.0
    %2062 = vmatprep.mubr.f32.mxu0 0.0
    %v2063 = vand.u32 %v1427, 4294901760
    %2064 = vmatmul.mubr.f32.gmra.mxu0 %v2063
    %v2065 = vpop.f32.mrf.mxu0
    %v2066 = vadd.f32 %v1979, %v2065
    %v2067 = vpop.f32.mrf.mxu0
    %2068 = vdwg.mxu0
    %v2069 = vmul.f32 %v1424, %v1424
    %v2070 = vsub.f32 %v2069, %v2066
    %2071 = vadd.xlane.f32.xlu0 %v2070
    %v2072 = vpop.xlane.xlu0 %2071
    %v2073 = vmul.f32 %v2072, 0.5
    %v2074 = vld [vmem:[#allocation7] sm:$0xff]
    %v2075 = vld [vmem:[#allocation7 + $0x8] sm:$0xff]
    %v2076 = vld [vmem:[#allocation7 + $0x10] sm:$0xff]
    %v2077 = vld [vmem:[#allocation7 + $0x18] sm:$0xff]
    %v2078 = vld [vmem:[#allocation7 + $0x20] sm:$0xff]
    %v2079 = vld [vmem:[#allocation7 + $0x28] sm:$0xff]
    %v2080 = vld [vmem:[#allocation7 + $0x30] sm:$0xff]
    %v2081 = vld [vmem:[#allocation7 + $0x38] sm:$0xff]
    %v2082 = vld [vmem:[#allocation7 + $0x40] sm:$0xff]
    %v2083 = vld [vmem:[#allocation7 + $0x48] sm:$0xff]
    %v2084 = vld [vmem:[#allocation7 + $0x50] sm:$0xff]
    %v2085 = vld [vmem:[#allocation7 + $0x58] sm:$0xff]
    %v2086 = vld [vmem:[#allocation7 + $0x60] sm:$0xff]
    %v2087 = vld [vmem:[#allocation7 + $0x68] sm:$0xff]
    %v2088 = vld [vmem:[#allocation7 + $0x70] sm:$0xff]
    %v2089 = vld [vmem:[#allocation7 + $0x78] sm:$0xff]
    %v2090 = vld [vmem:[%s5] sm:$0x1]
    %v2092 = vlaneseq
    %v2093 = vshrl.u32 %v2092, 7
    %v2094 = vsub.s32 0, %v2093
    %v2095 = vrot.slane %v2090, %v2094
    %2097 = vmatprep.subr.mxu0 0.0
    %v2098 = vand.u32 %v2089, 4294901760
    %2099 = vmatpush1.msra.mxu0 %v2098
    %2100 = vmatprep.subr.mxu0 0.0
    %v2101 = vand.u32 %v2088, 4294901760
    %2102 = vmatpush1.msra.mxu0 %v2101
    %2103 = vmatprep.subr.mxu0 0.0
    %v2104 = vand.u32 %v2087, 4294901760
    %2105 = vmatpush1.msra.mxu0 %v2104
    %2106 = vmatprep.subr.mxu0 0.0
    %v2107 = vand.u32 %v2086, 4294901760
    %2108 = vmatpush1.msra.mxu0 %v2107
    %2109 = vmatprep.subr.mxu0 0.0
    %v2110 = vand.u32 %v2085, 4294901760
    %2111 = vmatpush1.msra.mxu0 %v2110
    %2112 = vmatprep.subr.mxu0 0.0
    %v2113 = vand.u32 %v2084, 4294901760
    %2114 = vmatpush1.msra.mxu0 %v2113
    %2115 = vmatprep.subr.mxu0 0.0
    %v2116 = vand.u32 %v2083, 4294901760
    %2117 = vmatpush1.msra.mxu0 %v2116
    %2118 = vmatprep.subr.mxu0 0.0
    %v2119 = vand.u32 %v2082, 4294901760
    %2120 = vmatpush1.msra.mxu0 %v2119
    %2121 = vmatprep.subr.mxu0 0.0
    %v2122 = vand.u32 %v2081, 4294901760
    %2123 = vmatpush1.msra.mxu0 %v2122
    %2124 = vmatprep.subr.mxu0 0.0
    %v2125 = vand.u32 %v2080, 4294901760
    %2126 = vmatpush1.msra.mxu0 %v2125
    %2127 = vmatprep.subr.mxu0 0.0
    %v2128 = vand.u32 %v2079, 4294901760
    %2129 = vmatpush1.msra.mxu0 %v2128
    %2130 = vmatprep.subr.mxu0 0.0
    %v2131 = vand.u32 %v2078, 4294901760
    %2132 = vmatpush1.msra.mxu0 %v2131
    %2133 = vmatprep.subr.mxu0 0.0
    %v2134 = vand.u32 %v2077, 4294901760
    %2135 = vmatpush1.msra.mxu0 %v2134
    %2136 = vmatprep.subr.mxu0 0.0
    %v2137 = vand.u32 %v2076, 4294901760
    %2138 = vmatpush1.msra.mxu0 %v2137
    %2139 = vmatprep.subr.mxu0 0.0
    %v2140 = vand.u32 %v2075, 4294901760
    %2141 = vmatpush1.msra.mxu0 %v2140
    %2142 = vmatprep.subr.mxu0 0.0
    %v2143 = vand.u32 %v2074, 4294901760
    %2144 = vmatpush1.msra.mxu0 %v2143
    %2145 = vmatprep.subr.mxu0 0.0
    %2146 = vmatpush2.msra.mxu0 0.0
    %2147 = vmatprep.subr.mxu0 0.0
    %2148 = vmatpush2.msra.mxu0 0.0
    %2149 = vmatprep.subr.mxu0 0.0
    %2150 = vmatpush2.msra.mxu0 0.0
    %2151 = vmatprep.subr.mxu0 0.0
    %2152 = vmatpush2.msra.mxu0 0.0
    %2153 = vmatprep.subr.mxu0 0.0
    %2154 = vmatpush2.msra.mxu0 0.0
    %2155 = vmatprep.subr.mxu0 0.0
    %2156 = vmatpush2.msra.mxu0 0.0
    %2157 = vmatprep.subr.mxu0 0.0
    %2158 = vmatpush2.msra.mxu0 0.0
    %2159 = vmatprep.subr.mxu0 0.0
    %2160 = vmatpush2.msra.mxu0 0.0
    %2161 = vmatprep.subr.mxu0 0.0
    %2162 = vmatpush2.msra.mxu0 0.0
    %2163 = vmatprep.subr.mxu0 0.0
    %2164 = vmatpush2.msra.mxu0 0.0
    %2165 = vmatprep.subr.mxu0 0.0
    %2166 = vmatpush2.msra.mxu0 0.0
    %2167 = vmatprep.subr.mxu0 0.0
    %2168 = vmatpush2.msra.mxu0 0.0
    %2169 = vmatprep.subr.mxu0 0.0
    %2170 = vmatpush2.msra.mxu0 0.0
    %2171 = vmatprep.subr.mxu0 0.0
    %2172 = vmatpush2.msra.mxu0 0.0
    %2173 = vmatprep.subr.mxu0 0.0
    %2174 = vmatpush2.msra.mxu0 0.0
    %2175 = vmatprep.subr.mxu0 0.0
    %2176 = vmatpush2.msra.mxu0 0.0
    %2177 = vmatprep.mubr.f32.mxu0 0.0
    %v2178 = vand.u32 %v769, 4294901760
    %v2179 = vsub.f32 %v769, %v2178
    %v2180 = vand.u32 %v2179, 4294901760
    %v2181 = vsub.f32 %v2179, %v2180
    %v2182 = vand.u32 %v2181, 4294901760
    %2183 = vmatmul.mubr.f32.gmra.mxu0 %v2182
    %v2184 = vpop.f32.mrf.mxu0
    %v2185 = vadd.f32 %v2095, %v2184
    %v2186 = vpop.f32.mrf.mxu0
    %2187 = vdwg.mxu0
    %2188 = vmatprep.subr.mxu0 0.0
    %v2189 = vand.u32 %v2089, 4294901760
    %v2190 = vsub.f32 %v2089, %v2189
    %v2191 = vand.u32 %v2190, 4294901760
    %v2192 = vsub.f32 %v2190, %v2191
    %v2193 = vand.u32 %v2192, 4294901760
    %2194 = vmatpush1.msra.mxu0 %v2193
    %2195 = vmatprep.subr.mxu0 0.0
    %v2196 = vand.u32 %v2088, 4294901760
    %v2197 = vsub.f32 %v2088, %v2196
    %v2198 = vand.u32 %v2197, 4294901760
    %v2199 = vsub.f32 %v2197, %v2198
    %v2200 = vand.u32 %v2199, 4294901760
    %2201 = vmatpush1.msra.mxu0 %v2200
    %2202 = vmatprep.subr.mxu0 0.0
    %v2203 = vand.u32 %v2087, 4294901760
    %v2204 = vsub.f32 %v2087, %v2203
    %v2205 = vand.u32 %v2204, 4294901760
    %v2206 = vsub.f32 %v2204, %v2205
    %v2207 = vand.u32 %v2206, 4294901760
    %2208 = vmatpush1.msra.mxu0 %v2207
    %2209 = vmatprep.subr.mxu0 0.0
    %v2210 = vand.u32 %v2086, 4294901760
    %v2211 = vsub.f32 %v2086, %v2210
    %v2212 = vand.u32 %v2211, 4294901760
    %v2213 = vsub.f32 %v2211, %v2212
    %v2214 = vand.u32 %v2213, 4294901760
    %2215 = vmatpush1.msra.mxu0 %v2214
    %2216 = vmatprep.subr.mxu0 0.0
    %v2217 = vand.u32 %v2085, 4294901760
    %v2218 = vsub.f32 %v2085, %v2217
    %v2219 = vand.u32 %v2218, 4294901760
    %v2220 = vsub.f32 %v2218, %v2219
    %v2221 = vand.u32 %v2220, 4294901760
    %2222 = vmatpush1.msra.mxu0 %v2221
    %2223 = vmatprep.subr.mxu0 0.0
    %v2224 = vand.u32 %v2084, 4294901760
    %v2225 = vsub.f32 %v2084, %v2224
    %v2226 = vand.u32 %v2225, 4294901760
    %v2227 = vsub.f32 %v2225, %v2226
    %v2228 = vand.u32 %v2227, 4294901760
    %2229 = vmatpush1.msra.mxu0 %v2228
    %2230 = vmatprep.subr.mxu0 0.0
    %v2231 = vand.u32 %v2083, 4294901760
    %v2232 = vsub.f32 %v2083, %v2231
    %v2233 = vand.u32 %v2232, 4294901760
    %v2234 = vsub.f32 %v2232, %v2233
    %v2235 = vand.u32 %v2234, 4294901760
    %2236 = vmatpush1.msra.mxu0 %v2235
    %2237 = vmatprep.subr.mxu0 0.0
    %v2238 = vand.u32 %v2082, 4294901760
    %v2239 = vsub.f32 %v2082, %v2238
    %v2240 = vand.u32 %v2239, 4294901760
    %v2241 = vsub.f32 %v2239, %v2240
    %v2242 = vand.u32 %v2241, 4294901760
    %2243 = vmatpush1.msra.mxu0 %v2242
    %2244 = vmatprep.subr.mxu0 0.0
    %v2245 = vand.u32 %v2081, 4294901760
    %v2246 = vsub.f32 %v2081, %v2245
    %v2247 = vand.u32 %v2246, 4294901760
    %v2248 = vsub.f32 %v2246, %v2247
    %v2249 = vand.u32 %v2248, 4294901760
    %2250 = vmatpush1.msra.mxu0 %v2249
    %2251 = vmatprep.subr.mxu0 0.0
    %v2252 = vand.u32 %v2080, 4294901760
    %v2253 = vsub.f32 %v2080, %v2252
    %v2254 = vand.u32 %v2253, 4294901760
    %v2255 = vsub.f32 %v2253, %v2254
    %v2256 = vand.u32 %v2255, 4294901760
    %2257 = vmatpush1.msra.mxu0 %v2256
    %2258 = vmatprep.subr.mxu0 0.0
    %v2259 = vand.u32 %v2079, 4294901760
    %v2260 = vsub.f32 %v2079, %v2259
    %v2261 = vand.u32 %v2260, 4294901760
    %v2262 = vsub.f32 %v2260, %v2261
    %v2263 = vand.u32 %v2262, 4294901760
    %2264 = vmatpush1.msra.mxu0 %v2263
    %2265 = vmatprep.subr.mxu0 0.0
    %v2266 = vand.u32 %v2078, 4294901760
    %v2267 = vsub.f32 %v2078, %v2266
    %v2268 = vand.u32 %v2267, 4294901760
    %v2269 = vsub.f32 %v2267, %v2268
    %v2270 = vand.u32 %v2269, 4294901760
    %2271 = vmatpush1.msra.mxu0 %v2270
    %2272 = vmatprep.subr.mxu0 0.0
    %v2273 = vand.u32 %v2077, 4294901760
    %v2274 = vsub.f32 %v2077, %v2273
    %v2275 = vand.u32 %v2274, 4294901760
    %v2276 = vsub.f32 %v2274, %v2275
    %v2277 = vand.u32 %v2276, 4294901760
    %2278 = vmatpush1.msra.mxu0 %v2277
    %2279 = vmatprep.subr.mxu0 0.0
    %v2280 = vand.u32 %v2076, 4294901760
    %v2281 = vsub.f32 %v2076, %v2280
    %v2282 = vand.u32 %v2281, 4294901760
    %v2283 = vsub.f32 %v2281, %v2282
    %v2284 = vand.u32 %v2283, 4294901760
    %2285 = vmatpush1.msra.mxu0 %v2284
    %2286 = vmatprep.subr.mxu0 0.0
    %v2287 = vand.u32 %v2075, 4294901760
    %v2288 = vsub.f32 %v2075, %v2287
    %v2289 = vand.u32 %v2288, 4294901760
    %v2290 = vsub.f32 %v2288, %v2289
    %v2291 = vand.u32 %v2290, 4294901760
    %2292 = vmatpush1.msra.mxu0 %v2291
    %2293 = vmatprep.subr.mxu0 0.0
    %v2294 = vand.u32 %v2074, 4294901760
    %v2295 = vsub.f32 %v2074, %v2294
    %v2296 = vand.u32 %v2295, 4294901760
    %v2297 = vsub.f32 %v2295, %v2296
    %v2298 = vand.u32 %v2297, 4294901760
    %2299 = vmatpush1.msra.mxu0 %v2298
    %2300 = vmatprep.subr.mxu0 0.0
    %2301 = vmatpush2.msra.mxu0 0.0
    %2302 = vmatprep.subr.mxu0 0.0
    %2303 = vmatpush2.msra.mxu0 0.0
    %2304 = vmatprep.subr.mxu0 0.0
    %2305 = vmatpush2.msra.mxu0 0.0
    %2306 = vmatprep.subr.mxu0 0.0
    %2307 = vmatpush2.msra.mxu0 0.0
    %2308 = vmatprep.subr.mxu0 0.0
    %2309 = vmatpush2.msra.mxu0 0.0
    %2310 = vmatprep.subr.mxu0 0.0
    %2311 = vmatpush2.msra.mxu0 0.0
    %2312 = vmatprep.subr.mxu0 0.0
    %2313 = vmatpush2.msra.mxu0 0.0
    %2314 = vmatprep.subr.mxu0 0.0
    %2315 = vmatpush2.msra.mxu0 0.0
    %2316 = vmatprep.subr.mxu0 0.0
    %2317 = vmatpush2.msra.mxu0 0.0
    %2318 = vmatprep.subr.mxu0 0.0
    %2319 = vmatpush2.msra.mxu0 0.0
    %2320 = vmatprep.subr.mxu0 0.0
    %2321 = vmatpush2.msra.mxu0 0.0
    %2322 = vmatprep.subr.mxu0 0.0
    %2323 = vmatpush2.msra.mxu0 0.0
    %2324 = vmatprep.subr.mxu0 0.0
    %2325 = vmatpush2.msra.mxu0 0.0
    %2326 = vmatprep.subr.mxu0 0.0
    %2327 = vmatpush2.msra.mxu0 0.0
    %2328 = vmatprep.subr.mxu0 0.0
    %2329 = vmatpush2.msra.mxu0 0.0
    %2330 = vmatprep.subr.mxu0 0.0
    %2331 = vmatpush2.msra.mxu0 0.0
    %2332 = vmatprep.mubr.f32.mxu0 0.0
    %v2333 = vand.u32 %v769, 4294901760
    %2334 = vmatmul.mubr.f32.gmra.mxu0 %v2333
    %v2335 = vpop.f32.mrf.mxu0
    %v2336 = vadd.f32 %v2185, %v2335
    %v2337 = vpop.f32.mrf.mxu0
    %2338 = vdwg.mxu0
    %2339 = vmatprep.subr.mxu0 0.0
    %v2340 = vand.u32 %v2089, 4294901760
    %v2341 = vsub.f32 %v2089, %v2340
    %2342 = vmatpush1.msra.mxu0 %v2341
    %2343 = vmatprep.subr.mxu0 0.0
    %v2344 = vand.u32 %v2088, 4294901760
    %v2345 = vsub.f32 %v2088, %v2344
    %2346 = vmatpush1.msra.mxu0 %v2345
    %2347 = vmatprep.subr.mxu0 0.0
    %v2348 = vand.u32 %v2087, 4294901760
    %v2349 = vsub.f32 %v2087, %v2348
    %2350 = vmatpush1.msra.mxu0 %v2349
    %2351 = vmatprep.subr.mxu0 0.0
    %v2352 = vand.u32 %v2086, 4294901760
    %v2353 = vsub.f32 %v2086, %v2352
    %2354 = vmatpush1.msra.mxu0 %v2353
    %2355 = vmatprep.subr.mxu0 0.0
    %v2356 = vand.u32 %v2085, 4294901760
    %v2357 = vsub.f32 %v2085, %v2356
    %2358 = vmatpush1.msra.mxu0 %v2357
    %2359 = vmatprep.subr.mxu0 0.0
    %v2360 = vand.u32 %v2084, 4294901760
    %v2361 = vsub.f32 %v2084, %v2360
    %2362 = vmatpush1.msra.mxu0 %v2361
    %2363 = vmatprep.subr.mxu0 0.0
    %v2364 = vand.u32 %v2083, 4294901760
    %v2365 = vsub.f32 %v2083, %v2364
    %2366 = vmatpush1.msra.mxu0 %v2365
    %2367 = vmatprep.subr.mxu0 0.0
    %v2368 = vand.u32 %v2082, 4294901760
    %v2369 = vsub.f32 %v2082, %v2368
    %2370 = vmatpush1.msra.mxu0 %v2369
    %2371 = vmatprep.subr.mxu0 0.0
    %v2372 = vand.u32 %v2081, 4294901760
    %v2373 = vsub.f32 %v2081, %v2372
    %2374 = vmatpush1.msra.mxu0 %v2373
    %2375 = vmatprep.subr.mxu0 0.0
    %v2376 = vand.u32 %v2080, 4294901760
    %v2377 = vsub.f32 %v2080, %v2376
    %2378 = vmatpush1.msra.mxu0 %v2377
    %2379 = vmatprep.subr.mxu0 0.0
    %v2380 = vand.u32 %v2079, 4294901760
    %v2381 = vsub.f32 %v2079, %v2380
    %2382 = vmatpush1.msra.mxu0 %v2381
    %2383 = vmatprep.subr.mxu0 0.0
    %v2384 = vand.u32 %v2078, 4294901760
    %v2385 = vsub.f32 %v2078, %v2384
    %2386 = vmatpush1.msra.mxu0 %v2385
    %2387 = vmatprep.subr.mxu0 0.0
    %v2388 = vand.u32 %v2077, 4294901760
    %v2389 = vsub.f32 %v2077, %v2388
    %2390 = vmatpush1.msra.mxu0 %v2389
    %2391 = vmatprep.subr.mxu0 0.0
    %v2392 = vand.u32 %v2076, 4294901760
    %v2393 = vsub.f32 %v2076, %v2392
    %2394 = vmatpush1.msra.mxu0 %v2393
    %2395 = vmatprep.subr.mxu0 0.0
    %v2396 = vand.u32 %v2075, 4294901760
    %v2397 = vsub.f32 %v2075, %v2396
    %2398 = vmatpush1.msra.mxu0 %v2397
    %2399 = vmatprep.subr.mxu0 0.0
    %v2400 = vand.u32 %v2074, 4294901760
    %v2401 = vsub.f32 %v2074, %v2400
    %2402 = vmatpush1.msra.mxu0 %v2401
    %2403 = vmatprep.subr.mxu0 0.0
    %2404 = vmatpush2.msra.mxu0 0.0
    %2405 = vmatprep.subr.mxu0 0.0
    %2406 = vmatpush2.msra.mxu0 0.0
    %2407 = vmatprep.subr.mxu0 0.0
    %2408 = vmatpush2.msra.mxu0 0.0
    %2409 = vmatprep.subr.mxu0 0.0
    %2410 = vmatpush2.msra.mxu0 0.0
    %2411 = vmatprep.subr.mxu0 0.0
    %2412 = vmatpush2.msra.mxu0 0.0
    %2413 = vmatprep.subr.mxu0 0.0
    %2414 = vmatpush2.msra.mxu0 0.0
    %2415 = vmatprep.subr.mxu0 0.0
    %2416 = vmatpush2.msra.mxu0 0.0
    %2417 = vmatprep.subr.mxu0 0.0
    %2418 = vmatpush2.msra.mxu0 0.0
    %2419 = vmatprep.subr.mxu0 0.0
    %2420 = vmatpush2.msra.mxu0 0.0
    %2421 = vmatprep.subr.mxu0 0.0
    %2422 = vmatpush2.msra.mxu0 0.0
    %2423 = vmatprep.subr.mxu0 0.0
    %2424 = vmatpush2.msra.mxu0 0.0
    %2425 = vmatprep.subr.mxu0 0.0
    %2426 = vmatpush2.msra.mxu0 0.0
    %2427 = vmatprep.subr.mxu0 0.0
    %2428 = vmatpush2.msra.mxu0 0.0
    %2429 = vmatprep.subr.mxu0 0.0
    %2430 = vmatpush2.msra.mxu0 0.0
    %2431 = vmatprep.subr.mxu0 0.0
    %2432 = vmatpush2.msra.mxu0 0.0
    %2433 = vmatprep.subr.mxu0 0.0
    %2434 = vmatpush2.msra.mxu0 0.0
    %2435 = vmatprep.mubr.f32.mxu0 0.0
    %v2436 = vand.u32 %v769, 4294901760
    %v2437 = vsub.f32 %v769, %v2436
    %2438 = vmatmul.mubr.f32.gmra.mxu0 %v2437
    %v2439 = vpop.f32.mrf.mxu0
    %v2440 = vadd.f32 %v2336, %v2439
    %v2441 = vpop.f32.mrf.mxu0
    %2442 = vdwg.mxu0
    %2443 = vmatprep.subr.mxu0 0.0
    %v2444 = vand.u32 %v2089, 4294901760
    %2445 = vmatpush1.msra.mxu0 %v2444
    %2446 = vmatprep.subr.mxu0 0.0
    %v2447 = vand.u32 %v2088, 4294901760
    %2448 = vmatpush1.msra.mxu0 %v2447
    %2449 = vmatprep.subr.mxu0 0.0
    %v2450 = vand.u32 %v2087, 4294901760
    %2451 = vmatpush1.msra.mxu0 %v2450
    %2452 = vmatprep.subr.mxu0 0.0
    %v2453 = vand.u32 %v2086, 4294901760
    %2454 = vmatpush1.msra.mxu0 %v2453
    %2455 = vmatprep.subr.mxu0 0.0
    %v2456 = vand.u32 %v2085, 4294901760
    %2457 = vmatpush1.msra.mxu0 %v2456
    %2458 = vmatprep.subr.mxu0 0.0
    %v2459 = vand.u32 %v2084, 4294901760
    %2460 = vmatpush1.msra.mxu0 %v2459
    %2461 = vmatprep.subr.mxu0 0.0
    %v2462 = vand.u32 %v2083, 4294901760
    %2463 = vmatpush1.msra.mxu0 %v2462
    %2464 = vmatprep.subr.mxu0 0.0
    %v2465 = vand.u32 %v2082, 4294901760
    %2466 = vmatpush1.msra.mxu0 %v2465
    %2467 = vmatprep.subr.mxu0 0.0
    %v2468 = vand.u32 %v2081, 4294901760
    %2469 = vmatpush1.msra.mxu0 %v2468
    %2470 = vmatprep.subr.mxu0 0.0
    %v2471 = vand.u32 %v2080, 4294901760
    %2472 = vmatpush1.msra.mxu0 %v2471
    %2473 = vmatprep.subr.mxu0 0.0
    %v2474 = vand.u32 %v2079, 4294901760
    %2475 = vmatpush1.msra.mxu0 %v2474
    %2476 = vmatprep.subr.mxu0 0.0
    %v2477 = vand.u32 %v2078, 4294901760
    %2478 = vmatpush1.msra.mxu0 %v2477
    %2479 = vmatprep.subr.mxu0 0.0
    %v2480 = vand.u32 %v2077, 4294901760
    %2481 = vmatpush1.msra.mxu0 %v2480
    %2482 = vmatprep.subr.mxu0 0.0
    %v2483 = vand.u32 %v2076, 4294901760
    %2484 = vmatpush1.msra.mxu0 %v2483
    %2485 = vmatprep.subr.mxu0 0.0
    %v2486 = vand.u32 %v2075, 4294901760
    %2487 = vmatpush1.msra.mxu0 %v2486
    %2488 = vmatprep.subr.mxu0 0.0
    %v2489 = vand.u32 %v2074, 4294901760
    %2490 = vmatpush1.msra.mxu0 %v2489
    %2491 = vmatprep.subr.mxu0 0.0
    %2492 = vmatpush2.msra.mxu0 0.0
    %2493 = vmatprep.subr.mxu0 0.0
    %2494 = vmatpush2.msra.mxu0 0.0
    %2495 = vmatprep.subr.mxu0 0.0
    %2496 = vmatpush2.msra.mxu0 0.0
    %2497 = vmatprep.subr.mxu0 0.0
    %2498 = vmatpush2.msra.mxu0 0.0
    %2499 = vmatprep.subr.mxu0 0.0
    %2500 = vmatpush2.msra.mxu0 0.0
    %2501 = vmatprep.subr.mxu0 0.0
    %2502 = vmatpush2.msra.mxu0 0.0
    %2503 = vmatprep.subr.mxu0 0.0
    %2504 = vmatpush2.msra.mxu0 0.0
    %2505 = vmatprep.subr.mxu0 0.0
    %2506 = vmatpush2.msra.mxu0 0.0
    %2507 = vmatprep.subr.mxu0 0.0
    %2508 = vmatpush2.msra.mxu0 0.0
    %2509 = vmatprep.subr.mxu0 0.0
    %2510 = vmatpush2.msra.mxu0 0.0
    %2511 = vmatprep.subr.mxu0 0.0
    %2512 = vmatpush2.msra.mxu0 0.0
    %2513 = vmatprep.subr.mxu0 0.0
    %2514 = vmatpush2.msra.mxu0 0.0
    %2515 = vmatprep.subr.mxu0 0.0
    %2516 = vmatpush2.msra.mxu0 0.0
    %2517 = vmatprep.subr.mxu0 0.0
    %2518 = vmatpush2.msra.mxu0 0.0
    %2519 = vmatprep.subr.mxu0 0.0
    %2520 = vmatpush2.msra.mxu0 0.0
    %2521 = vmatprep.subr.mxu0 0.0
    %2522 = vmatpush2.msra.mxu0 0.0
    %2523 = vmatprep.mubr.f32.mxu0 0.0
    %v2524 = vand.u32 %v769, 4294901760
    %v2525 = vsub.f32 %v769, %v2524
    %v2526 = vand.u32 %v2525, 4294901760
    %2527 = vmatmul.mubr.f32.gmra.mxu0 %v2526
    %v2528 = vpop.f32.mrf.mxu0
    %v2529 = vadd.f32 %v2440, %v2528
    %v2530 = vpop.f32.mrf.mxu0
    %2531 = vdwg.mxu0
    %2532 = vmatprep.subr.mxu0 0.0
    %v2533 = vand.u32 %v2089, 4294901760
    %v2534 = vsub.f32 %v2089, %v2533
    %v2535 = vand.u32 %v2534, 4294901760
    %2536 = vmatpush1.msra.mxu0 %v2535
    %2537 = vmatprep.subr.mxu0 0.0
    %v2538 = vand.u32 %v2088, 4294901760
    %v2539 = vsub.f32 %v2088, %v2538
    %v2540 = vand.u32 %v2539, 4294901760
    %2541 = vmatpush1.msra.mxu0 %v2540
    %2542 = vmatprep.subr.mxu0 0.0
    %v2543 = vand.u32 %v2087, 4294901760
    %v2544 = vsub.f32 %v2087, %v2543
    %v2545 = vand.u32 %v2544, 4294901760
    %2546 = vmatpush1.msra.mxu0 %v2545
    %2547 = vmatprep.subr.mxu0 0.0
    %v2548 = vand.u32 %v2086, 4294901760
    %v2549 = vsub.f32 %v2086, %v2548
    %v2550 = vand.u32 %v2549, 4294901760
    %2551 = vmatpush1.msra.mxu0 %v2550
    %2552 = vmatprep.subr.mxu0 0.0
    %v2553 = vand.u32 %v2085, 4294901760
    %v2554 = vsub.f32 %v2085, %v2553
    %v2555 = vand.u32 %v2554, 4294901760
    %2556 = vmatpush1.msra.mxu0 %v2555
    %2557 = vmatprep.subr.mxu0 0.0
    %v2558 = vand.u32 %v2084, 4294901760
    %v2559 = vsub.f32 %v2084, %v2558
    %v2560 = vand.u32 %v2559, 4294901760
    %2561 = vmatpush1.msra.mxu0 %v2560
    %2562 = vmatprep.subr.mxu0 0.0
    %v2563 = vand.u32 %v2083, 4294901760
    %v2564 = vsub.f32 %v2083, %v2563
    %v2565 = vand.u32 %v2564, 4294901760
    %2566 = vmatpush1.msra.mxu0 %v2565
    %2567 = vmatprep.subr.mxu0 0.0
    %v2568 = vand.u32 %v2082, 4294901760
    %v2569 = vsub.f32 %v2082, %v2568
    %v2570 = vand.u32 %v2569, 4294901760
    %2571 = vmatpush1.msra.mxu0 %v2570
    %2572 = vmatprep.subr.mxu0 0.0
    %v2573 = vand.u32 %v2081, 4294901760
    %v2574 = vsub.f32 %v2081, %v2573
    %v2575 = vand.u32 %v2574, 4294901760
    %2576 = vmatpush1.msra.mxu0 %v2575
    %2577 = vmatprep.subr.mxu0 0.0
    %v2578 = vand.u32 %v2080, 4294901760
    %v2579 = vsub.f32 %v2080, %v2578
    %v2580 = vand.u32 %v2579, 4294901760
    %2581 = vmatpush1.msra.mxu0 %v2580
    %2582 = vmatprep.subr.mxu0 0.0
    %v2583 = vand.u32 %v2079, 4294901760
    %v2584 = vsub.f32 %v2079, %v2583
    %v2585 = vand.u32 %v2584, 4294901760
    %2586 = vmatpush1.msra.mxu0 %v2585
    %2587 = vmatprep.subr.mxu0 0.0
    %v2588 = vand.u32 %v2078, 4294901760
    %v2589 = vsub.f32 %v2078, %v2588
    %v2590 = vand.u32 %v2589, 4294901760
    %2591 = vmatpush1.msra.mxu0 %v2590
    %2592 = vmatprep.subr.mxu0 0.0
    %v2593 = vand.u32 %v2077, 4294901760
    %v2594 = vsub.f32 %v2077, %v2593
    %v2595 = vand.u32 %v2594, 4294901760
    %2596 = vmatpush1.msra.mxu0 %v2595
    %2597 = vmatprep.subr.mxu0 0.0
    %v2598 = vand.u32 %v2076, 4294901760
    %v2599 = vsub.f32 %v2076, %v2598
    %v2600 = vand.u32 %v2599, 4294901760
    %2601 = vmatpush1.msra.mxu0 %v2600
    %2602 = vmatprep.subr.mxu0 0.0
    %v2603 = vand.u32 %v2075, 4294901760
    %v2604 = vsub.f32 %v2075, %v2603
    %v2605 = vand.u32 %v2604, 4294901760
    %2606 = vmatpush1.msra.mxu0 %v2605
    %2607 = vmatprep.subr.mxu0 0.0
    %v2608 = vand.u32 %v2074, 4294901760
    %v2609 = vsub.f32 %v2074, %v2608
    %v2610 = vand.u32 %v2609, 4294901760
    %2611 = vmatpush1.msra.mxu0 %v2610
    %2612 = vmatprep.subr.mxu0 0.0
    %2613 = vmatpush2.msra.mxu0 0.0
    %2614 = vmatprep.subr.mxu0 0.0
    %2615 = vmatpush2.msra.mxu0 0.0
    %2616 = vmatprep.subr.mxu0 0.0
    %2617 = vmatpush2.msra.mxu0 0.0
    %2618 = vmatprep.subr.mxu0 0.0
    %2619 = vmatpush2.msra.mxu0 0.0
    %2620 = vmatprep.subr.mxu0 0.0
    %2621 = vmatpush2.msra.mxu0 0.0
    %2622 = vmatprep.subr.mxu0 0.0
    %2623 = vmatpush2.msra.mxu0 0.0
    %2624 = vmatprep.subr.mxu0 0.0
    %2625 = vmatpush2.msra.mxu0 0.0
    %2626 = vmatprep.subr.mxu0 0.0
    %2627 = vmatpush2.msra.mxu0 0.0
    %2628 = vmatprep.subr.mxu0 0.0
    %2629 = vmatpush2.msra.mxu0 0.0
    %2630 = vmatprep.subr.mxu0 0.0
    %2631 = vmatpush2.msra.mxu0 0.0
    %2632 = vmatprep.subr.mxu0 0.0
    %2633 = vmatpush2.msra.mxu0 0.0
    %2634 = vmatprep.subr.mxu0 0.0
    %2635 = vmatpush2.msra.mxu0 0.0
    %2636 = vmatprep.subr.mxu0 0.0
    %2637 = vmatpush2.msra.mxu0 0.0
    %2638 = vmatprep.subr.mxu0 0.0
    %2639 = vmatpush2.msra.mxu0 0.0
    %2640 = vmatprep.subr.mxu0 0.0
    %2641 = vmatpush2.msra.mxu0 0.0
    %2642 = vmatprep.subr.mxu0 0.0
    %2643 = vmatpush2.msra.mxu0 0.0
    %2644 = vmatprep.mubr.f32.mxu0 0.0
    %v2645 = vand.u32 %v769, 4294901760
    %2646 = vmatmul.mubr.f32.gmra.mxu0 %v2645
    %v2647 = vpop.f32.mrf.mxu0
    %v2648 = vadd.f32 %v2529, %v2647
    %v2649 = vpop.f32.mrf.mxu0
    %2650 = vdwg.mxu0
    %2651 = vmatprep.subr.mxu0 0.0
    %v2652 = vand.u32 %v2089, 4294901760
    %2653 = vmatpush1.msra.mxu0 %v2652
    %2654 = vmatprep.subr.mxu0 0.0
    %v2655 = vand.u32 %v2088, 4294901760
    %2656 = vmatpush1.msra.mxu0 %v2655
    %2657 = vmatprep.subr.mxu0 0.0
    %v2658 = vand.u32 %v2087, 4294901760
    %2659 = vmatpush1.msra.mxu0 %v2658
    %2660 = vmatprep.subr.mxu0 0.0
    %v2661 = vand.u32 %v2086, 4294901760
    %2662 = vmatpush1.msra.mxu0 %v2661
    %2663 = vmatprep.subr.mxu0 0.0
    %v2664 = vand.u32 %v2085, 4294901760
    %2665 = vmatpush1.msra.mxu0 %v2664
    %2666 = vmatprep.subr.mxu0 0.0
    %v2667 = vand.u32 %v2084, 4294901760
    %2668 = vmatpush1.msra.mxu0 %v2667
    %2669 = vmatprep.subr.mxu0 0.0
    %v2670 = vand.u32 %v2083, 4294901760
    %2671 = vmatpush1.msra.mxu0 %v2670
    %2672 = vmatprep.subr.mxu0 0.0
    %v2673 = vand.u32 %v2082, 4294901760
    %2674 = vmatpush1.msra.mxu0 %v2673
    %2675 = vmatprep.subr.mxu0 0.0
    %v2676 = vand.u32 %v2081, 4294901760
    %2677 = vmatpush1.msra.mxu0 %v2676
    %2678 = vmatprep.subr.mxu0 0.0
    %v2679 = vand.u32 %v2080, 4294901760
    %2680 = vmatpush1.msra.mxu0 %v2679
    %2681 = vmatprep.subr.mxu0 0.0
    %v2682 = vand.u32 %v2079, 4294901760
    %2683 = vmatpush1.msra.mxu0 %v2682
    %2684 = vmatprep.subr.mxu0 0.0
    %v2685 = vand.u32 %v2078, 4294901760
    %2686 = vmatpush1.msra.mxu0 %v2685
    %2687 = vmatprep.subr.mxu0 0.0
    %v2688 = vand.u32 %v2077, 4294901760
    %2689 = vmatpush1.msra.mxu0 %v2688
    %2690 = vmatprep.subr.mxu0 0.0
    %v2691 = vand.u32 %v2076, 4294901760
    %2692 = vmatpush1.msra.mxu0 %v2691
    %2693 = vmatprep.subr.mxu0 0.0
    %v2694 = vand.u32 %v2075, 4294901760
    %2695 = vmatpush1.msra.mxu0 %v2694
    %2696 = vmatprep.subr.mxu0 0.0
    %v2697 = vand.u32 %v2074, 4294901760
    %2698 = vmatpush1.msra.mxu0 %v2697
    %2699 = vmatprep.subr.mxu0 0.0
    %2700 = vmatpush2.msra.mxu0 0.0
    %2701 = vmatprep.subr.mxu0 0.0
    %2702 = vmatpush2.msra.mxu0 0.0
    %2703 = vmatprep.subr.mxu0 0.0
    %2704 = vmatpush2.msra.mxu0 0.0
    %2705 = vmatprep.subr.mxu0 0.0
    %2706 = vmatpush2.msra.mxu0 0.0
    %2707 = vmatprep.subr.mxu0 0.0
    %2708 = vmatpush2.msra.mxu0 0.0
    %2709 = vmatprep.subr.mxu0 0.0
    %2710 = vmatpush2.msra.mxu0 0.0
    %2711 = vmatprep.subr.mxu0 0.0
    %2712 = vmatpush2.msra.mxu0 0.0
    %2713 = vmatprep.subr.mxu0 0.0
    %2714 = vmatpush2.msra.mxu0 0.0
    %2715 = vmatprep.subr.mxu0 0.0
    %2716 = vmatpush2.msra.mxu0 0.0
    %2717 = vmatprep.subr.mxu0 0.0
    %2718 = vmatpush2.msra.mxu0 0.0
    %2719 = vmatprep.subr.mxu0 0.0
    %2720 = vmatpush2.msra.mxu0 0.0
    %2721 = vmatprep.subr.mxu0 0.0
    %2722 = vmatpush2.msra.mxu0 0.0
    %2723 = vmatprep.subr.mxu0 0.0
    %2724 = vmatpush2.msra.mxu0 0.0
    %2725 = vmatprep.subr.mxu0 0.0
    %2726 = vmatpush2.msra.mxu0 0.0
    %2727 = vmatprep.subr.mxu0 0.0
    %2728 = vmatpush2.msra.mxu0 0.0
    %2729 = vmatprep.subr.mxu0 0.0
    %2730 = vmatpush2.msra.mxu0 0.0
    %2731 = vmatprep.mubr.f32.mxu0 0.0
    %v2732 = vand.u32 %v769, 4294901760
    %2733 = vmatmul.mubr.f32.gmra.mxu0 %v2732
    %v2734 = vpop.f32.mrf.mxu0
    %v2735 = vadd.f32 %v2648, %v2734
    %v2736 = vpop.f32.mrf.mxu0
    %2737 = vdwg.mxu0
    %v2738 = vmax.f32 %v2735, 0.0
    %v2739 = vld [vmem:[#allocation9] sm:$0xff]
    %v2740 = vld [vmem:[#allocation9 + $0x8] sm:$0xff]
    %v2741 = vld [vmem:[#allocation9 + $0x10] sm:$0xff]
    %v2742 = vld [vmem:[#allocation9 + $0x18] sm:$0xff]
    %v2743 = vld [vmem:[#allocation9 + $0x20] sm:$0xff]
    %v2744 = vld [vmem:[#allocation9 + $0x28] sm:$0xff]
    %v2745 = vld [vmem:[#allocation9 + $0x30] sm:$0xff]
    %v2746 = vld [vmem:[#allocation9 + $0x38] sm:$0xff]
    %v2747 = vld [vmem:[#allocation9 + $0x40] sm:$0xff]
    %v2748 = vld [vmem:[#allocation9 + $0x48] sm:$0xff]
    %v2749 = vld [vmem:[#allocation9 + $0x50] sm:$0xff]
    %v2750 = vld [vmem:[#allocation9 + $0x58] sm:$0xff]
    %v2751 = vld [vmem:[#allocation9 + $0x60] sm:$0xff]
    %v2752 = vld [vmem:[#allocation9 + $0x68] sm:$0xff]
    %v2753 = vld [vmem:[#allocation9 + $0x70] sm:$0xff]
    %v2754 = vld [vmem:[#allocation9 + $0x78] sm:$0xff]
    %v2755 = vld [vmem:[%s7] sm:$0x1]
    %v2757 = vlaneseq
    %v2758 = vshrl.u32 %v2757, 7
    %v2759 = vsub.s32 0, %v2758
    %v2760 = vrot.slane %v2755, %v2759
    %2762 = vmatprep.subr.mxu0 0.0
    %v2763 = vand.u32 %v2754, 4294901760
    %2764 = vmatpush1.msra.mxu0 %v2763
    %2765 = vmatprep.subr.mxu0 0.0
    %v2766 = vand.u32 %v2753, 4294901760
    %2767 = vmatpush1.msra.mxu0 %v2766
    %2768 = vmatprep.subr.mxu0 0.0
    %v2769 = vand.u32 %v2752, 4294901760
    %2770 = vmatpush1.msra.mxu0 %v2769
    %2771 = vmatprep.subr.mxu0 0.0
    %v2772 = vand.u32 %v2751, 4294901760
    %2773 = vmatpush1.msra.mxu0 %v2772
    %2774 = vmatprep.subr.mxu0 0.0
    %v2775 = vand.u32 %v2750, 4294901760
    %2776 = vmatpush1.msra.mxu0 %v2775
    %2777 = vmatprep.subr.mxu0 0.0
    %v2778 = vand.u32 %v2749, 4294901760
    %2779 = vmatpush1.msra.mxu0 %v2778
    %2780 = vmatprep.subr.mxu0 0.0
    %v2781 = vand.u32 %v2748, 4294901760
    %2782 = vmatpush1.msra.mxu0 %v2781
    %2783 = vmatprep.subr.mxu0 0.0
    %v2784 = vand.u32 %v2747, 4294901760
    %2785 = vmatpush1.msra.mxu0 %v2784
    %2786 = vmatprep.subr.mxu0 0.0
    %v2787 = vand.u32 %v2746, 4294901760
    %2788 = vmatpush1.msra.mxu0 %v2787
    %2789 = vmatprep.subr.mxu0 0.0
    %v2790 = vand.u32 %v2745, 4294901760
    %2791 = vmatpush1.msra.mxu0 %v2790
    %2792 = vmatprep.subr.mxu0 0.0
    %v2793 = vand.u32 %v2744, 4294901760
    %2794 = vmatpush1.msra.mxu0 %v2793
    %2795 = vmatprep.subr.mxu0 0.0
    %v2796 = vand.u32 %v2743, 4294901760
    %2797 = vmatpush1.msra.mxu0 %v2796
    %2798 = vmatprep.subr.mxu0 0.0
    %v2799 = vand.u32 %v2742, 4294901760
    %2800 = vmatpush1.msra.mxu0 %v2799
    %2801 = vmatprep.subr.mxu0 0.0
    %v2802 = vand.u32 %v2741, 4294901760
    %2803 = vmatpush1.msra.mxu0 %v2802
    %2804 = vmatprep.subr.mxu0 0.0
    %v2805 = vand.u32 %v2740, 4294901760
    %2806 = vmatpush1.msra.mxu0 %v2805
    %2807 = vmatprep.subr.mxu0 0.0
    %v2808 = vand.u32 %v2739, 4294901760
    %2809 = vmatpush1.msra.mxu0 %v2808
    %2810 = vmatprep.subr.mxu0 0.0
    %2811 = vmatpush2.msra.mxu0 0.0
    %2812 = vmatprep.subr.mxu0 0.0
    %2813 = vmatpush2.msra.mxu0 0.0
    %2814 = vmatprep.subr.mxu0 0.0
    %2815 = vmatpush2.msra.mxu0 0.0
    %2816 = vmatprep.subr.mxu0 0.0
    %2817 = vmatpush2.msra.mxu0 0.0
    %2818 = vmatprep.subr.mxu0 0.0
    %2819 = vmatpush2.msra.mxu0 0.0
    %2820 = vmatprep.subr.mxu0 0.0
    %2821 = vmatpush2.msra.mxu0 0.0
    %2822 = vmatprep.subr.mxu0 0.0
    %2823 = vmatpush2.msra.mxu0 0.0
    %2824 = vmatprep.subr.mxu0 0.0
    %2825 = vmatpush2.msra.mxu0 0.0
    %2826 = vmatprep.subr.mxu0 0.0
    %2827 = vmatpush2.msra.mxu0 0.0
    %2828 = vmatprep.subr.mxu0 0.0
    %2829 = vmatpush2.msra.mxu0 0.0
    %2830 = vmatprep.subr.mxu0 0.0
    %2831 = vmatpush2.msra.mxu0 0.0
    %2832 = vmatprep.subr.mxu0 0.0
    %2833 = vmatpush2.msra.mxu0 0.0
    %2834 = vmatprep.subr.mxu0 0.0
    %2835 = vmatpush2.msra.mxu0 0.0
    %2836 = vmatprep.subr.mxu0 0.0
    %2837 = vmatpush2.msra.mxu0 0.0
    %2838 = vmatprep.subr.mxu0 0.0
    %2839 = vmatpush2.msra.mxu0 0.0
    %2840 = vmatprep.subr.mxu0 0.0
    %2841 = vmatpush2.msra.mxu0 0.0
    %2842 = vmatprep.mubr.f32.mxu0 0.0
    %v2843 = vand.u32 %v2738, 4294901760
    %v2844 = vsub.f32 %v2738, %v2843
    %v2845 = vand.u32 %v2844, 4294901760
    %v2846 = vsub.f32 %v2844, %v2845
    %v2847 = vand.u32 %v2846, 4294901760
    %2848 = vmatmul.mubr.f32.gmra.mxu0 %v2847
    %v2849 = vpop.f32.mrf.mxu0
    %v2850 = vadd.f32 %v2760, %v2849
    %v2851 = vpop.f32.mrf.mxu0
    %2852 = vdwg.mxu0
    %2853 = vmatprep.subr.mxu0 0.0
    %v2854 = vand.u32 %v2754, 4294901760
    %v2855 = vsub.f32 %v2754, %v2854
    %v2856 = vand.u32 %v2855, 4294901760
    %v2857 = vsub.f32 %v2855, %v2856
    %v2858 = vand.u32 %v2857, 4294901760
    %2859 = vmatpush1.msra.mxu0 %v2858
    %2860 = vmatprep.subr.mxu0 0.0
    %v2861 = vand.u32 %v2753, 4294901760
    %v2862 = vsub.f32 %v2753, %v2861
    %v2863 = vand.u32 %v2862, 4294901760
    %v2864 = vsub.f32 %v2862, %v2863
    %v2865 = vand.u32 %v2864, 4294901760
    %2866 = vmatpush1.msra.mxu0 %v2865
    %2867 = vmatprep.subr.mxu0 0.0
    %v2868 = vand.u32 %v2752, 4294901760
    %v2869 = vsub.f32 %v2752, %v2868
    %v2870 = vand.u32 %v2869, 4294901760
    %v2871 = vsub.f32 %v2869, %v2870
    %v2872 = vand.u32 %v2871, 4294901760
    %2873 = vmatpush1.msra.mxu0 %v2872
    %2874 = vmatprep.subr.mxu0 0.0
    %v2875 = vand.u32 %v2751, 4294901760
    %v2876 = vsub.f32 %v2751, %v2875
    %v2877 = vand.u32 %v2876, 4294901760
    %v2878 = vsub.f32 %v2876, %v2877
    %v2879 = vand.u32 %v2878, 4294901760
    %2880 = vmatpush1.msra.mxu0 %v2879
    %2881 = vmatprep.subr.mxu0 0.0
    %v2882 = vand.u32 %v2750, 4294901760
    %v2883 = vsub.f32 %v2750, %v2882
    %v2884 = vand.u32 %v2883, 4294901760
    %v2885 = vsub.f32 %v2883, %v2884
    %v2886 = vand.u32 %v2885, 4294901760
    %2887 = vmatpush1.msra.mxu0 %v2886
    %2888 = vmatprep.subr.mxu0 0.0
    %v2889 = vand.u32 %v2749, 4294901760
    %v2890 = vsub.f32 %v2749, %v2889
    %v2891 = vand.u32 %v2890, 4294901760
    %v2892 = vsub.f32 %v2890, %v2891
    %v2893 = vand.u32 %v2892, 4294901760
    %2894 = vmatpush1.msra.mxu0 %v2893
    %2895 = vmatprep.subr.mxu0 0.0
    %v2896 = vand.u32 %v2748, 4294901760
    %v2897 = vsub.f32 %v2748, %v2896
    %v2898 = vand.u32 %v2897, 4294901760
    %v2899 = vsub.f32 %v2897, %v2898
    %v2900 = vand.u32 %v2899, 4294901760
    %2901 = vmatpush1.msra.mxu0 %v2900
    %2902 = vmatprep.subr.mxu0 0.0
    %v2903 = vand.u32 %v2747, 4294901760
    %v2904 = vsub.f32 %v2747, %v2903
    %v2905 = vand.u32 %v2904, 4294901760
    %v2906 = vsub.f32 %v2904, %v2905
    %v2907 = vand.u32 %v2906, 4294901760
    %2908 = vmatpush1.msra.mxu0 %v2907
    %2909 = vmatprep.subr.mxu0 0.0
    %v2910 = vand.u32 %v2746, 4294901760
    %v2911 = vsub.f32 %v2746, %v2910
    %v2912 = vand.u32 %v2911, 4294901760
    %v2913 = vsub.f32 %v2911, %v2912
    %v2914 = vand.u32 %v2913, 4294901760
    %2915 = vmatpush1.msra.mxu0 %v2914
    %2916 = vmatprep.subr.mxu0 0.0
    %v2917 = vand.u32 %v2745, 4294901760
    %v2918 = vsub.f32 %v2745, %v2917
    %v2919 = vand.u32 %v2918, 4294901760
    %v2920 = vsub.f32 %v2918, %v2919
    %v2921 = vand.u32 %v2920, 4294901760
    %2922 = vmatpush1.msra.mxu0 %v2921
    %2923 = vmatprep.subr.mxu0 0.0
    %v2924 = vand.u32 %v2744, 4294901760
    %v2925 = vsub.f32 %v2744, %v2924
    %v2926 = vand.u32 %v2925, 4294901760
    %v2927 = vsub.f32 %v2925, %v2926
    %v2928 = vand.u32 %v2927, 4294901760
    %2929 = vmatpush1.msra.mxu0 %v2928
    %2930 = vmatprep.subr.mxu0 0.0
    %v2931 = vand.u32 %v2743, 4294901760
    %v2932 = vsub.f32 %v2743, %v2931
    %v2933 = vand.u32 %v2932, 4294901760
    %v2934 = vsub.f32 %v2932, %v2933
    %v2935 = vand.u32 %v2934, 4294901760
    %2936 = vmatpush1.msra.mxu0 %v2935
    %2937 = vmatprep.subr.mxu0 0.0
    %v2938 = vand.u32 %v2742, 4294901760
    %v2939 = vsub.f32 %v2742, %v2938
    %v2940 = vand.u32 %v2939, 4294901760
    %v2941 = vsub.f32 %v2939, %v2940
    %v2942 = vand.u32 %v2941, 4294901760
    %2943 = vmatpush1.msra.mxu0 %v2942
    %2944 = vmatprep.subr.mxu0 0.0
    %v2945 = vand.u32 %v2741, 4294901760
    %v2946 = vsub.f32 %v2741, %v2945
    %v2947 = vand.u32 %v2946, 4294901760
    %v2948 = vsub.f32 %v2946, %v2947
    %v2949 = vand.u32 %v2948, 4294901760
    %2950 = vmatpush1.msra.mxu0 %v2949
    %2951 = vmatprep.subr.mxu0 0.0
    %v2952 = vand.u32 %v2740, 4294901760
    %v2953 = vsub.f32 %v2740, %v2952
    %v2954 = vand.u32 %v2953, 4294901760
    %v2955 = vsub.f32 %v2953, %v2954
    %v2956 = vand.u32 %v2955, 4294901760
    %2957 = vmatpush1.msra.mxu0 %v2956
    %2958 = vmatprep.subr.mxu0 0.0
    %v2959 = vand.u32 %v2739, 4294901760
    %v2960 = vsub.f32 %v2739, %v2959
    %v2961 = vand.u32 %v2960, 4294901760
    %v2962 = vsub.f32 %v2960, %v2961
    %v2963 = vand.u32 %v2962, 4294901760
    %2964 = vmatpush1.msra.mxu0 %v2963
    %2965 = vmatprep.subr.mxu0 0.0
    %2966 = vmatpush2.msra.mxu0 0.0
    %2967 = vmatprep.subr.mxu0 0.0
    %2968 = vmatpush2.msra.mxu0 0.0
    %2969 = vmatprep.subr.mxu0 0.0
    %2970 = vmatpush2.msra.mxu0 0.0
    %2971 = vmatprep.subr.mxu0 0.0
    %2972 = vmatpush2.msra.mxu0 0.0
    %2973 = vmatprep.subr.mxu0 0.0
    %2974 = vmatpush2.msra.mxu0 0.0
    %2975 = vmatprep.subr.mxu0 0.0
    %2976 = vmatpush2.msra.mxu0 0.0
    %2977 = vmatprep.subr.mxu0 0.0
    %2978 = vmatpush2.msra.mxu0 0.0
    %2979 = vmatprep.subr.mxu0 0.0
    %2980 = vmatpush2.msra.mxu0 0.0
    %2981 = vmatprep.subr.mxu0 0.0
    %2982 = vmatpush2.msra.mxu0 0.0
    %2983 = vmatprep.subr.mxu0 0.0
    %2984 = vmatpush2.msra.mxu0 0.0
    %2985 = vmatprep.subr.mxu0 0.0
    %2986 = vmatpush2.msra.mxu0 0.0
    %2987 = vmatprep.subr.mxu0 0.0
    %2988 = vmatpush2.msra.mxu0 0.0
    %2989 = vmatprep.subr.mxu0 0.0
    %2990 = vmatpush2.msra.mxu0 0.0
    %2991 = vmatprep.subr.mxu0 0.0
    %2992 = vmatpush2.msra.mxu0 0.0
    %2993 = vmatprep.subr.mxu0 0.0
    %2994 = vmatpush2.msra.mxu0 0.0
    %2995 = vmatprep.subr.mxu0 0.0
    %2996 = vmatpush2.msra.mxu0 0.0
    %2997 = vmatprep.mubr.f32.mxu0 0.0
    %v2998 = vand.u32 %v2738, 4294901760
    %2999 = vmatmul.mubr.f32.gmra.mxu0 %v2998
    %v3000 = vpop.f32.mrf.mxu0
    %v3001 = vadd.f32 %v2850, %v3000
    %v3002 = vpop.f32.mrf.mxu0
    %3003 = vdwg.mxu0
    %3004 = vmatprep.subr.mxu0 0.0
    %v3005 = vand.u32 %v2754, 4294901760
    %v3006 = vsub.f32 %v2754, %v3005
    %3007 = vmatpush1.msra.mxu0 %v3006
    %3008 = vmatprep.subr.mxu0 0.0
    %v3009 = vand.u32 %v2753, 4294901760
    %v3010 = vsub.f32 %v2753, %v3009
    %3011 = vmatpush1.msra.mxu0 %v3010
    %3012 = vmatprep.subr.mxu0 0.0
    %v3013 = vand.u32 %v2752, 4294901760
    %v3014 = vsub.f32 %v2752, %v3013
    %3015 = vmatpush1.msra.mxu0 %v3014
    %3016 = vmatprep.subr.mxu0 0.0
    %v3017 = vand.u32 %v2751, 4294901760
    %v3018 = vsub.f32 %v2751, %v3017
    %3019 = vmatpush1.msra.mxu0 %v3018
    %3020 = vmatprep.subr.mxu0 0.0
    %v3021 = vand.u32 %v2750, 4294901760
    %v3022 = vsub.f32 %v2750, %v3021
    %3023 = vmatpush1.msra.mxu0 %v3022
    %3024 = vmatprep.subr.mxu0 0.0
    %v3025 = vand.u32 %v2749, 4294901760
    %v3026 = vsub.f32 %v2749, %v3025
    %3027 = vmatpush1.msra.mxu0 %v3026
    %3028 = vmatprep.subr.mxu0 0.0
    %v3029 = vand.u32 %v2748, 4294901760
    %v3030 = vsub.f32 %v2748, %v3029
    %3031 = vmatpush1.msra.mxu0 %v3030
    %3032 = vmatprep.subr.mxu0 0.0
    %v3033 = vand.u32 %v2747, 4294901760
    %v3034 = vsub.f32 %v2747, %v3033
    %3035 = vmatpush1.msra.mxu0 %v3034
    %3036 = vmatprep.subr.mxu0 0.0
    %v3037 = vand.u32 %v2746, 4294901760
    %v3038 = vsub.f32 %v2746, %v3037
    %3039 = vmatpush1.msra.mxu0 %v3038
    %3040 = vmatprep.subr.mxu0 0.0
    %v3041 = vand.u32 %v2745, 4294901760
    %v3042 = vsub.f32 %v2745, %v3041
    %3043 = vmatpush1.msra.mxu0 %v3042
    %3044 = vmatprep.subr.mxu0 0.0
    %v3045 = vand.u32 %v2744, 4294901760
    %v3046 = vsub.f32 %v2744, %v3045
    %3047 = vmatpush1.msra.mxu0 %v3046
    %3048 = vmatprep.subr.mxu0 0.0
    %v3049 = vand.u32 %v2743, 4294901760
    %v3050 = vsub.f32 %v2743, %v3049
    %3051 = vmatpush1.msra.mxu0 %v3050
    %3052 = vmatprep.subr.mxu0 0.0
    %v3053 = vand.u32 %v2742, 4294901760
    %v3054 = vsub.f32 %v2742, %v3053
    %3055 = vmatpush1.msra.mxu0 %v3054
    %3056 = vmatprep.subr.mxu0 0.0
    %v3057 = vand.u32 %v2741, 4294901760
    %v3058 = vsub.f32 %v2741, %v3057
    %3059 = vmatpush1.msra.mxu0 %v3058
    %3060 = vmatprep.subr.mxu0 0.0
    %v3061 = vand.u32 %v2740, 4294901760
    %v3062 = vsub.f32 %v2740, %v3061
    %3063 = vmatpush1.msra.mxu0 %v3062
    %3064 = vmatprep.subr.mxu0 0.0
    %v3065 = vand.u32 %v2739, 4294901760
    %v3066 = vsub.f32 %v2739, %v3065
    %3067 = vmatpush1.msra.mxu0 %v3066
    %3068 = vmatprep.subr.mxu0 0.0
    %3069 = vmatpush2.msra.mxu0 0.0
    %3070 = vmatprep.subr.mxu0 0.0
    %3071 = vmatpush2.msra.mxu0 0.0
    %3072 = vmatprep.subr.mxu0 0.0
    %3073 = vmatpush2.msra.mxu0 0.0
    %3074 = vmatprep.subr.mxu0 0.0
    %3075 = vmatpush2.msra.mxu0 0.0
    %3076 = vmatprep.subr.mxu0 0.0
    %3077 = vmatpush2.msra.mxu0 0.0
    %3078 = vmatprep.subr.mxu0 0.0
    %3079 = vmatpush2.msra.mxu0 0.0
    %3080 = vmatprep.subr.mxu0 0.0
    %3081 = vmatpush2.msra.mxu0 0.0
    %3082 = vmatprep.subr.mxu0 0.0
    %3083 = vmatpush2.msra.mxu0 0.0
    %3084 = vmatprep.subr.mxu0 0.0
    %3085 = vmatpush2.msra.mxu0 0.0
    %3086 = vmatprep.subr.mxu0 0.0
    %3087 = vmatpush2.msra.mxu0 0.0
    %3088 = vmatprep.subr.mxu0 0.0
    %3089 = vmatpush2.msra.mxu0 0.0
    %3090 = vmatprep.subr.mxu0 0.0
    %3091 = vmatpush2.msra.mxu0 0.0
    %3092 = vmatprep.subr.mxu0 0.0
    %3093 = vmatpush2.msra.mxu0 0.0
    %3094 = vmatprep.subr.mxu0 0.0
    %3095 = vmatpush2.msra.mxu0 0.0
    %3096 = vmatprep.subr.mxu0 0.0
    %3097 = vmatpush2.msra.mxu0 0.0
    %3098 = vmatprep.subr.mxu0 0.0
    %3099 = vmatpush2.msra.mxu0 0.0
    %3100 = vmatprep.mubr.f32.mxu0 0.0
    %v3101 = vand.u32 %v2738, 4294901760
    %v3102 = vsub.f32 %v2738, %v3101
    %3103 = vmatmul.mubr.f32.gmra.mxu0 %v3102
    %v3104 = vpop.f32.mrf.mxu0
    %v3105 = vadd.f32 %v3001, %v3104
    %v3106 = vpop.f32.mrf.mxu0
    %3107 = vdwg.mxu0
    %3108 = vmatprep.subr.mxu0 0.0
    %v3109 = vand.u32 %v2754, 4294901760
    %3110 = vmatpush1.msra.mxu0 %v3109
    %3111 = vmatprep.subr.mxu0 0.0
    %v3112 = vand.u32 %v2753, 4294901760
    %3113 = vmatpush1.msra.mxu0 %v3112
    %3114 = vmatprep.subr.mxu0 0.0
    %v3115 = vand.u32 %v2752, 4294901760
    %3116 = vmatpush1.msra.mxu0 %v3115
    %3117 = vmatprep.subr.mxu0 0.0
    %v3118 = vand.u32 %v2751, 4294901760
    %3119 = vmatpush1.msra.mxu0 %v3118
    %3120 = vmatprep.subr.mxu0 0.0
    %v3121 = vand.u32 %v2750, 4294901760
    %3122 = vmatpush1.msra.mxu0 %v3121
    %3123 = vmatprep.subr.mxu0 0.0
    %v3124 = vand.u32 %v2749, 4294901760
    %3125 = vmatpush1.msra.mxu0 %v3124
    %3126 = vmatprep.subr.mxu0 0.0
    %v3127 = vand.u32 %v2748, 4294901760
    %3128 = vmatpush1.msra.mxu0 %v3127
    %3129 = vmatprep.subr.mxu0 0.0
    %v3130 = vand.u32 %v2747, 4294901760
    %3131 = vmatpush1.msra.mxu0 %v3130
    %3132 = vmatprep.subr.mxu0 0.0
    %v3133 = vand.u32 %v2746, 4294901760
    %3134 = vmatpush1.msra.mxu0 %v3133
    %3135 = vmatprep.subr.mxu0 0.0
    %v3136 = vand.u32 %v2745, 4294901760
    %3137 = vmatpush1.msra.mxu0 %v3136
    %3138 = vmatprep.subr.mxu0 0.0
    %v3139 = vand.u32 %v2744, 4294901760
    %3140 = vmatpush1.msra.mxu0 %v3139
    %3141 = vmatprep.subr.mxu0 0.0
    %v3142 = vand.u32 %v2743, 4294901760
    %3143 = vmatpush1.msra.mxu0 %v3142
    %3144 = vmatprep.subr.mxu0 0.0
    %v3145 = vand.u32 %v2742, 4294901760
    %3146 = vmatpush1.msra.mxu0 %v3145
    %3147 = vmatprep.subr.mxu0 0.0
    %v3148 = vand.u32 %v2741, 4294901760
    %3149 = vmatpush1.msra.mxu0 %v3148
    %3150 = vmatprep.subr.mxu0 0.0
    %v3151 = vand.u32 %v2740, 4294901760
    %3152 = vmatpush1.msra.mxu0 %v3151
    %3153 = vmatprep.subr.mxu0 0.0
    %v3154 = vand.u32 %v2739, 4294901760
    %3155 = vmatpush1.msra.mxu0 %v3154
    %3156 = vmatprep.subr.mxu0 0.0
    %3157 = vmatpush2.msra.mxu0 0.0
    %3158 = vmatprep.subr.mxu0 0.0
    %3159 = vmatpush2.msra.mxu0 0.0
    %3160 = vmatprep.subr.mxu0 0.0
    %3161 = vmatpush2.msra.mxu0 0.0
    %3162 = vmatprep.subr.mxu0 0.0
    %3163 = vmatpush2.msra.mxu0 0.0
    %3164 = vmatprep.subr.mxu0 0.0
    %3165 = vmatpush2.msra.mxu0 0.0
    %3166 = vmatprep.subr.mxu0 0.0
    %3167 = vmatpush2.msra.mxu0 0.0
    %3168 = vmatprep.subr.mxu0 0.0
    %3169 = vmatpush2.msra.mxu0 0.0
    %3170 = vmatprep.subr.mxu0 0.0
    %3171 = vmatpush2.msra.mxu0 0.0
    %3172 = vmatprep.subr.mxu0 0.0
    %3173 = vmatpush2.msra.mxu0 0.0
    %3174 = vmatprep.subr.mxu0 0.0
    %3175 = vmatpush2.msra.mxu0 0.0
    %3176 = vmatprep.subr.mxu0 0.0
    %3177 = vmatpush2.msra.mxu0 0.0
    %3178 = vmatprep.subr.mxu0 0.0
    %3179 = vmatpush2.msra.mxu0 0.0
    %3180 = vmatprep.subr.mxu0 0.0
    %3181 = vmatpush2.msra.mxu0 0.0
    %3182 = vmatprep.subr.mxu0 0.0
    %3183 = vmatpush2.msra.mxu0 0.0
    %3184 = vmatprep.subr.mxu0 0.0
    %3185 = vmatpush2.msra.mxu0 0.0
    %3186 = vmatprep.subr.mxu0 0.0
    %3187 = vmatpush2.msra.mxu0 0.0
    %3188 = vmatprep.mubr.f32.mxu0 0.0
    %v3189 = vand.u32 %v2738, 4294901760
    %v3190 = vsub.f32 %v2738, %v3189
    %v3191 = vand.u32 %v3190, 4294901760
    %3192 = vmatmul.mubr.f32.gmra.mxu0 %v3191
    %v3193 = vpop.f32.mrf.mxu0
    %v3194 = vadd.f32 %v3105, %v3193
    %v3195 = vpop.f32.mrf.mxu0
    %3196 = vdwg.mxu0
    %3197 = vmatprep.subr.mxu0 0.0
    %v3198 = vand.u32 %v2754, 4294901760
    %v3199 = vsub.f32 %v2754, %v3198
    %v3200 = vand.u32 %v3199, 4294901760
    %3201 = vmatpush1.msra.mxu0 %v3200
    %3202 = vmatprep.subr.mxu0 0.0
    %v3203 = vand.u32 %v2753, 4294901760
    %v3204 = vsub.f32 %v2753, %v3203
    %v3205 = vand.u32 %v3204, 4294901760
    %3206 = vmatpush1.msra.mxu0 %v3205
    %3207 = vmatprep.subr.mxu0 0.0
    %v3208 = vand.u32 %v2752, 4294901760
    %v3209 = vsub.f32 %v2752, %v3208
    %v3210 = vand.u32 %v3209, 4294901760
    %3211 = vmatpush1.msra.mxu0 %v3210
    %3212 = vmatprep.subr.mxu0 0.0
    %v3213 = vand.u32 %v2751, 4294901760
    %v3214 = vsub.f32 %v2751, %v3213
    %v3215 = vand.u32 %v3214, 4294901760
    %3216 = vmatpush1.msra.mxu0 %v3215
    %3217 = vmatprep.subr.mxu0 0.0
    %v3218 = vand.u32 %v2750, 4294901760
    %v3219 = vsub.f32 %v2750, %v3218
    %v3220 = vand.u32 %v3219, 4294901760
    %3221 = vmatpush1.msra.mxu0 %v3220
    %3222 = vmatprep.subr.mxu0 0.0
    %v3223 = vand.u32 %v2749, 4294901760
    %v3224 = vsub.f32 %v2749, %v3223
    %v3225 = vand.u32 %v3224, 4294901760
    %3226 = vmatpush1.msra.mxu0 %v3225
    %3227 = vmatprep.subr.mxu0 0.0
    %v3228 = vand.u32 %v2748, 4294901760
    %v3229 = vsub.f32 %v2748, %v3228
    %v3230 = vand.u32 %v3229, 4294901760
    %3231 = vmatpush1.msra.mxu0 %v3230
    %3232 = vmatprep.subr.mxu0 0.0
    %v3233 = vand.u32 %v2747, 4294901760
    %v3234 = vsub.f32 %v2747, %v3233
    %v3235 = vand.u32 %v3234, 4294901760
    %3236 = vmatpush1.msra.mxu0 %v3235
    %3237 = vmatprep.subr.mxu0 0.0
    %v3238 = vand.u32 %v2746, 4294901760
    %v3239 = vsub.f32 %v2746, %v3238
    %v3240 = vand.u32 %v3239, 4294901760
    %3241 = vmatpush1.msra.mxu0 %v3240
    %3242 = vmatprep.subr.mxu0 0.0
    %v3243 = vand.u32 %v2745, 4294901760
    %v3244 = vsub.f32 %v2745, %v3243
    %v3245 = vand.u32 %v3244, 4294901760
    %3246 = vmatpush1.msra.mxu0 %v3245
    %3247 = vmatprep.subr.mxu0 0.0
    %v3248 = vand.u32 %v2744, 4294901760
    %v3249 = vsub.f32 %v2744, %v3248
    %v3250 = vand.u32 %v3249, 4294901760
    %3251 = vmatpush1.msra.mxu0 %v3250
    %3252 = vmatprep.subr.mxu0 0.0
    %v3253 = vand.u32 %v2743, 4294901760
    %v3254 = vsub.f32 %v2743, %v3253
    %v3255 = vand.u32 %v3254, 4294901760
    %3256 = vmatpush1.msra.mxu0 %v3255
    %3257 = vmatprep.subr.mxu0 0.0
    %v3258 = vand.u32 %v2742, 4294901760
    %v3259 = vsub.f32 %v2742, %v3258
    %v3260 = vand.u32 %v3259, 4294901760
    %3261 = vmatpush1.msra.mxu0 %v3260
    %3262 = vmatprep.subr.mxu0 0.0
    %v3263 = vand.u32 %v2741, 4294901760
    %v3264 = vsub.f32 %v2741, %v3263
    %v3265 = vand.u32 %v3264, 4294901760
    %3266 = vmatpush1.msra.mxu0 %v3265
    %3267 = vmatprep.subr.mxu0 0.0
    %v3268 = vand.u32 %v2740, 4294901760
    %v3269 = vsub.f32 %v2740, %v3268
    %v3270 = vand.u32 %v3269, 4294901760
    %3271 = vmatpush1.msra.mxu0 %v3270
    %3272 = vmatprep.subr.mxu0 0.0
    %v3273 = vand.u32 %v2739, 4294901760
    %v3274 = vsub.f32 %v2739, %v3273
    %v3275 = vand.u32 %v3274, 4294901760
    %3276 = vmatpush1.msra.mxu0 %v3275
    %3277 = vmatprep.subr.mxu0 0.0
    %3278 = vmatpush2.msra.mxu0 0.0
    %3279 = vmatprep.subr.mxu0 0.0
    %3280 = vmatpush2.msra.mxu0 0.0
    %3281 = vmatprep.subr.mxu0 0.0
    %3282 = vmatpush2.msra.mxu0 0.0
    %3283 = vmatprep.subr.mxu0 0.0
    %3284 = vmatpush2.msra.mxu0 0.0
    %3285 = vmatprep.subr.mxu0 0.0
    %3286 = vmatpush2.msra.mxu0 0.0
    %3287 = vmatprep.subr.mxu0 0.0
    %3288 = vmatpush2.msra.mxu0 0.0
    %3289 = vmatprep.subr.mxu0 0.0
    %3290 = vmatpush2.msra.mxu0 0.0
    %3291 = vmatprep.subr.mxu0 0.0
    %3292 = vmatpush2.msra.mxu0 0.0
    %3293 = vmatprep.subr.mxu0 0.0
    %3294 = vmatpush2.msra.mxu0 0.0
    %3295 = vmatprep.subr.mxu0 0.0
    %3296 = vmatpush2.msra.mxu0 0.0
    %3297 = vmatprep.subr.mxu0 0.0
    %3298 = vmatpush2.msra.mxu0 0.0
    %3299 = vmatprep.subr.mxu0 0.0
    %3300 = vmatpush2.msra.mxu0 0.0
    %3301 = vmatprep.subr.mxu0 0.0
    %3302 = vmatpush2.msra.mxu0 0.0
    %3303 = vmatprep.subr.mxu0 0.0
    %3304 = vmatpush2.msra.mxu0 0.0
    %3305 = vmatprep.subr.mxu0 0.0
    %3306 = vmatpush2.msra.mxu0 0.0
    %3307 = vmatprep.subr.mxu0 0.0
    %3308 = vmatpush2.msra.mxu0 0.0
    %3309 = vmatprep.mubr.f32.mxu0 0.0
    %v3310 = vand.u32 %v2738, 4294901760
    %3311 = vmatmul.mubr.f32.gmra.mxu0 %v3310
    %v3312 = vpop.f32.mrf.mxu0
    %v3313 = vadd.f32 %v3194, %v3312
    %v3314 = vpop.f32.mrf.mxu0
    %3315 = vdwg.mxu0
    %3316 = vmatprep.subr.mxu0 0.0
    %v3317 = vand.u32 %v2754, 4294901760
    %3318 = vmatpush1.msra.mxu0 %v3317
    %3319 = vmatprep.subr.mxu0 0.0
    %v3320 = vand.u32 %v2753, 4294901760
    %3321 = vmatpush1.msra.mxu0 %v3320
    %3322 = vmatprep.subr.mxu0 0.0
    %v3323 = vand.u32 %v2752, 4294901760
    %3324 = vmatpush1.msra.mxu0 %v3323
    %3325 = vmatprep.subr.mxu0 0.0
    %v3326 = vand.u32 %v2751, 4294901760
    %3327 = vmatpush1.msra.mxu0 %v3326
    %3328 = vmatprep.subr.mxu0 0.0
    %v3329 = vand.u32 %v2750, 4294901760
    %3330 = vmatpush1.msra.mxu0 %v3329
    %3331 = vmatprep.subr.mxu0 0.0
    %v3332 = vand.u32 %v2749, 4294901760
    %3333 = vmatpush1.msra.mxu0 %v3332
    %3334 = vmatprep.subr.mxu0 0.0
    %v3335 = vand.u32 %v2748, 4294901760
    %3336 = vmatpush1.msra.mxu0 %v3335
    %3337 = vmatprep.subr.mxu0 0.0
    %v3338 = vand.u32 %v2747, 4294901760
    %3339 = vmatpush1.msra.mxu0 %v3338
    %3340 = vmatprep.subr.mxu0 0.0
    %v3341 = vand.u32 %v2746, 4294901760
    %3342 = vmatpush1.msra.mxu0 %v3341
    %3343 = vmatprep.subr.mxu0 0.0
    %v3344 = vand.u32 %v2745, 4294901760
    %3345 = vmatpush1.msra.mxu0 %v3344
    %3346 = vmatprep.subr.mxu0 0.0
    %v3347 = vand.u32 %v2744, 4294901760
    %3348 = vmatpush1.msra.mxu0 %v3347
    %3349 = vmatprep.subr.mxu0 0.0
    %v3350 = vand.u32 %v2743, 4294901760
    %3351 = vmatpush1.msra.mxu0 %v3350
    %3352 = vmatprep.subr.mxu0 0.0
    %v3353 = vand.u32 %v2742, 4294901760
    %3354 = vmatpush1.msra.mxu0 %v3353
    %3355 = vmatprep.subr.mxu0 0.0
    %v3356 = vand.u32 %v2741, 4294901760
    %3357 = vmatpush1.msra.mxu0 %v3356
    %3358 = vmatprep.subr.mxu0 0.0
    %v3359 = vand.u32 %v2740, 4294901760
    %3360 = vmatpush1.msra.mxu0 %v3359
    %3361 = vmatprep.subr.mxu0 0.0
    %v3362 = vand.u32 %v2739, 4294901760
    %3363 = vmatpush1.msra.mxu0 %v3362
    %3364 = vmatprep.subr.mxu0 0.0
    %3365 = vmatpush2.msra.mxu0 0.0
    %3366 = vmatprep.subr.mxu0 0.0
    %3367 = vmatpush2.msra.mxu0 0.0
    %3368 = vmatprep.subr.mxu0 0.0
    %3369 = vmatpush2.msra.mxu0 0.0
    %3370 = vmatprep.subr.mxu0 0.0
    %3371 = vmatpush2.msra.mxu0 0.0
    %3372 = vmatprep.subr.mxu0 0.0
    %3373 = vmatpush2.msra.mxu0 0.0
    %3374 = vmatprep.subr.mxu0 0.0
    %3375 = vmatpush2.msra.mxu0 0.0
    %3376 = vmatprep.subr.mxu0 0.0
    %3377 = vmatpush2.msra.mxu0 0.0
    %3378 = vmatprep.subr.mxu0 0.0
    %3379 = vmatpush2.msra.mxu0 0.0
    %3380 = vmatprep.subr.mxu0 0.0
    %3381 = vmatpush2.msra.mxu0 0.0
    %3382 = vmatprep.subr.mxu0 0.0
    %3383 = vmatpush2.msra.mxu0 0.0
    %3384 = vmatprep.subr.mxu0 0.0
    %3385 = vmatpush2.msra.mxu0 0.0
    %3386 = vmatprep.subr.mxu0 0.0
    %3387 = vmatpush2.msra.mxu0 0.0
    %3388 = vmatprep.subr.mxu0 0.0
    %3389 = vmatpush2.msra.mxu0 0.0
    %3390 = vmatprep.subr.mxu0 0.0
    %3391 = vmatpush2.msra.mxu0 0.0
    %3392 = vmatprep.subr.mxu0 0.0
    %3393 = vmatpush2.msra.mxu0 0.0
    %3394 = vmatprep.subr.mxu0 0.0
    %3395 = vmatpush2.msra.mxu0 0.0
    %3396 = vmatprep.mubr.f32.mxu0 0.0
    %v3397 = vand.u32 %v2738, 4294901760
    %3398 = vmatmul.mubr.f32.gmra.mxu0 %v3397
    %v3399 = vpop.f32.mrf.mxu0
    %v3400 = vadd.f32 %v3313, %v3399
    %v3401 = vpop.f32.mrf.mxu0
    %3402 = vdwg.mxu0
    %v3403 = vmax.f32 %v3400, 0.0
    %v3404 = vld [vmem:[%s8] sm:$0x1]
    %v3406 = vlaneseq
    %v3407 = vshrl.u32 %v3406, 7
    %v3408 = vsub.s32 0, %v3407
    %v3409 = vrot.slane %v3404, %v3408
    %v3411 = vmul.f32 %v3403, %v3409
    %3412 = vadd.xlane.f32.xlu0 %v3411
    %v3413 = vpop.xlane.xlu0 %3412
    %v3414 = vadd.f32 %v2073, %v3413
    %vm3415 = vcmask 7168
    %3416 = vst.msk [vmem:[%s9] sm:$0xff] %vm3415, %v3414
    // Predicated region
    $region58: #{tpu_custom_call.1} parent=1 // pred_check
      _
    $region59: #{tpu_custom_call.1} parent=1 // pred_check_branch
      %3418 = sbr.rel (0) target = $region61
    $region60: #{tpu_custom_call.1} parent=1 // pred_region
      _
    $region61: #{tpu_custom_call.1} parent=1 // pred_fallthru
      _
    // Predicated region
    $region62: #{tpu_custom_call.1} parent=1 // pred_check
      _
    $region63: #{tpu_custom_call.1} parent=1 // pred_check_branch
      %3420 = sbr.rel (0) target = $region65
    $region64: #{tpu_custom_call.1} parent=1 // pred_region
      _
    $region65: #{tpu_custom_call.1} parent=1 // pred_fallthru
      _
    %3421 = vsyncpa [#allocation3], 1
    %3422 = vsyncpa [#allocation5], 1
    %3423 = vsyncpa [#allocation8], 1

</llo_original>
